<compile_context>
chip_gen: v7x
topology: tpu7x:2x2x1
jax: 0.10.0
libtpu: 0.0.40
codegen_flags: <defaults>
</compile_context>

<pallas_src>
import functools

import jax
import jax.numpy as jnp
from jax import lax
from jax.experimental import pallas as pl
from jax.experimental.pallas import tpu as pltpu


def _round_up(v, m):
    return (v + m - 1) // m * m


def _group_kernel(x_ref, w_ref, b_ref, o_ref, cur_ref, tmp_ref, *,
                  H, W, C, Wp, num_block, res_scale, compute_dtype):
    """Fused ResidualGroup_NO_CA forward for one image (one grid step).

    x_ref  : (1, H, W, C)          input image tile (VMEM)
    w_ref  : (L, 3C, 3C)           fused conv weights, L = 2*num_block + 1,
                                   rows = kh*C + ci, cols = kw*C + co
    b_ref  : (L, 1, C) f32         biases
    o_ref  : (1, H, W, C)          output tile
    cur_ref: ((H+2)*Wp, C) f32     residual-chain activation, zero halo rows
    tmp_ref: ((H+2)*Wp, C) cdtype  intra-block activation (conv1 output)
    """
    HWp = H * Wp
    f32 = jnp.float32
    L = 2 * num_block + 1

    def pad_col_mask():
        # True on real image columns, False on the zero pad columns [W, Wp).
        col = lax.broadcasted_iota(jnp.int32, (H, Wp, C), 1).reshape(HWp, C)
        return col < W

    def conv_band(src_ref, layer, relu, mask):
        # 3x3 SAME conv of the zero-halo activation in src_ref, returned as
        # the (HWp, C) interior band in f32.  One MXU matmul with K = N = 3C;
        # the three kw partials come back side by side on the lane axis and
        # are combined with two XLU sublane rotations.  Circular wraparound
        # lands on zero pad columns / halo rows, i.e. acts like zero padding.
        x3 = jnp.concatenate(
            [src_ref[0:HWp, :], src_ref[Wp:Wp + HWp, :], src_ref[2 * Wp:, :]],
            axis=-1).astype(compute_dtype)                         # (HWp, 3C)
        p = lax.dot_general(
            x3, w_ref[layer],
            dimension_numbers=(((1,), (0,)), ((), ())),
            preferred_element_type=f32)                            # (HWp, 3C)
        y = (pltpu.roll(p[:, 0:C], shift=1, axis=0)          # kw=0 -> shift +1
             + p[:, C:2 * C]                                  # kw=1 -> no shift
             + pltpu.roll(p[:, 2 * C:3 * C], shift=HWp - 1, axis=0))  # kw=2 -> -1
        y = y + b_ref[layer]                                       # (1,C) bcast
        if relu:
            y = jnp.maximum(y, 0.0)
        if mask:
            y = jnp.where(pad_col_mask(), y, 0.0)     # keep pad columns zero
        return y

    # --- halo rows: written once per step, never touched again -----------
    cur_ref[0:Wp, :] = jnp.zeros((Wp, C), f32)
    cur_ref[(H + 1) * Wp:, :] = jnp.zeros((Wp, C), f32)
    tmp_ref[0:Wp, :] = jnp.zeros((Wp, C), compute_dtype)
    tmp_ref[(H + 1) * Wp:, :] = jnp.zeros((Wp, C), compute_dtype)

    # --- load image into the zero-halo layout (pad columns zeroed) -------
    x0 = x_ref[0].astype(f32)                                      # (H, W, C)
    xw = jnp.concatenate(
        [x0, jnp.zeros((H, Wp - W, C), f32)], axis=1)              # (H, Wp, C)
    cur_ref[Wp:Wp + HWp, :] = xw.reshape(HWp, C)

    # --- residual blocks:  cur <- conv2(relu(conv1(cur)))*s + cur --------
    def block_body(blk, carry):
        t = conv_band(cur_ref, 2 * blk, relu=True, mask=True)      # conv1+ReLU
        tmp_ref[Wp:Wp + HWp, :] = t.astype(compute_dtype)
        y = conv_band(tmp_ref, 2 * blk + 1, relu=False, mask=True) # conv2
        # Block residual accumulation stays in f32 (accuracy of the chain).
        cur_ref[Wp:Wp + HWp, :] = y * res_scale + cur_ref[Wp:Wp + HWp, :]
        return carry

    lax.fori_loop(0, num_block, block_body, 0)

    # --- group conv + group skip; pad columns are cropped, so no mask ----
    band_f = conv_band(cur_ref, L - 1, relu=False, mask=False)
    out = band_f.reshape(H, Wp, C)[:, :W, :] + x_ref[0].astype(f32)
    o_ref[0] = out.astype(o_ref.dtype)


def residual_group_no_ca(x_nchw, params, *, res_scale=1.0,
                         compute_dtype=jnp.bfloat16):
    """Forward pass of ResidualGroup_NO_CA.  Input/output are NCHW (PyTorch)."""
    x = jnp.transpose(x_nchw, (0, 2, 3, 1))              # NCHW -> NHWC
    N, H, W, C = x.shape
    num_block = len(params["blocks"])
    L = 2 * num_block + 1
    Wp = _round_up(W + 1, 8)          # >= W+1 zero pad cols, sublane aligned
    assert Wp >= W + 1

    ws, bs = [], []
    for blk in params["blocks"]:
        ws += [blk["w1"], blk["w2"]]
        bs += [blk["b1"], blk["b2"]]
    ws.append(params["wc"])
    bs.append(params["bc"])

    def fuse(w):
        # (kh, kw, ci, co) -> (kh*C + ci, kw*C + co): the three kw taps of a
        # layer become one (3C, 3C) MXU weight (one matmul per conv).
        w_l = jnp.transpose(w, (1, 0, 2, 3)).reshape(3, 3 * C, C)   # (kw,3C,C)
        return jnp.transpose(w_l, (1, 0, 2)).reshape(3 * C, 3 * C)

    w_all = jnp.stack([fuse(w) for w in ws], 0).astype(compute_dtype)
    b_all = jnp.stack(bs, 0).reshape(L, 1, C).astype(jnp.float32)

    kernel = functools.partial(
        _group_kernel, H=H, W=W, C=C, Wp=Wp, num_block=num_block,
        res_scale=float(res_scale), compute_dtype=compute_dtype)

    out = pl.pallas_call(
        kernel,
        out_shape=jax.ShapeDtypeStruct((N, H, W, C), x.dtype),
        grid_spec=pltpu.PrefetchScalarGridSpec(
            num_scalar_prefetch=0,
            grid=(N,),
            in_specs=[
                pl.BlockSpec((1, H, W, C), lambda n: (n, 0, 0, 0)),
                pl.BlockSpec((L, 3 * C, 3 * C), lambda n: (0, 0, 0)),
                pl.BlockSpec((L, 1, C), lambda n: (0, 0, 0)),
            ],
            out_specs=pl.BlockSpec((1, H, W, C), lambda n: (n, 0, 0, 0)),
            scratch_shapes=[
                pltpu.VMEM(((H + 2) * Wp, C), jnp.float32),    # residual chain
                pltpu.VMEM(((H + 2) * Wp, C), compute_dtype),  # conv1 output
            ],
        ),
        # Per-step VMEM footprint is well under the scoped default on all of
        # v5e/v6e/v7x for these shapes; raise vmem_limit_bytes only when
        # moving to row-band tiles at large resolutions.
        compiler_params=pltpu.CompilerParams(
            dimension_semantics=("parallel",)),
    )(x, w_all, b_all)
    return jnp.transpose(out, (0, 3, 1, 2))              # NHWC -> NCHW


# ---------------- deterministic parameter init ----------------
def init_params(key, num_feat, num_block):
    params = {"blocks": []}
    for _ in range(num_block):
        key, k1, k2, k3, k4 = jax.random.split(key, 5)
        params["blocks"].append({
            "w1": 0.05 * jax.random.normal(k1, (3, 3, num_feat, num_feat),
                                           jnp.float32),
            "b1": 0.05 * jax.random.normal(k2, (num_feat,), jnp.float32),
            "w2": 0.05 * jax.random.normal(k3, (3, 3, num_feat, num_feat),
                                           jnp.float32),
            "b2": 0.05 * jax.random.normal(k4, (num_feat,), jnp.float32),
        })
    key, k5, k6 = jax.random.split(key, 3)
    params["wc"] = 0.05 * jax.random.normal(k5, (3, 3, num_feat, num_feat),
                                            jnp.float32)
    params["bc"] = 0.05 * jax.random.normal(k6, (num_feat,), jnp.float32)
    return params


# ---------------- pure-JAX reference (for verification) ----------------
def _conv_ref(x_nhwc, w_hwio, b):
    y = lax.conv_general_dilated(
        x_nhwc, w_hwio, window_strides=(1, 1), padding="SAME",
        dimension_numbers=("NHWC", "HWIO", "NHWC"),
        precision=lax.Precision.HIGHEST)
    return y + b[None, None, None, :]


def residual_group_ref(x_nchw, params, *, res_scale=1.0):
    x = jnp.transpose(x_nchw, (0, 2, 3, 1))
    out = x
    for blk in params["blocks"]:
        t = jnp.maximum(_conv_ref(out, blk["w1"], blk["b1"]), 0.0)
        out = _conv_ref(t, blk["w2"], blk["b2"]) * res_scale + out
    out = _conv_ref(out, params["wc"], params["bc"]) + x
    return jnp.transpose(out, (0, 3, 1, 2))


if __name__ == "__main__":
    N, C, H, W = 2, 64, 16, 16
    num_block = 2
    res_scale = 1.0

    key = jax.random.PRNGKey(0)
    kx, kp = jax.random.split(key)
    x = jax.random.normal(kx, (N, C, H, W), jnp.float32)   # NCHW like PyTorch
    params = init_params(kp, num_feat=C, num_block=num_block)

    ref = jax.block_until_ready(
        residual_group_ref(x, params, res_scale=res_scale))

    # Exact mode: f32 MXU inputs.
    fwd_f32 = jax.jit(functools.partial(
        residual_group_no_ca, res_scale=res_scale, compute_dtype=jnp.float32))
    out_f32 = jax.block_until_ready(fwd_f32(x, params))
    assert out_f32.shape == (N, C, H, W)
    assert jnp.allclose(out_f32, ref, atol=1e-3, rtol=1e-3), \
        "f32 kernel mismatch vs reference"

    # Default mode: bf16 MXU inputs / intra-block activations, f32 residual
    # chain and accumulation (looser tolerance).
    fwd_bf16 = jax.jit(functools.partial(
        residual_group_no_ca, res_scale=res_scale, compute_dtype=jnp.bfloat16))
    out_bf16 = jax.block_until_ready(fwd_bf16(x, params))
    assert float(jnp.max(jnp.abs(out_bf16 - ref))) < 0.3, \
        "bf16 kernel drifted too far from reference"

    print("KERNEL_OK")
</pallas_src>

<mosaic_0001>
module attributes {stable_mosaic.version = 11 : i64} {
  func.func @_group_kernel(%arg0: i32, %arg1: memref<1x16x16x64xf32, #tpu.memory_space<vmem>>, %arg2: memref<5x192x192xf32, #tpu.memory_space<vmem>>, %arg3: memref<5x1x64xf32, #tpu.memory_space<vmem>>, %arg4: memref<1x16x16x64xf32, #tpu.memory_space<vmem>>, %arg5: memref<432x64xf32, #tpu.memory_space<vmem>>, %arg6: memref<432x64xf32, #tpu.memory_space<vmem>>) attributes {dimension_semantics = [#tpu.dimension_semantics<parallel>], iteration_bounds = array<i64: 2>, scalar_prefetch = 0 : i64, scratch_operands = 2 : i64, tpu.core_type = #tpu.core_type<tc>, window_params = [{transform_indices = @transform_0, window_bounds = array<i64: 1, 16, 16, 64>}, {pipeline_mode = #tpu.pipeline_mode<synchronous>, transform_indices = @transform_1, window_bounds = array<i64: 5, 192, 192>}, {pipeline_mode = #tpu.pipeline_mode<synchronous>, transform_indices = @transform_2, window_bounds = array<i64: 5, 1, 64>}, {transform_indices = @transform_3, window_bounds = array<i64: 1, 16, 16, 64>}]} {
    %cst = arith.constant 0.000000e+00 : f32
    %0 = vector.broadcast %cst : f32 to vector<24x64xf32>
    %c0 = arith.constant 0 : index
    %c0_0 = arith.constant 0 : index
    %1 = vector.load %arg5[%c0, %c0_0] : memref<432x64xf32, #tpu.memory_space<vmem>>, vector<24x64xf32>
    tpu.vector_store %arg5[%c0, %c0_0], %0 {strides = array<i32>} : memref<432x64xf32, #tpu.memory_space<vmem>>, vector<24x64xf32>,
    %cst_1 = arith.constant 0.000000e+00 : f32
    %2 = vector.broadcast %cst_1 : f32 to vector<24x64xf32>
    %c408 = arith.constant 408 : index
    %c0_2 = arith.constant 0 : index
    %3 = vector.load %arg5[%c408, %c0_2] : memref<432x64xf32, #tpu.memory_space<vmem>>, vector<24x64xf32>
    tpu.vector_store %arg5[%c408, %c0_2], %2 {strides = array<i32>} : memref<432x64xf32, #tpu.memory_space<vmem>>, vector<24x64xf32>,
    %cst_3 = arith.constant 0.000000e+00 : f32
    %4 = vector.broadcast %cst_3 : f32 to vector<24x64xf32>
    %c0_4 = arith.constant 0 : index
    %c0_5 = arith.constant 0 : index
    %5 = vector.load %arg6[%c0_4, %c0_5] : memref<432x64xf32, #tpu.memory_space<vmem>>, vector<24x64xf32>
    tpu.vector_store %arg6[%c0_4, %c0_5], %4 {strides = array<i32>} : memref<432x64xf32, #tpu.memory_space<vmem>>, vector<24x64xf32>,
    %cst_6 = arith.constant 0.000000e+00 : f32
    %6 = vector.broadcast %cst_6 : f32 to vector<24x64xf32>
    %c408_7 = arith.constant 408 : index
    %c0_8 = arith.constant 0 : index
    %7 = vector.load %arg6[%c408_7, %c0_8] : memref<432x64xf32, #tpu.memory_space<vmem>>, vector<24x64xf32>
    tpu.vector_store %arg6[%c408_7, %c0_8], %6 {strides = array<i32>} : memref<432x64xf32, #tpu.memory_space<vmem>>, vector<24x64xf32>,
    %c0_9 = arith.constant 0 : index
    %c0_10 = arith.constant 0 : index
    %c0_11 = arith.constant 0 : index
    %c0_12 = arith.constant 0 : index
    %8 = vector.load %arg1[%c0_9, %c0_10, %c0_11, %c0_12] : memref<1x16x16x64xf32, #tpu.memory_space<vmem>>, vector<1x16x16x64xf32>
    %9 = vector.shape_cast %8 : vector<1x16x16x64xf32> to vector<16x16x64xf32>
    %cst_13 = arith.constant 0.000000e+00 : f32
    %10 = vector.broadcast %cst_13 : f32 to vector<16x8x64xf32>
    %11 = tpu.concatenate %9, %10 in 1 : vector<16x16x64xf32>, vector<16x8x64xf32> -> vector<16x24x64xf32>
    %12 = vector.shape_cast %11 : vector<16x24x64xf32> to vector<384x64xf32>
    %c24 = arith.constant 24 : index
    %c0_14 = arith.constant 0 : index
    %13 = vector.load %arg5[%c24, %c0_14] : memref<432x64xf32, #tpu.memory_space<vmem>>, vector<384x64xf32>
    tpu.vector_store %arg5[%c24, %c0_14], %12 {strides = array<i32>} : memref<432x64xf32, #tpu.memory_space<vmem>>, vector<384x64xf32>,
    %c0_i32 = arith.constant 0 : i32
    %c2_i32 = arith.constant 2 : i32
    %14 = arith.addi %c0_i32, %c2_i32 : i32
    %c1_i32 = arith.constant 1 : i32
    scf.for %arg7 = %c0_i32 to %14 step %c1_i32  : i32 {
      %c2_i32_36 = arith.constant 2 : i32
      %41 = arith.muli %c2_i32_36, %arg7 : i32
      %c0_37 = arith.constant 0 : index
      %c0_38 = arith.constant 0 : index
      %42 = vector.load %arg5[%c0_37, %c0_38] : memref<432x64xf32, #tpu.memory_space<vmem>>, vector<384x64xf32>
      %c24_39 = arith.constant 24 : index
      %c0_40 = arith.constant 0 : index
      %43 = vector.load %arg5[%c24_39, %c0_40] : memref<432x64xf32, #tpu.memory_space<vmem>>, vector<384x64xf32>
      %c48_41 = arith.constant 48 : index
      %c0_42 = arith.constant 0 : index
      %44 = vector.load %arg5[%c48_41, %c0_42] : memref<432x64xf32, #tpu.memory_space<vmem>>, vector<384x64xf32>
      %45 = tpu.concatenate %42, %43, %44 in 1 : vector<384x64xf32>, vector<384x64xf32>, vector<384x64xf32> -> vector<384x192xf32>
      %46 = arith.index_cast %41 : i32 to index
      %c0_43 = arith.constant 0 : index
      %c0_44 = arith.constant 0 : index
      %47 = vector.load %arg2[%46, %c0_43, %c0_44] : memref<5x192x192xf32, #tpu.memory_space<vmem>>, vector<1x192x192xf32>
      %48 = vector.shape_cast %47 : vector<1x192x192xf32> to vector<192x192xf32>
      %cst_45 = arith.constant dense<0.000000e+00> : vector<384x192xf32>
      %49 = tpu.matmul %45, %48, %cst_45 {dimension_numbers = #tpu.dot_dimension_numbers<[1], [0], [0], [1], [0, 0, 1, 1], [], []>} : vector<384x192xf32>, vector<192x192xf32>, vector<384x192xf32> -> vector<384x192xf32>
      %50 = vector.extract_strided_slice %49 {offsets = [0, 0], sizes = [384, 64], strides = [1, 1]} : vector<384x192xf32> to vector<384x64xf32>
      %c1_i32_46 = arith.constant 1 : i32
      %51 = tpu.dynamic_rotate %50 by %c1_i32_46 dim 0 : vector<384x64xf32>, i32 -> vector<384x64xf32>
      %52 = vector.extract_strided_slice %49 {offsets = [0, 64], sizes = [384, 64], strides = [1, 1]} : vector<384x192xf32> to vector<384x64xf32>
      %53 = arith.addf %51, %52 : vector<384x64xf32>
      %54 = vector.extract_strided_slice %49 {offsets = [0, 128], sizes = [384, 64], strides = [1, 1]} : vector<384x192xf32> to vector<384x64xf32>
      %c383_i32_47 = arith.constant 383 : i32
      %55 = tpu.dynamic_rotate %54 by %c383_i32_47 dim 0 : vector<384x64xf32>, i32 -> vector<384x64xf32>
      %56 = arith.addf %53, %55 : vector<384x64xf32>
      %57 = arith.index_cast %41 : i32 to index
      %c0_48 = arith.constant 0 : index
      %c0_49 = arith.constant 0 : index
      %58 = vector.load %arg3[%57, %c0_48, %c0_49] : memref<5x1x64xf32, #tpu.memory_space<vmem>>, vector<1x1x64xf32>
      %59 = vector.shape_cast %58 : vector<1x1x64xf32> to vector<1x64xf32>
      %60 = vector.broadcast %59 : vector<1x64xf32> to vector<384x64xf32>
      %61 = arith.addf %56, %60 : vector<384x64xf32>
      %cst_50 = arith.constant 0.000000e+00 : f32
      %62 = vector.broadcast %cst_50 : f32 to vector<384x64xf32>
      %63 = arith.maximumf %61, %62 : vector<384x64xf32>
      %64 = tpu.iota {dimensions = array<i32: 1>} : vector<16x24x64xi32>
      %65 = vector.shape_cast %64 : vector<16x24x64xi32> to vector<384x64xi32>
      %c16_i32 = arith.constant 16 : i32
      %66 = vector.broadcast %c16_i32 : i32 to vector<384x64xi32>
      %67 = arith.cmpi slt, %65, %66 : vector<384x64xi32>
      %cst_51 = arith.constant 0.000000e+00 : f32
      %68 = vector.broadcast %cst_51 : f32 to vector<384x64xf32>
      %69 = arith.select %67, %63, %68 : vector<384x64xi1>, vector<384x64xf32>
      %c24_52 = arith.constant 24 : index
      %c0_53 = arith.constant 0 : index
      %70 = vector.load %arg6[%c24_52, %c0_53] : memref<432x64xf32, #tpu.memory_space<vmem>>, vector<384x64xf32>
      tpu.vector_store %arg6[%c24_52, %c0_53], %69 {strides = array<i32>} : memref<432x64xf32, #tpu.memory_space<vmem>>, vector<384x64xf32>,
      %c2_i32_54 = arith.constant 2 : i32
      %71 = arith.muli %c2_i32_54, %arg7 : i32
      %c1_i32_55 = arith.constant 1 : i32
      %72 = arith.addi %71, %c1_i32_55 : i32
      %c0_56 = arith.constant 0 : index
      %c0_57 = arith.constant 0 : index
      %73 = vector.load %arg6[%c0_56, %c0_57] : memref<432x64xf32, #tpu.memory_space<vmem>>, vector<384x64xf32>
      %c24_58 = arith.constant 24 : index
      %c0_59 = arith.constant 0 : index
      %74 = vector.load %arg6[%c24_58, %c0_59] : memref<432x64xf32, #tpu.memory_space<vmem>>, vector<384x64xf32>
      %c48_60 = arith.constant 48 : index
      %c0_61 = arith.constant 0 : index
      %75 = vector.load %arg6[%c48_60, %c0_61] : memref<432x64xf32, #tpu.memory_space<vmem>>, vector<384x64xf32>
      %76 = tpu.concatenate %73, %74, %75 in 1 : vector<384x64xf32>, vector<384x64xf32>, vector<384x64xf32> -> vector<384x192xf32>
      %77 = arith.index_cast %72 : i32 to index
      %c0_62 = arith.constant 0 : index
      %c0_63 = arith.constant 0 : index
      %78 = vector.load %arg2[%77, %c0_62, %c0_63] : memref<5x192x192xf32, #tpu.memory_space<vmem>>, vector<1x192x192xf32>
      %79 = vector.shape_cast %78 : vector<1x192x192xf32> to vector<192x192xf32>
      %cst_64 = arith.constant dense<0.000000e+00> : vector<384x192xf32>
      %80 = tpu.matmul %76, %79, %cst_64 {dimension_numbers = #tpu.dot_dimension_numbers<[1], [0], [0], [1], [0, 0, 1, 1], [], []>} : vector<384x192xf32>, vector<192x192xf32>, vector<384x192xf32> -> vector<384x192xf32>
      %81 = vector.extract_strided_slice %80 {offsets = [0, 0], sizes = [384, 64], strides = [1, 1]} : vector<384x192xf32> to vector<384x64xf32>
      %c1_i32_65 = arith.constant 1 : i32
      %82 = tpu.dynamic_rotate %81 by %c1_i32_65 dim 0 : vector<384x64xf32>, i32 -> vector<384x64xf32>
      %83 = vector.extract_strided_slice %80 {offsets = [0, 64], sizes = [384, 64], strides = [1, 1]} : vector<384x192xf32> to vector<384x64xf32>
      %84 = arith.addf %82, %83 : vector<384x64xf32>
      %85 = vector.extract_strided_slice %80 {offsets = [0, 128], sizes = [384, 64], strides = [1, 1]} : vector<384x192xf32> to vector<384x64xf32>
      %c383_i32_66 = arith.constant 383 : i32
      %86 = tpu.dynamic_rotate %85 by %c383_i32_66 dim 0 : vector<384x64xf32>, i32 -> vector<384x64xf32>
      %87 = arith.addf %84, %86 : vector<384x64xf32>
      %88 = arith.index_cast %72 : i32 to index
      %c0_67 = arith.constant 0 : index
      %c0_68 = arith.constant 0 : index
      %89 = vector.load %arg3[%88, %c0_67, %c0_68] : memref<5x1x64xf32, #tpu.memory_space<vmem>>, vector<1x1x64xf32>
      %90 = vector.shape_cast %89 : vector<1x1x64xf32> to vector<1x64xf32>
      %91 = vector.broadcast %90 : vector<1x64xf32> to vector<384x64xf32>
      %92 = arith.addf %87, %91 : vector<384x64xf32>
      %93 = tpu.iota {dimensions = array<i32: 1>} : vector<16x24x64xi32>
      %94 = vector.shape_cast %93 : vector<16x24x64xi32> to vector<384x64xi32>
      %c16_i32_69 = arith.constant 16 : i32
      %95 = vector.broadcast %c16_i32_69 : i32 to vector<384x64xi32>
      %96 = arith.cmpi slt, %94, %95 : vector<384x64xi32>
      %cst_70 = arith.constant 0.000000e+00 : f32
      %97 = vector.broadcast %cst_70 : f32 to vector<384x64xf32>
      %98 = arith.select %96, %92, %97 : vector<384x64xi1>, vector<384x64xf32>
      %cst_71 = arith.constant 1.000000e+00 : f32
      %99 = vector.broadcast %cst_71 : f32 to vector<384x64xf32>
      %100 = arith.mulf %98, %99 : vector<384x64xf32>
      %c24_72 = arith.constant 24 : index
      %c0_73 = arith.constant 0 : index
      %101 = vector.load %arg5[%c24_72, %c0_73] : memref<432x64xf32, #tpu.memory_space<vmem>>, vector<384x64xf32>
      %102 = arith.addf %100, %101 : vector<384x64xf32>
      %c24_74 = arith.constant 24 : index
      %c0_75 = arith.constant 0 : index
      %103 = vector.load %arg5[%c24_74, %c0_75] : memref<432x64xf32, #tpu.memory_space<vmem>>, vector<384x64xf32>
      tpu.vector_store %arg5[%c24_74, %c0_75], %102 {strides = array<i32>} : memref<432x64xf32, #tpu.memory_space<vmem>>, vector<384x64xf32>,
    }
    %c2_i32_15 = arith.constant 2 : i32
    %c0_16 = arith.constant 0 : index
    %c0_17 = arith.constant 0 : index
    %15 = vector.load %arg5[%c0_16, %c0_17] : memref<432x64xf32, #tpu.memory_space<vmem>>, vector<384x64xf32>
    %c24_18 = arith.constant 24 : index
    %c0_19 = arith.constant 0 : index
    %16 = vector.load %arg5[%c24_18, %c0_19] : memref<432x64xf32, #tpu.memory_space<vmem>>, vector<384x64xf32>
    %c48 = arith.constant 48 : index
    %c0_20 = arith.constant 0 : index
    %17 = vector.load %arg5[%c48, %c0_20] : memref<432x64xf32, #tpu.memory_space<vmem>>, vector<384x64xf32>
    %18 = tpu.concatenate %15, %16, %17 in 1 : vector<384x64xf32>, vector<384x64xf32>, vector<384x64xf32> -> vector<384x192xf32>
    %c4 = arith.constant 4 : index
    %c0_21 = arith.constant 0 : index
    %c0_22 = arith.constant 0 : index
    %19 = vector.load %arg2[%c4, %c0_21, %c0_22] : memref<5x192x192xf32, #tpu.memory_space<vmem>>, vector<1x192x192xf32>
    %20 = vector.shape_cast %19 : vector<1x192x192xf32> to vector<192x192xf32>
    %cst_23 = arith.constant dense<0.000000e+00> : vector<384x192xf32>
    %21 = tpu.matmul %18, %20, %cst_23 {dimension_numbers = #tpu.dot_dimension_numbers<[1], [0], [0], [1], [0, 0, 1, 1], [], []>} : vector<384x192xf32>, vector<192x192xf32>, vector<384x192xf32> -> vector<384x192xf32>
    %22 = vector.extract_strided_slice %21 {offsets = [0, 0], sizes = [384, 64], strides = [1, 1]} : vector<384x192xf32> to vector<384x64xf32>
    %c1_i32_24 = arith.constant 1 : i32
    %23 = tpu.dynamic_rotate %22 by %c1_i32_24 dim 0 : vector<384x64xf32>, i32 -> vector<384x64xf32>
    %24 = vector.extract_strided_slice %21 {offsets = [0, 64], sizes = [384, 64], strides = [1, 1]} : vector<384x192xf32> to vector<384x64xf32>
    %25 = arith.addf %23, %24 : vector<384x64xf32>
    %26 = vector.extract_strided_slice %21 {offsets = [0, 128], sizes = [384, 64], strides = [1, 1]} : vector<384x192xf32> to vector<384x64xf32>
    %c383_i32 = arith.constant 383 : i32
    %27 = tpu.dynamic_rotate %26 by %c383_i32 dim 0 : vector<384x64xf32>, i32 -> vector<384x64xf32>
    %28 = arith.addf %25, %27 : vector<384x64xf32>
    %c4_25 = arith.constant 4 : index
    %c0_26 = arith.constant 0 : index
    %c0_27 = arith.constant 0 : index
    %29 = vector.load %arg3[%c4_25, %c0_26, %c0_27] : memref<5x1x64xf32, #tpu.memory_space<vmem>>, vector<1x1x64xf32>
    %30 = vector.shape_cast %29 : vector<1x1x64xf32> to vector<1x64xf32>
    %31 = vector.broadcast %30 : vector<1x64xf32> to vector<384x64xf32>
    %32 = arith.addf %28, %31 : vector<384x64xf32>
    %33 = vector.shape_cast %32 : vector<384x64xf32> to vector<16x24x64xf32>
    %34 = vector.extract_strided_slice %33 {offsets = [0, 0, 0], sizes = [16, 16, 64], strides = [1, 1, 1]} : vector<16x24x64xf32> to vector<16x16x64xf32>
    %c0_28 = arith.constant 0 : index
    %c0_29 = arith.constant 0 : index
    %c0_30 = arith.constant 0 : index
    %c0_31 = arith.constant 0 : index
    %35 = vector.load %arg1[%c0_28, %c0_29, %c0_30, %c0_31] : memref<1x16x16x64xf32, #tpu.memory_space<vmem>>, vector<1x16x16x64xf32>
    %36 = vector.shape_cast %35 : vector<1x16x16x64xf32> to vector<16x16x64xf32>
    %37 = arith.addf %34, %36 : vector<16x16x64xf32>
    %c0_32 = arith.constant 0 : index
    %c0_33 = arith.constant 0 : index
    %c0_34 = arith.constant 0 : index
    %c0_35 = arith.constant 0 : index
    %38 = vector.load %arg4[%c0_32, %c0_33, %c0_34, %c0_35] : memref<1x16x16x64xf32, #tpu.memory_space<vmem>>, vector<1x16x16x64xf32>
    %39 = vector.shape_cast %38 : vector<1x16x16x64xf32> to vector<16x16x64xf32>
    %40 = vector.shape_cast %37 : vector<16x16x64xf32> to vector<1x16x16x64xf32>
    tpu.vector_store %arg4[%c0_32, %c0_33, %c0_34, %c0_35], %40 {strides = array<i32>} : memref<1x16x16x64xf32, #tpu.memory_space<vmem>>, vector<1x16x16x64xf32>,
    return
  }
  func.func @transform_0(%arg0: i32) -> (i32, i32, i32, i32) {
    %c0_i32 = arith.constant 0 : i32
    %c0_i32_0 = arith.constant 0 : i32
    %c0_i32_1 = arith.constant 0 : i32
    %c0_i32_2 = arith.constant 0 : i32
    return %arg0, %c0_i32, %c0_i32_0, %c0_i32_1 : i32, i32, i32, i32
  }
  func.func @transform_1(%arg0: i32) -> (i32, i32, i32) {
    %c0_i32 = arith.constant 0 : i32
    %c0_i32_0 = arith.constant 0 : i32
    %c0_i32_1 = arith.constant 0 : i32
    %c0_i32_2 = arith.constant 0 : i32
    return %c0_i32, %c0_i32_0, %c0_i32_1 : i32, i32, i32
  }
  func.func @transform_2(%arg0: i32) -> (i32, i32, i32) {
    %c0_i32 = arith.constant 0 : i32
    %c0_i32_0 = arith.constant 0 : i32
    %c0_i32_1 = arith.constant 0 : i32
    %c0_i32_2 = arith.constant 0 : i32
    return %c0_i32, %c0_i32_0, %c0_i32_1 : i32, i32, i32
  }
  func.func @transform_3(%arg0: i32) -> (i32, i32, i32, i32) {
    %c0_i32 = arith.constant 0 : i32
    %c0_i32_0 = arith.constant 0 : i32
    %c0_i32_1 = arith.constant 0 : i32
    %c0_i32_2 = arith.constant 0 : i32
    return %arg0, %c0_i32, %c0_i32_0, %c0_i32_1 : i32, i32, i32, i32
  }
}

</mosaic_0001>

<llo_original>
// kernel: residual_group_no_ca.1
$region0: #{residual_group_no_ca.1}
  #allocation0 [shape = 'u32[]', space=smem, size = 0x4, offset = 0x4, fixed_abs, tag = 'smem constant byte address 0x4 - core index']
  #allocation1 [shape = 'u32[144,128]{1,0:T(1,128)}', space=vmem, size = 0x12000, scoped, tag = 'internal scratch']
  #allocation2 [shape = 'f32[432,64]{1,0:T(8,128)}', space=vmem, size = 0x36000, scoped, tag = 'scratch operand']
  #allocation3 [shape = 'f32[432,64]{1,0:T(8,128)}', space=vmem, size = 0x36000, scoped, tag = 'scratch operand']
  %s0 = inlined_call_operand.vmem [shape: f32[2,16,16,64], index: 0, kind: input, shape index: {}]
  %s1 = inlined_call_operand.vmem [shape: f32[5,192,192], index: 1, kind: input, shape index: {}]
  %s2 = inlined_call_operand.vmem [shape: f32[5,1,64], index: 2, kind: input, shape index: {}]
  %s3 = inlined_call_operand.hbm [shape: f32[2,16,16,64], index: 3, kind: output, shape index: {}]
  %s4 = sld [smem:[#allocation0]]
  $region52: #{residual_group_no_ca.1} parent=0
    _
  %s6 = ssub.s32 1, %s4
  %s7 = scalar_select 0, %s6, %s4
  $region1: #{residual_group_no_ca.1} parent=0
    #allocation4 [shape = 'u8[262144]{0}', space=vmem, size = 0x40000, scoped, tag = 'output window, operand 0']
    #allocation5 [shape = 's32[2]{0}', space=sflag, size = 0x8, scoped, tag = 'scoped memory for residual_group_no_ca.1']
    %8 = vsyncpa [#allocation5], 0
    %s9 = scalar_lea.sflag [#allocation5], 1
    %10 = vsyncpa %s9, 0
    loop: start=0, step=1, limit=4
    $region2: #{residual_group_no_ca.1} parent=1 // loop_pre_header
      _
    $region3: #{residual_group_no_ca.1} parent=1 // loop_header
      %s12 = sphi 0, %s16
      %p13 = scmp.ge.s32.totalorder %s12, 4
      %s22 = sphi 0, %s24
      %s25 = sphi 0, %s22
      %s26 = sphi 0, %s25
      %s42 = sphi 0, %s26
      %s46 = sphi 0, %s46
      %s48 = sphi 0, %s46
      %s49 = sphi 0, %s48
      %s63 = sphi 0, %s49
      %s67 = sphi 0, %s67
      %s69 = sphi 0, %s67
      %s70 = sphi 0, %s69
      %s84 = sphi 0, %s70
      %s90 = sphi 0, %s92
      %s93 = sphi 0, %s90
      %s94 = sphi 0, %s93
      %s110 = sphi 0, %s94
    $region4: #{residual_group_no_ca.1} parent=1 // loop_header_branch
      %15 = sbr.rel (%p13) target = $region8
    $region5: #{residual_group_no_ca.1} parent=1 // loop_body
      %s17 = ssub.s32 %s12, 1
      %s18 = ssub.s32 %s12, 2
      %s19 = sadd.s32 %s12, 1
      %s20 = ssub.s32 %s12, %s19
      %p21 = scmp.eq.s32.totalorder %s20, 0
      %s23 = sadd.s32 %s22, 1
      %s24 = scalar_select %p21, %s22, %s23
      %p27 = pneg %p21
      %p28 = scmp.eq.s32.totalorder %s12, 1
      %p29 = por %p27, %p28
      %p30 = scmp.ne.s32.totalorder %s22, %s25
      %p31 = scmp.eq.s32.totalorder %s12, 0
      %p32 = por %p30, %p31
      %p33 = scmp.ne.s32.totalorder %s22, %s25
      %p34 = scmp.eq.s32.totalorder %s17, 1
      %p35 = por %p33, %p34
      %p36 = scmp.ne.s32.totalorder %s25, %s26
      %p37 = scmp.eq.s32.totalorder %s17, 0
      %p38 = por %p36, %p37
      %p39 = scmp.ne.s32.totalorder %s25, %s26
      %p40 = scmp.eq.s32.totalorder %s18, 1
      %p41 = por %p39, %p40
      %p43 = scmp.ne.s32.totalorder %s26, %s42
      %p44 = scmp.eq.s32.totalorder %s18, 0
      %p45 = por %p43, %p44
      %s47 = sadd.s32 %s46, 1
      %p50 = scmp.eq.s32.totalorder %s12, 1
      %p51 = scmp.ne.s32.totalorder %s46, %s48
      %p52 = scmp.eq.s32.totalorder %s12, 0
      %p53 = por %p51, %p52
      %p54 = scmp.ne.s32.totalorder %s46, %s48
      %p55 = scmp.eq.s32.totalorder %s17, 1
      %p56 = por %p54, %p55
      %p57 = scmp.ne.s32.totalorder %s48, %s49
      %p58 = scmp.eq.s32.totalorder %s17, 0
      %p59 = por %p57, %p58
      %p60 = scmp.ne.s32.totalorder %s48, %s49
      %p61 = scmp.eq.s32.totalorder %s18, 1
      %p62 = por %p60, %p61
      %p64 = scmp.ne.s32.totalorder %s49, %s63
      %p65 = scmp.eq.s32.totalorder %s18, 0
      %p66 = por %p64, %p65
      %s68 = sadd.s32 %s67, 1
      %p71 = scmp.eq.s32.totalorder %s12, 1
      %p72 = scmp.ne.s32.totalorder %s67, %s69
      %p73 = scmp.eq.s32.totalorder %s12, 0
      %p74 = por %p72, %p73
      %p75 = scmp.ne.s32.totalorder %s67, %s69
      %p76 = scmp.eq.s32.totalorder %s17, 1
      %p77 = por %p75, %p76
      %p78 = scmp.ne.s32.totalorder %s69, %s70
      %p79 = scmp.eq.s32.totalorder %s17, 0
      %p80 = por %p78, %p79
      %p81 = scmp.ne.s32.totalorder %s69, %s70
      %p82 = scmp.eq.s32.totalorder %s18, 1
      %p83 = por %p81, %p82
      %p85 = scmp.ne.s32.totalorder %s70, %s84
      %p86 = scmp.eq.s32.totalorder %s18, 0
      %p87 = por %p85, %p86
      %s88 = ssub.s32 %s12, %s19
      %p89 = scmp.eq.s32.totalorder %s88, 0
      %s91 = sadd.s32 %s90, 1
      %s92 = scalar_select %p89, %s90, %s91
      %p95 = pneg %p89
      %p96 = scmp.eq.s32.totalorder %s12, 1
      %p97 = por %p95, %p96
      %p98 = scmp.ne.s32.totalorder %s90, %s93
      %p99 = scmp.eq.s32.totalorder %s12, 0
      %p100 = por %p98, %p99
      %p101 = scmp.ne.s32.totalorder %s90, %s93
      %p102 = scmp.eq.s32.totalorder %s17, 1
      %p103 = por %p101, %p102
      %p104 = scmp.ne.s32.totalorder %s93, %s94
      %p105 = scmp.eq.s32.totalorder %s17, 0
      %p106 = por %p104, %p105
      %p107 = scmp.ne.s32.totalorder %s93, %s94
      %p108 = scmp.eq.s32.totalorder %s18, 1
      %p109 = por %p107, %p108
      %p111 = scmp.ne.s32.totalorder %s94, %s110
      %p112 = scmp.eq.s32.totalorder %s18, 0
      %p113 = por %p111, %p112
      %p114 = scmp.le.s32.totalorder 1, %s12
      %p115 = scmp.lt.s32.totalorder %s12, 3
      %p116 = pnand %p114, %p115
      %p117 = pneg %p116
      // Predicated region
      $region9: #{residual_group_no_ca.1} parent=5 // pred_check
        _
      $region10: #{residual_group_no_ca.1} parent=5 // pred_check_branch
        %119 = sbr.rel (%p116) target = $region12
      $region11: #{residual_group_no_ca.1} parent=5 // pred_region
        %s120 = ssub.s32 %s12, 1
        // Predicated region
        $region13: #{residual_group_no_ca.1} parent=11 // pred_check
          %p121 = pneg %p59
        $region14: #{residual_group_no_ca.1} parent=11 // pred_check_branch
          %123 = sbr.rel (%p121) target = $region16
        $region15: #{residual_group_no_ca.1} parent=11 // pred_region
          _
        $region16: #{residual_group_no_ca.1} parent=11 // pred_fallthru
          _
        // Predicated region
        $region17: #{residual_group_no_ca.1} parent=11 // pred_check
          %p124 = pneg %p80
        $region18: #{residual_group_no_ca.1} parent=11 // pred_check_branch
          %126 = sbr.rel (%p124) target = $region20
        $region19: #{residual_group_no_ca.1} parent=11 // pred_region
          _
        $region20: #{residual_group_no_ca.1} parent=11 // pred_fallthru
          _
      $region12: #{residual_group_no_ca.1} parent=5 // pred_fallthru
        _
      %p127 = scmp.lt.s32.totalorder %s12, 2
      // Predicated region
      $region21: #{residual_group_no_ca.1} parent=5 // pred_check
        %p128 = pneg %p127
      $region22: #{residual_group_no_ca.1} parent=5 // pred_check_branch
        %130 = sbr.rel (%p128) target = $region24
      $region23: #{residual_group_no_ca.1} parent=5 // pred_region
        // Predicated region
        $region25: #{residual_group_no_ca.1} parent=23 // pred_check
          %p131 = pneg %p32
        $region26: #{residual_group_no_ca.1} parent=23 // pred_check_branch
          %133 = sbr.rel (%p131) target = $region28
        $region27: #{residual_group_no_ca.1} parent=23 // pred_region
          %p134 = scmp.lt.s32.totalorder %s12, 1
          %s135 = scalar_select %p134, %s12, 1
          %s136 = smul.addr %s135, 32
          %s137 = smul.addr %s136, 8
          %s138 = scalar_lea.vmem %s0, %s137
        $region28: #{residual_group_no_ca.1} parent=23 // pred_fallthru
          _
      $region24: #{residual_group_no_ca.1} parent=5 // pred_fallthru
        _
      %p139 = scmp.le.s32.totalorder 1, %s12
      %p140 = scmp.lt.s32.totalorder %s12, 3
      %p141 = pnand %p139, %p140
      %p142 = pneg %p141
      // Predicated region
      $region29: #{residual_group_no_ca.1} parent=5 // pred_check
        _
      $region30: #{residual_group_no_ca.1} parent=5 // pred_check_branch
        %144 = sbr.rel (%p141) target = $region32
      $region31: #{residual_group_no_ca.1} parent=5 // pred_region
        %s145 = ssub.s32 %s12, 1
        %p146 = scmp.lt.s32.totalorder %s17, 1
        %s147 = scalar_select %p146, %s17, 1
        %s148 = smul.addr %s147, 32
        %s149 = smul.addr %s148, 8
        %s150 = scalar_lea.vmem %s0, %s149
        %p151 = pneg %p38
        %p152 = pneg %p35
        %p153 = pneg %p59
        %p154 = pneg %p56
        %p155 = pneg %p80
        %p156 = pneg %p77
        %p157 = pneg %p106
        %p158 = pneg %p103
        %s159 = sand.u32 %s93, 1
        %s160 = scalar_lea.sflag [#allocation5], %s159
        %s161 = sand.u32 %s93, 1
        %s162 = smul.addr %s161, 256
        %s163 = scalar_lea.vmem [#allocation4], %s162
        %p164 = scmp.lt.s32.totalorder %s17, 1
        %s165 = scalar_select %p164, %s17, 1
        %s166 = smul.addr %s165, 32
        %s167 = smul.addr %s166, 8
        %s168 = scalar_lea.vmem %s0, %s167
        %vm169 = vcmask 523264
        %170 = vst.msk [vmem:[#allocation2] sm:$0xff] %vm169, 0.0
        %171 = vst.msk [vmem:[#allocation2 + $0x8] sm:$0xff] %vm169, 0.0
        %172 = vst.msk [vmem:[#allocation2 + $0x10] sm:$0xff] %vm169, 0.0
        %173 = vst.msk [vmem:[#allocation2 + $0x198] sm:$0xff] %vm169, 0.0
        %174 = vst.msk [vmem:[#allocation2 + $0x1a0] sm:$0xff] %vm169, 0.0
        %175 = vst.msk [vmem:[#allocation2 + $0x1a8] sm:$0xff] %vm169, 0.0
        %176 = vst.msk [vmem:[#allocation3] sm:$0xff] %vm169, 0.0
        %177 = vst.msk [vmem:[#allocation3 + $0x8] sm:$0xff] %vm169, 0.0
        %178 = vst.msk [vmem:[#allocation3 + $0x10] sm:$0xff] %vm169, 0.0
        %179 = vst.msk [vmem:[#allocation3 + $0x198] sm:$0xff] %vm169, 0.0
        %180 = vst.msk [vmem:[#allocation3 + $0x1a0] sm:$0xff] %vm169, 0.0
        %181 = vst.msk [vmem:[#allocation3 + $0x1a8] sm:$0xff] %vm169, 0.0
        %v182 = vld [vmem:[%s168] sm:$0xff]
        %v183 = vld [vmem:[%s168 + $0x8] sm:$0xff]
        %v184 = vld [vmem:[%s168 + $0x10] sm:$0xff]
        %v185 = vld [vmem:[%s168 + $0x18] sm:$0xff]
        %v186 = vld [vmem:[%s168 + $0x20] sm:$0xff]
        %v187 = vld [vmem:[%s168 + $0x28] sm:$0xff]
        %v188 = vld [vmem:[%s168 + $0x30] sm:$0xff]
        %v189 = vld [vmem:[%s168 + $0x38] sm:$0xff]
        %v190 = vld [vmem:[%s168 + $0x40] sm:$0xff]
        %v191 = vld [vmem:[%s168 + $0x48] sm:$0xff]
        %v192 = vld [vmem:[%s168 + $0x50] sm:$0xff]
        %v193 = vld [vmem:[%s168 + $0x58] sm:$0xff]
        %v194 = vld [vmem:[%s168 + $0x60] sm:$0xff]
        %v195 = vld [vmem:[%s168 + $0x68] sm:$0xff]
        %v196 = vld [vmem:[%s168 + $0x70] sm:$0xff]
        %v197 = vld [vmem:[%s168 + $0x78] sm:$0xff]
        %v198 = vld [vmem:[%s168 + $0x80] sm:$0xff]
        %v199 = vld [vmem:[%s168 + $0x88] sm:$0xff]
        %v200 = vld [vmem:[%s168 + $0x90] sm:$0xff]
        %v201 = vld [vmem:[%s168 + $0x98] sm:$0xff]
        %v202 = vld [vmem:[%s168 + $0xa0] sm:$0xff]
        %v203 = vld [vmem:[%s168 + $0xa8] sm:$0xff]
        %v204 = vld [vmem:[%s168 + $0xb0] sm:$0xff]
        %v205 = vld [vmem:[%s168 + $0xb8] sm:$0xff]
        %v206 = vld [vmem:[%s168 + $0xc0] sm:$0xff]
        %v207 = vld [vmem:[%s168 + $0xc8] sm:$0xff]
        %v208 = vld [vmem:[%s168 + $0xd0] sm:$0xff]
        %v209 = vld [vmem:[%s168 + $0xd8] sm:$0xff]
        %v210 = vld [vmem:[%s168 + $0xe0] sm:$0xff]
        %v211 = vld [vmem:[%s168 + $0xe8] sm:$0xff]
        %v212 = vld [vmem:[%s168 + $0xf0] sm:$0xff]
        %v213 = vld [vmem:[%s168 + $0xf8] sm:$0xff]
        %214 = vst.msk [vmem:[#allocation2 + $0x18] sm:$0xff] %vm169, %v182
        %215 = vst.msk [vmem:[#allocation2 + $0x20] sm:$0xff] %vm169, %v183
        %216 = vst.msk [vmem:[#allocation2 + $0x28] sm:$0xff] %vm169, 0.0
        %217 = vst.msk [vmem:[#allocation2 + $0x30] sm:$0xff] %vm169, %v184
        %218 = vst.msk [vmem:[#allocation2 + $0x38] sm:$0xff] %vm169, %v185
        %219 = vst.msk [vmem:[#allocation2 + $0x40] sm:$0xff] %vm169, 0.0
        %220 = vst.msk [vmem:[#allocation2 + $0x48] sm:$0xff] %vm169, %v186
        %221 = vst.msk [vmem:[#allocation2 + $0x50] sm:$0xff] %vm169, %v187
        %222 = vst.msk [vmem:[#allocation2 + $0x58] sm:$0xff] %vm169, 0.0
        %223 = vst.msk [vmem:[#allocation2 + $0x60] sm:$0xff] %vm169, %v188
        %224 = vst.msk [vmem:[#allocation2 + $0x68] sm:$0xff] %vm169, %v189
        %225 = vst.msk [vmem:[#allocation2 + $0x70] sm:$0xff] %vm169, 0.0
        %226 = vst.msk [vmem:[#allocation2 + $0x78] sm:$0xff] %vm169, %v190
        %227 = vst.msk [vmem:[#allocation2 + $0x80] sm:$0xff] %vm169, %v191
        %228 = vst.msk [vmem:[#allocation2 + $0x88] sm:$0xff] %vm169, 0.0
        %229 = vst.msk [vmem:[#allocation2 + $0x90] sm:$0xff] %vm169, %v192
        %230 = vst.msk [vmem:[#allocation2 + $0x98] sm:$0xff] %vm169, %v193
        %231 = vst.msk [vmem:[#allocation2 + $0xa0] sm:$0xff] %vm169, 0.0
        %232 = vst.msk [vmem:[#allocation2 + $0xa8] sm:$0xff] %vm169, %v194
        %233 = vst.msk [vmem:[#allocation2 + $0xb0] sm:$0xff] %vm169, %v195
        %234 = vst.msk [vmem:[#allocation2 + $0xb8] sm:$0xff] %vm169, 0.0
        %235 = vst.msk [vmem:[#allocation2 + $0xc0] sm:$0xff] %vm169, %v196
        %236 = vst.msk [vmem:[#allocation2 + $0xc8] sm:$0xff] %vm169, %v197
        %237 = vst.msk [vmem:[#allocation2 + $0xd0] sm:$0xff] %vm169, 0.0
        %238 = vst.msk [vmem:[#allocation2 + $0xd8] sm:$0xff] %vm169, %v198
        %239 = vst.msk [vmem:[#allocation2 + $0xe0] sm:$0xff] %vm169, %v199
        %240 = vst.msk [vmem:[#allocation2 + $0xe8] sm:$0xff] %vm169, 0.0
        %241 = vst.msk [vmem:[#allocation2 + $0xf0] sm:$0xff] %vm169, %v200
        %242 = vst.msk [vmem:[#allocation2 + $0xf8] sm:$0xff] %vm169, %v201
        %243 = vst.msk [vmem:[#allocation2 + $0x100] sm:$0xff] %vm169, 0.0
        %244 = vst.msk [vmem:[#allocation2 + $0x108] sm:$0xff] %vm169, %v202
        %245 = vst.msk [vmem:[#allocation2 + $0x110] sm:$0xff] %vm169, %v203
        %246 = vst.msk [vmem:[#allocation2 + $0x118] sm:$0xff] %vm169, 0.0
        %247 = vst.msk [vmem:[#allocation2 + $0x120] sm:$0xff] %vm169, %v204
        %248 = vst.msk [vmem:[#allocation2 + $0x128] sm:$0xff] %vm169, %v205
        %249 = vst.msk [vmem:[#allocation2 + $0x130] sm:$0xff] %vm169, 0.0
        %250 = vst.msk [vmem:[#allocation2 + $0x138] sm:$0xff] %vm169, %v206
        %251 = vst.msk [vmem:[#allocation2 + $0x140] sm:$0xff] %vm169, %v207
        %252 = vst.msk [vmem:[#allocation2 + $0x148] sm:$0xff] %vm169, 0.0
        %253 = vst.msk [vmem:[#allocation2 + $0x150] sm:$0xff] %vm169, %v208
        %254 = vst.msk [vmem:[#allocation2 + $0x158] sm:$0xff] %vm169, %v209
        %255 = vst.msk [vmem:[#allocation2 + $0x160] sm:$0xff] %vm169, 0.0
        %256 = vst.msk [vmem:[#allocation2 + $0x168] sm:$0xff] %vm169, %v210
        %257 = vst.msk [vmem:[#allocation2 + $0x170] sm:$0xff] %vm169, %v211
        %258 = vst.msk [vmem:[#allocation2 + $0x178] sm:$0xff] %vm169, 0.0
        %259 = vst.msk [vmem:[#allocation2 + $0x180] sm:$0xff] %vm169, %v212
        %260 = vst.msk [vmem:[#allocation2 + $0x188] sm:$0xff] %vm169, %v213
        %261 = vst.msk [vmem:[#allocation2 + $0x190] sm:$0xff] %vm169, 0.0
        loop: start=0, step=1, limit=2
        $region33: #{residual_group_no_ca.1} parent=31 // loop_pre_header
          _
        $region34: #{residual_group_no_ca.1} parent=31 // loop_header
          %s263 = sphi 0, %s267
          %p264 = scmp.ge.s32.totalorder %s263, 2
        $region35: #{residual_group_no_ca.1} parent=31 // loop_header_branch
          %266 = sbr.rel (%p264) target = $region39
        $region36: #{residual_group_no_ca.1} parent=31 // loop_body
          %s268 = smul.u32 %s263, 2
          %v269 = vld [vmem:[#allocation2] sm:$0xff]
          %v270 = vld [vmem:[#allocation2 + $0x8] sm:$0xff]
          %v271 = vld [vmem:[#allocation2 + $0x10] sm:$0xff]
          %v272 = vld [vmem:[#allocation2 + $0x18] sm:$0xff]
          %v273 = vld [vmem:[#allocation2 + $0x20] sm:$0xff]
          %v274 = vld [vmem:[#allocation2 + $0x28] sm:$0xff]
          %v275 = vld [vmem:[#allocation2 + $0x30] sm:$0xff]
          %v276 = vld [vmem:[#allocation2 + $0x38] sm:$0xff]
          %v277 = vld [vmem:[#allocation2 + $0x40] sm:$0xff]
          %v278 = vld [vmem:[#allocation2 + $0x48] sm:$0xff]
          %v279 = vld [vmem:[#allocation2 + $0x50] sm:$0xff]
          %v280 = vld [vmem:[#allocation2 + $0x58] sm:$0xff]
          %v281 = vld [vmem:[#allocation2 + $0x60] sm:$0xff]
          %v282 = vld [vmem:[#allocation2 + $0x68] sm:$0xff]
          %v283 = vld [vmem:[#allocation2 + $0x70] sm:$0xff]
          %v284 = vld [vmem:[#allocation2 + $0x78] sm:$0xff]
          %v285 = vld [vmem:[#allocation2 + $0x80] sm:$0xff]
          %v286 = vld [vmem:[#allocation2 + $0x88] sm:$0xff]
          %v287 = vld [vmem:[#allocation2 + $0x90] sm:$0xff]
          %v288 = vld [vmem:[#allocation2 + $0x98] sm:$0xff]
          %v289 = vld [vmem:[#allocation2 + $0xa0] sm:$0xff]
          %v290 = vld [vmem:[#allocation2 + $0xa8] sm:$0xff]
          %v291 = vld [vmem:[#allocation2 + $0xb0] sm:$0xff]
          %v292 = vld [vmem:[#allocation2 + $0xb8] sm:$0xff]
          %v293 = vld [vmem:[#allocation2 + $0xc0] sm:$0xff]
          %v294 = vld [vmem:[#allocation2 + $0xc8] sm:$0xff]
          %v295 = vld [vmem:[#allocation2 + $0xd0] sm:$0xff]
          %v296 = vld [vmem:[#allocation2 + $0xd8] sm:$0xff]
          %v297 = vld [vmem:[#allocation2 + $0xe0] sm:$0xff]
          %v298 = vld [vmem:[#allocation2 + $0xe8] sm:$0xff]
          %v299 = vld [vmem:[#allocation2 + $0xf0] sm:$0xff]
          %v300 = vld [vmem:[#allocation2 + $0xf8] sm:$0xff]
          %v301 = vld [vmem:[#allocation2 + $0x100] sm:$0xff]
          %v302 = vld [vmem:[#allocation2 + $0x108] sm:$0xff]
          %v303 = vld [vmem:[#allocation2 + $0x110] sm:$0xff]
          %v304 = vld [vmem:[#allocation2 + $0x118] sm:$0xff]
          %v305 = vld [vmem:[#allocation2 + $0x120] sm:$0xff]
          %v306 = vld [vmem:[#allocation2 + $0x128] sm:$0xff]
          %v307 = vld [vmem:[#allocation2 + $0x130] sm:$0xff]
          %v308 = vld [vmem:[#allocation2 + $0x138] sm:$0xff]
          %v309 = vld [vmem:[#allocation2 + $0x140] sm:$0xff]
          %v310 = vld [vmem:[#allocation2 + $0x148] sm:$0xff]
          %v311 = vld [vmem:[#allocation2 + $0x150] sm:$0xff]
          %v312 = vld [vmem:[#allocation2 + $0x158] sm:$0xff]
          %v313 = vld [vmem:[#allocation2 + $0x160] sm:$0xff]
          %v314 = vld [vmem:[#allocation2 + $0x168] sm:$0xff]
          %v315 = vld [vmem:[#allocation2 + $0x170] sm:$0xff]
          %v316 = vld [vmem:[#allocation2 + $0x178] sm:$0xff]
          %v317 = vld [vmem:[#allocation2 + $0x180] sm:$0xff]
          %v318 = vld [vmem:[#allocation2 + $0x188] sm:$0xff]
          %v319 = vld [vmem:[#allocation2 + $0x190] sm:$0xff]
          %v320 = vld [vmem:[#allocation2 + $0x198] sm:$0xff]
          %v321 = vld [vmem:[#allocation2 + $0x1a0] sm:$0xff]
          %v322 = vld [vmem:[#allocation2 + $0x1a8] sm:$0xff]
          %371 = vrot.lane.b32.xlu0 %v272, 64
          %v372 = vpop.permute.xlu0 %371
          %373 = vrot.lane.b32.xlu0 %v273, 64
          %v374 = vpop.permute.xlu0 %373
          %375 = vrot.lane.b32.xlu0 %v274, 64
          %v376 = vpop.permute.xlu0 %375
          %377 = vrot.lane.b32.xlu0 %v275, 64
          %v378 = vpop.permute.xlu0 %377
          %379 = vrot.lane.b32.xlu0 %v276, 64
          %v380 = vpop.permute.xlu0 %379
          %381 = vrot.lane.b32.xlu0 %v277, 64
          %v382 = vpop.permute.xlu0 %381
          %383 = vrot.lane.b32.xlu0 %v278, 64
          %v384 = vpop.permute.xlu0 %383
          %385 = vrot.lane.b32.xlu0 %v279, 64
          %v386 = vpop.permute.xlu0 %385
          %387 = vrot.lane.b32.xlu0 %v280, 64
          %v388 = vpop.permute.xlu0 %387
          %389 = vrot.lane.b32.xlu0 %v281, 64
          %v390 = vpop.permute.xlu0 %389
          %391 = vrot.lane.b32.xlu0 %v282, 64
          %v392 = vpop.permute.xlu0 %391
          %393 = vrot.lane.b32.xlu0 %v283, 64
          %v394 = vpop.permute.xlu0 %393
          %395 = vrot.lane.b32.xlu0 %v284, 64
          %v396 = vpop.permute.xlu0 %395
          %397 = vrot.lane.b32.xlu0 %v285, 64
          %v398 = vpop.permute.xlu0 %397
          %399 = vrot.lane.b32.xlu0 %v286, 64
          %v400 = vpop.permute.xlu0 %399
          %401 = vrot.lane.b32.xlu0 %v287, 64
          %v402 = vpop.permute.xlu0 %401
          %403 = vrot.lane.b32.xlu0 %v288, 64
          %v404 = vpop.permute.xlu0 %403
          %405 = vrot.lane.b32.xlu0 %v289, 64
          %v406 = vpop.permute.xlu0 %405
          %407 = vrot.lane.b32.xlu0 %v290, 64
          %v408 = vpop.permute.xlu0 %407
          %409 = vrot.lane.b32.xlu0 %v291, 64
          %v410 = vpop.permute.xlu0 %409
          %411 = vrot.lane.b32.xlu0 %v292, 64
          %v412 = vpop.permute.xlu0 %411
          %413 = vrot.lane.b32.xlu0 %v293, 64
          %v414 = vpop.permute.xlu0 %413
          %415 = vrot.lane.b32.xlu0 %v294, 64
          %v416 = vpop.permute.xlu0 %415
          %417 = vrot.lane.b32.xlu0 %v295, 64
          %v418 = vpop.permute.xlu0 %417
          %419 = vrot.lane.b32.xlu0 %v296, 64
          %v420 = vpop.permute.xlu0 %419
          %421 = vrot.lane.b32.xlu0 %v297, 64
          %v422 = vpop.permute.xlu0 %421
          %423 = vrot.lane.b32.xlu0 %v298, 64
          %v424 = vpop.permute.xlu0 %423
          %425 = vrot.lane.b32.xlu0 %v299, 64
          %v426 = vpop.permute.xlu0 %425
          %427 = vrot.lane.b32.xlu0 %v300, 64
          %v428 = vpop.permute.xlu0 %427
          %429 = vrot.lane.b32.xlu0 %v301, 64
          %v430 = vpop.permute.xlu0 %429
          %431 = vrot.lane.b32.xlu0 %v302, 64
          %v432 = vpop.permute.xlu0 %431
          %433 = vrot.lane.b32.xlu0 %v303, 64
          %v434 = vpop.permute.xlu0 %433
          %435 = vrot.lane.b32.xlu0 %v304, 64
          %v436 = vpop.permute.xlu0 %435
          %437 = vrot.lane.b32.xlu0 %v305, 64
          %v438 = vpop.permute.xlu0 %437
          %439 = vrot.lane.b32.xlu0 %v306, 64
          %v440 = vpop.permute.xlu0 %439
          %441 = vrot.lane.b32.xlu0 %v307, 64
          %v442 = vpop.permute.xlu0 %441
          %443 = vrot.lane.b32.xlu0 %v308, 64
          %v444 = vpop.permute.xlu0 %443
          %445 = vrot.lane.b32.xlu0 %v309, 64
          %v446 = vpop.permute.xlu0 %445
          %447 = vrot.lane.b32.xlu0 %v310, 64
          %v448 = vpop.permute.xlu0 %447
          %449 = vrot.lane.b32.xlu0 %v311, 64
          %v450 = vpop.permute.xlu0 %449
          %451 = vrot.lane.b32.xlu0 %v312, 64
          %v452 = vpop.permute.xlu0 %451
          %453 = vrot.lane.b32.xlu0 %v313, 64
          %v454 = vpop.permute.xlu0 %453
          %455 = vrot.lane.b32.xlu0 %v314, 64
          %v456 = vpop.permute.xlu0 %455
          %457 = vrot.lane.b32.xlu0 %v315, 64
          %v458 = vpop.permute.xlu0 %457
          %459 = vrot.lane.b32.xlu0 %v316, 64
          %v460 = vpop.permute.xlu0 %459
          %461 = vrot.lane.b32.xlu0 %v317, 64
          %v462 = vpop.permute.xlu0 %461
          %463 = vrot.lane.b32.xlu0 %v318, 64
          %v464 = vpop.permute.xlu0 %463
          %465 = vrot.lane.b32.xlu0 %v319, 64
          %v466 = vpop.permute.xlu0 %465
          %v515 = vsel %vm169, %v269, %v372
          %v516 = vsel %vm169, %v270, %v374
          %v517 = vsel %vm169, %v271, %v376
          %v518 = vsel %vm169, %v272, %v378
          %v519 = vsel %vm169, %v273, %v380
          %v520 = vsel %vm169, %v274, %v382
          %v521 = vsel %vm169, %v275, %v384
          %v522 = vsel %vm169, %v276, %v386
          %v523 = vsel %vm169, %v277, %v388
          %v524 = vsel %vm169, %v278, %v390
          %v525 = vsel %vm169, %v279, %v392
          %v526 = vsel %vm169, %v280, %v394
          %v527 = vsel %vm169, %v281, %v396
          %v528 = vsel %vm169, %v282, %v398
          %v529 = vsel %vm169, %v283, %v400
          %v530 = vsel %vm169, %v284, %v402
          %v531 = vsel %vm169, %v285, %v404
          %v532 = vsel %vm169, %v286, %v406
          %v533 = vsel %vm169, %v287, %v408
          %v534 = vsel %vm169, %v288, %v410
          %v535 = vsel %vm169, %v289, %v412
          %v536 = vsel %vm169, %v290, %v414
          %v537 = vsel %vm169, %v291, %v416
          %v538 = vsel %vm169, %v292, %v418
          %v539 = vsel %vm169, %v293, %v420
          %v540 = vsel %vm169, %v294, %v422
          %v541 = vsel %vm169, %v295, %v424
          %v542 = vsel %vm169, %v296, %v426
          %v543 = vsel %vm169, %v297, %v428
          %v544 = vsel %vm169, %v298, %v430
          %v545 = vsel %vm169, %v299, %v432
          %v546 = vsel %vm169, %v300, %v434
          %v547 = vsel %vm169, %v301, %v436
          %v548 = vsel %vm169, %v302, %v438
          %v549 = vsel %vm169, %v303, %v440
          %v550 = vsel %vm169, %v304, %v442
          %v551 = vsel %vm169, %v305, %v444
          %v552 = vsel %vm169, %v306, %v446
          %v553 = vsel %vm169, %v307, %v448
          %v554 = vsel %vm169, %v308, %v450
          %v555 = vsel %vm169, %v309, %v452
          %v556 = vsel %vm169, %v310, %v454
          %v557 = vsel %vm169, %v311, %v456
          %v558 = vsel %vm169, %v312, %v458
          %v559 = vsel %vm169, %v313, %v460
          %v560 = vsel %vm169, %v314, %v462
          %v561 = vsel %vm169, %v315, %v464
          %v562 = vsel %vm169, %v316, %v466
          %s563 = smul.u32 %s268, 48
          %s564 = smul.addr %s563, 8
          %s565 = scalar_lea.vmem %s1, %s564
          %v566 = vld [vmem:[%s565] sm:$0xff]
          %v567 = vld [vmem:[%s565 + $0x8] sm:$0xff]
          %v568 = vld [vmem:[%s565 + $0x10] sm:$0xff]
          %v569 = vld [vmem:[%s565 + $0x18] sm:$0xff]
          %v570 = vld [vmem:[%s565 + $0x20] sm:$0xff]
          %v571 = vld [vmem:[%s565 + $0x28] sm:$0xff]
          %v572 = vld [vmem:[%s565 + $0x30] sm:$0xff]
          %v573 = vld [vmem:[%s565 + $0x38] sm:$0xff]
          %v574 = vld [vmem:[%s565 + $0x40] sm:$0xff]
          %v575 = vld [vmem:[%s565 + $0x48] sm:$0xff]
          %v576 = vld [vmem:[%s565 + $0x50] sm:$0xff]
          %v577 = vld [vmem:[%s565 + $0x58] sm:$0xff]
          %v578 = vld [vmem:[%s565 + $0x60] sm:$0xff]
          %v579 = vld [vmem:[%s565 + $0x68] sm:$0xff]
          %v580 = vld [vmem:[%s565 + $0x70] sm:$0xff]
          %v581 = vld [vmem:[%s565 + $0x78] sm:$0xff]
          %v582 = vld [vmem:[%s565 + $0x80] sm:$0xff]
          %v583 = vld [vmem:[%s565 + $0x88] sm:$0xff]
          %v584 = vld [vmem:[%s565 + $0x90] sm:$0xff]
          %v585 = vld [vmem:[%s565 + $0x98] sm:$0xff]
          %v586 = vld [vmem:[%s565 + $0xa0] sm:$0xff]
          %v587 = vld [vmem:[%s565 + $0xa8] sm:$0xff]
          %v588 = vld [vmem:[%s565 + $0xb0] sm:$0xff]
          %v589 = vld [vmem:[%s565 + $0xb8] sm:$0xff]
          %v590 = vld [vmem:[%s565 + $0xc0] sm:$0xff]
          %v591 = vld [vmem:[%s565 + $0xc8] sm:$0xff]
          %v592 = vld [vmem:[%s565 + $0xd0] sm:$0xff]
          %v593 = vld [vmem:[%s565 + $0xd8] sm:$0xff]
          %v594 = vld [vmem:[%s565 + $0xe0] sm:$0xff]
          %v595 = vld [vmem:[%s565 + $0xe8] sm:$0xff]
          %v596 = vld [vmem:[%s565 + $0xf0] sm:$0xff]
          %v597 = vld [vmem:[%s565 + $0xf8] sm:$0xff]
          %v598 = vld [vmem:[%s565 + $0x100] sm:$0xff]
          %v599 = vld [vmem:[%s565 + $0x108] sm:$0xff]
          %v600 = vld [vmem:[%s565 + $0x110] sm:$0xff]
          %v601 = vld [vmem:[%s565 + $0x118] sm:$0xff]
          %v602 = vld [vmem:[%s565 + $0x120] sm:$0xff]
          %v603 = vld [vmem:[%s565 + $0x128] sm:$0xff]
          %v604 = vld [vmem:[%s565 + $0x130] sm:$0xff]
          %v605 = vld [vmem:[%s565 + $0x138] sm:$0xff]
          %v606 = vld [vmem:[%s565 + $0x140] sm:$0xff]
          %v607 = vld [vmem:[%s565 + $0x148] sm:$0xff]
          %v608 = vld [vmem:[%s565 + $0x150] sm:$0xff]
          %v609 = vld [vmem:[%s565 + $0x158] sm:$0xff]
          %v610 = vld [vmem:[%s565 + $0x160] sm:$0xff]
          %v611 = vld [vmem:[%s565 + $0x168] sm:$0xff]
          %v612 = vld [vmem:[%s565 + $0x170] sm:$0xff]
          %v613 = vld [vmem:[%s565 + $0x178] sm:$0xff]
          %v614 = vsel %vm169, %v275, 0
          %v616 = vsel %vm169, %v276, 0
          %v618 = vsel %vm169, %v277, 0
          %v620 = vsel %vm169, %v278, 0
          %v622 = vsel %vm169, %v279, 0
          %v624 = vsel %vm169, %v280, 0
          %v626 = vsel %vm169, %v281, 0
          %v628 = vsel %vm169, %v282, 0
          %v630 = vsel %vm169, %v283, 0
          %v632 = vsel %vm169, %v284, 0
          %v634 = vsel %vm169, %v285, 0
          %v636 = vsel %vm169, %v286, 0
          %v638 = vsel %vm169, %v287, 0
          %v640 = vsel %vm169, %v288, 0
          %v642 = vsel %vm169, %v289, 0
          %v644 = vsel %vm169, %v290, 0
          %v646 = vsel %vm169, %v291, 0
          %v648 = vsel %vm169, %v292, 0
          %v650 = vsel %vm169, %v293, 0
          %v652 = vsel %vm169, %v294, 0
          %v654 = vsel %vm169, %v295, 0
          %v656 = vsel %vm169, %v296, 0
          %v658 = vsel %vm169, %v297, 0
          %v660 = vsel %vm169, %v298, 0
          %v662 = vsel %vm169, %v299, 0
          %v664 = vsel %vm169, %v300, 0
          %v666 = vsel %vm169, %v301, 0
          %v668 = vsel %vm169, %v302, 0
          %v670 = vsel %vm169, %v303, 0
          %v672 = vsel %vm169, %v304, 0
          %v674 = vsel %vm169, %v305, 0
          %v676 = vsel %vm169, %v306, 0
          %v678 = vsel %vm169, %v307, 0
          %v680 = vsel %vm169, %v308, 0
          %v682 = vsel %vm169, %v309, 0
          %v684 = vsel %vm169, %v310, 0
          %v686 = vsel %vm169, %v311, 0
          %v688 = vsel %vm169, %v312, 0
          %v690 = vsel %vm169, %v313, 0
          %v692 = vsel %vm169, %v314, 0
          %v694 = vsel %vm169, %v315, 0
          %v696 = vsel %vm169, %v316, 0
          %v698 = vsel %vm169, %v317, 0
          %v700 = vsel %vm169, %v318, 0
          %v702 = vsel %vm169, %v319, 0
          %v705 = vsel %vm169, %v320, 0
          %v708 = vsel %vm169, %v321, 0
          %v711 = vsel %vm169, %v322, 0
          %713 = vmatprep.subr.mxu0 %v567
          %714 = vmatpush1.msra.mxu0 %v566
          %715 = vmatprep.subr.mxu0 %v569
          %716 = vmatpush1.msra.mxu0 %v568
          %717 = vmatprep.subr.mxu0 %v571
          %718 = vmatpush1.msra.mxu0 %v570
          %719 = vmatprep.subr.mxu0 %v573
          %720 = vmatpush1.msra.mxu0 %v572
          %721 = vmatprep.subr.mxu0 %v575
          %722 = vmatpush1.msra.mxu0 %v574
          %723 = vmatprep.subr.mxu0 %v577
          %724 = vmatpush1.msra.mxu0 %v576
          %725 = vmatprep.subr.mxu0 %v579
          %726 = vmatpush1.msra.mxu0 %v578
          %727 = vmatprep.subr.mxu0 %v581
          %728 = vmatpush1.msra.mxu0 %v580
          %729 = vmatprep.subr.mxu0 %v583
          %730 = vmatpush1.msra.mxu0 %v582
          %731 = vmatprep.subr.mxu0 %v585
          %732 = vmatpush1.msra.mxu0 %v584
          %733 = vmatprep.subr.mxu0 %v587
          %734 = vmatpush1.msra.mxu0 %v586
          %735 = vmatprep.subr.mxu0 %v589
          %736 = vmatpush1.msra.mxu0 %v588
          %737 = vmatprep.subr.mxu0 %v591
          %738 = vmatpush1.msra.mxu0 %v590
          %739 = vmatprep.subr.mxu0 %v593
          %740 = vmatpush1.msra.mxu0 %v592
          %741 = vmatprep.subr.mxu0 %v595
          %742 = vmatpush1.msra.mxu0 %v594
          %743 = vmatprep.subr.mxu0 %v597
          %744 = vmatpush1.msra.mxu0 %v596
          %745 = vmatprep.subr.mxu0 %v599
          %746 = vmatpush1.msra.mxu0 %v598
          %747 = vmatprep.subr.mxu0 %v601
          %748 = vmatpush1.msra.mxu0 %v600
          %749 = vmatprep.subr.mxu0 %v603
          %750 = vmatpush1.msra.mxu0 %v602
          %751 = vmatprep.subr.mxu0 %v605
          %752 = vmatpush1.msra.mxu0 %v604
          %753 = vmatprep.subr.mxu0 %v607
          %754 = vmatpush1.msra.mxu0 %v606
          %755 = vmatprep.subr.mxu0 %v609
          %756 = vmatpush1.msra.mxu0 %v608
          %757 = vmatprep.subr.mxu0 %v611
          %758 = vmatpush1.msra.mxu0 %v610
          %759 = vmatprep.subr.mxu0 %v613
          %760 = vmatpush1.msra.mxu0 %v612
          %761 = vmatprep.subr.mxu0 0.0
          %762 = vmatpush1.msra.mxu0 0.0
          %763 = vmatprep.subr.mxu0 0.0
          %764 = vmatpush1.msra.mxu0 0.0
          %765 = vmatprep.subr.mxu0 0.0
          %766 = vmatpush1.msra.mxu0 0.0
          %767 = vmatprep.subr.mxu0 0.0
          %768 = vmatpush1.msra.mxu0 0.0
          %769 = vmatprep.subr.mxu0 0.0
          %770 = vmatpush1.msra.mxu0 0.0
          %771 = vmatprep.subr.mxu0 0.0
          %772 = vmatpush1.msra.mxu0 0.0
          %773 = vmatprep.subr.mxu0 0.0
          %774 = vmatpush1.msra.mxu0 0.0
          %775 = vmatprep.subr.mxu0 0.0
          %776 = vmatpush1.msra.mxu0 0.0
          %777 = vmatprep.mubr.f32.mxu0 %v614
          %778 = vmatmul.mubr.f32.gmra.mrb[0].mxu0 %v515
          %v779 = vpop.f32.mrb[0].mxu0
          %v780 = vadd.f32 0.0, %v779
          %v781 = vpop.f32.mrb[0].mxu0
          %v782 = vadd.f32 0.0, %v781
          %783 = vmatprep.mubr.f32.mxu0 %v616
          %784 = vmatmul.mubr.f32.gmra.mrb[0].mxu0 %v516
          %v785 = vpop.f32.mrb[0].mxu0
          %v786 = vadd.f32 0.0, %v785
          %v787 = vpop.f32.mrb[0].mxu0
          %v788 = vadd.f32 0.0, %v787
          %789 = vmatprep.mubr.f32.mxu0 %v618
          %790 = vmatmul.mubr.f32.gmra.mrb[0].mxu0 %v517
          %v791 = vpop.f32.mrb[0].mxu0
          %v792 = vadd.f32 0.0, %v791
          %v793 = vpop.f32.mrb[0].mxu0
          %v794 = vadd.f32 0.0, %v793
          %795 = vmatprep.mubr.f32.mxu0 %v620
          %796 = vmatmul.mubr.f32.gmra.mrb[0].mxu0 %v518
          %v797 = vpop.f32.mrb[0].mxu0
          %v798 = vadd.f32 0.0, %v797
          %v799 = vpop.f32.mrb[0].mxu0
          %v800 = vadd.f32 0.0, %v799
          %801 = vmatprep.mubr.f32.mxu0 %v622
          %802 = vmatmul.mubr.f32.gmra.mrb[0].mxu0 %v519
          %v803 = vpop.f32.mrb[0].mxu0
          %v804 = vadd.f32 0.0, %v803
          %v805 = vpop.f32.mrb[0].mxu0
          %v806 = vadd.f32 0.0, %v805
          %807 = vmatprep.mubr.f32.mxu0 %v624
          %808 = vmatmul.mubr.f32.gmra.mrb[0].mxu0 %v520
          %v809 = vpop.f32.mrb[0].mxu0
          %v810 = vadd.f32 0.0, %v809
          %v811 = vpop.f32.mrb[0].mxu0
          %v812 = vadd.f32 0.0, %v811
          %813 = vmatprep.mubr.f32.mxu0 %v626
          %814 = vmatmul.mubr.f32.gmra.mrb[0].mxu0 %v521
          %v815 = vpop.f32.mrb[0].mxu0
          %v816 = vadd.f32 0.0, %v815
          %v817 = vpop.f32.mrb[0].mxu0
          %v818 = vadd.f32 0.0, %v817
          %819 = vmatprep.mubr.f32.mxu0 %v628
          %820 = vmatmul.mubr.f32.gmra.mrb[0].mxu0 %v522
          %v821 = vpop.f32.mrb[0].mxu0
          %v822 = vadd.f32 0.0, %v821
          %v823 = vpop.f32.mrb[0].mxu0
          %v824 = vadd.f32 0.0, %v823
          %825 = vmatprep.mubr.f32.mxu0 %v630
          %826 = vmatmul.mubr.f32.gmra.mrb[0].mxu0 %v523
          %v827 = vpop.f32.mrb[0].mxu0
          %v828 = vadd.f32 0.0, %v827
          %v829 = vpop.f32.mrb[0].mxu0
          %v830 = vadd.f32 0.0, %v829
          %831 = vmatprep.mubr.f32.mxu0 %v632
          %832 = vmatmul.mubr.f32.gmra.mrb[0].mxu0 %v524
          %v833 = vpop.f32.mrb[0].mxu0
          %v834 = vadd.f32 0.0, %v833
          %v835 = vpop.f32.mrb[0].mxu0
          %v836 = vadd.f32 0.0, %v835
          %837 = vmatprep.mubr.f32.mxu0 %v634
          %838 = vmatmul.mubr.f32.gmra.mrb[0].mxu0 %v525
          %v839 = vpop.f32.mrb[0].mxu0
          %v840 = vadd.f32 0.0, %v839
          %v841 = vpop.f32.mrb[0].mxu0
          %v842 = vadd.f32 0.0, %v841
          %843 = vmatprep.mubr.f32.mxu0 %v636
          %844 = vmatmul.mubr.f32.gmra.mrb[0].mxu0 %v526
          %v845 = vpop.f32.mrb[0].mxu0
          %v846 = vadd.f32 0.0, %v845
          %v847 = vpop.f32.mrb[0].mxu0
          %v848 = vadd.f32 0.0, %v847
          %849 = vmatprep.mubr.f32.mxu0 %v638
          %850 = vmatmul.mubr.f32.gmra.mrb[0].mxu0 %v527
          %v851 = vpop.f32.mrb[0].mxu0
          %v852 = vadd.f32 0.0, %v851
          %v853 = vpop.f32.mrb[0].mxu0
          %v854 = vadd.f32 0.0, %v853
          %855 = vmatprep.mubr.f32.mxu0 %v640
          %856 = vmatmul.mubr.f32.gmra.mrb[0].mxu0 %v528
          %v857 = vpop.f32.mrb[0].mxu0
          %v858 = vadd.f32 0.0, %v857
          %v859 = vpop.f32.mrb[0].mxu0
          %v860 = vadd.f32 0.0, %v859
          %861 = vmatprep.mubr.f32.mxu0 %v642
          %862 = vmatmul.mubr.f32.gmra.mrb[0].mxu0 %v529
          %v863 = vpop.f32.mrb[0].mxu0
          %v864 = vadd.f32 0.0, %v863
          %v865 = vpop.f32.mrb[0].mxu0
          %v866 = vadd.f32 0.0, %v865
          %867 = vmatprep.mubr.f32.mxu0 %v644
          %868 = vmatmul.mubr.f32.gmra.mrb[0].mxu0 %v530
          %v869 = vpop.f32.mrb[0].mxu0
          %v870 = vadd.f32 0.0, %v869
          %v871 = vpop.f32.mrb[0].mxu0
          %v872 = vadd.f32 0.0, %v871
          %873 = vmatprep.mubr.f32.mxu0 %v646
          %874 = vmatmul.mubr.f32.gmra.mrb[0].mxu0 %v531
          %v875 = vpop.f32.mrb[0].mxu0
          %v876 = vadd.f32 0.0, %v875
          %v877 = vpop.f32.mrb[0].mxu0
          %v878 = vadd.f32 0.0, %v877
          %879 = vmatprep.mubr.f32.mxu0 %v648
          %880 = vmatmul.mubr.f32.gmra.mrb[0].mxu0 %v532
          %v881 = vpop.f32.mrb[0].mxu0
          %v882 = vadd.f32 0.0, %v881
          %v883 = vpop.f32.mrb[0].mxu0
          %v884 = vadd.f32 0.0, %v883
          %885 = vmatprep.mubr.f32.mxu0 %v650
          %886 = vmatmul.mubr.f32.gmra.mrb[0].mxu0 %v533
          %v887 = vpop.f32.mrb[0].mxu0
          %v888 = vadd.f32 0.0, %v887
          %v889 = vpop.f32.mrb[0].mxu0
          %v890 = vadd.f32 0.0, %v889
          %891 = vmatprep.mubr.f32.mxu0 %v652
          %892 = vmatmul.mubr.f32.gmra.mrb[0].mxu0 %v534
          %v893 = vpop.f32.mrb[0].mxu0
          %v894 = vadd.f32 0.0, %v893
          %v895 = vpop.f32.mrb[0].mxu0
          %v896 = vadd.f32 0.0, %v895
          %897 = vmatprep.mubr.f32.mxu0 %v654
          %898 = vmatmul.mubr.f32.gmra.mrb[0].mxu0 %v535
          %v899 = vpop.f32.mrb[0].mxu0
          %v900 = vadd.f32 0.0, %v899
          %v901 = vpop.f32.mrb[0].mxu0
          %v902 = vadd.f32 0.0, %v901
          %903 = vmatprep.mubr.f32.mxu0 %v656
          %904 = vmatmul.mubr.f32.gmra.mrb[0].mxu0 %v536
          %v905 = vpop.f32.mrb[0].mxu0
          %v906 = vadd.f32 0.0, %v905
          %v907 = vpop.f32.mrb[0].mxu0
          %v908 = vadd.f32 0.0, %v907
          %909 = vmatprep.mubr.f32.mxu0 %v658
          %910 = vmatmul.mubr.f32.gmra.mrb[0].mxu0 %v537
          %v911 = vpop.f32.mrb[0].mxu0
          %v912 = vadd.f32 0.0, %v911
          %v913 = vpop.f32.mrb[0].mxu0
          %v914 = vadd.f32 0.0, %v913
          %915 = vmatprep.mubr.f32.mxu0 %v660
          %916 = vmatmul.mubr.f32.gmra.mrb[0].mxu0 %v538
          %v917 = vpop.f32.mrb[0].mxu0
          %v918 = vadd.f32 0.0, %v917
          %v919 = vpop.f32.mrb[0].mxu0
          %v920 = vadd.f32 0.0, %v919
          %921 = vmatprep.mubr.f32.mxu0 %v662
          %922 = vmatmul.mubr.f32.gmra.mrb[0].mxu0 %v539
          %v923 = vpop.f32.mrb[0].mxu0
          %v924 = vadd.f32 0.0, %v923
          %v925 = vpop.f32.mrb[0].mxu0
          %v926 = vadd.f32 0.0, %v925
          %927 = vmatprep.mubr.f32.mxu0 %v664
          %928 = vmatmul.mubr.f32.gmra.mrb[0].mxu0 %v540
          %v929 = vpop.f32.mrb[0].mxu0
          %v930 = vadd.f32 0.0, %v929
          %v931 = vpop.f32.mrb[0].mxu0
          %v932 = vadd.f32 0.0, %v931
          %933 = vmatprep.mubr.f32.mxu0 %v666
          %934 = vmatmul.mubr.f32.gmra.mrb[0].mxu0 %v541
          %v935 = vpop.f32.mrb[0].mxu0
          %v936 = vadd.f32 0.0, %v935
          %v937 = vpop.f32.mrb[0].mxu0
          %v938 = vadd.f32 0.0, %v937
          %939 = vmatprep.mubr.f32.mxu0 %v668
          %940 = vmatmul.mubr.f32.gmra.mrb[0].mxu0 %v542
          %v941 = vpop.f32.mrb[0].mxu0
          %v942 = vadd.f32 0.0, %v941
          %v943 = vpop.f32.mrb[0].mxu0
          %v944 = vadd.f32 0.0, %v943
          %945 = vmatprep.mubr.f32.mxu0 %v670
          %946 = vmatmul.mubr.f32.gmra.mrb[0].mxu0 %v543
          %v947 = vpop.f32.mrb[0].mxu0
          %v948 = vadd.f32 0.0, %v947
          %v949 = vpop.f32.mrb[0].mxu0
          %v950 = vadd.f32 0.0, %v949
          %951 = vmatprep.mubr.f32.mxu0 %v672
          %952 = vmatmul.mubr.f32.gmra.mrb[0].mxu0 %v544
          %v953 = vpop.f32.mrb[0].mxu0
          %v954 = vadd.f32 0.0, %v953
          %v955 = vpop.f32.mrb[0].mxu0
          %v956 = vadd.f32 0.0, %v955
          %957 = vmatprep.mubr.f32.mxu0 %v674
          %958 = vmatmul.mubr.f32.gmra.mrb[0].mxu0 %v545
          %v959 = vpop.f32.mrb[0].mxu0
          %v960 = vadd.f32 0.0, %v959
          %v961 = vpop.f32.mrb[0].mxu0
          %v962 = vadd.f32 0.0, %v961
          %963 = vmatprep.mubr.f32.mxu0 %v676
          %964 = vmatmul.mubr.f32.gmra.mrb[0].mxu0 %v546
          %v965 = vpop.f32.mrb[0].mxu0
          %v966 = vadd.f32 0.0, %v965
          %v967 = vpop.f32.mrb[0].mxu0
          %v968 = vadd.f32 0.0, %v967
          %969 = vmatprep.mubr.f32.mxu0 %v678
          %970 = vmatmul.mubr.f32.gmra.mrb[0].mxu0 %v547
          %v971 = vpop.f32.mrb[0].mxu0
          %v972 = vadd.f32 0.0, %v971
          %v973 = vpop.f32.mrb[0].mxu0
          %v974 = vadd.f32 0.0, %v973
          %975 = vmatprep.mubr.f32.mxu0 %v680
          %976 = vmatmul.mubr.f32.gmra.mrb[0].mxu0 %v548
          %v977 = vpop.f32.mrb[0].mxu0
          %v978 = vadd.f32 0.0, %v977
          %v979 = vpop.f32.mrb[0].mxu0
          %v980 = vadd.f32 0.0, %v979
          %981 = vmatprep.mubr.f32.mxu0 %v682
          %982 = vmatmul.mubr.f32.gmra.mrb[0].mxu0 %v549
          %v983 = vpop.f32.mrb[0].mxu0
          %v984 = vadd.f32 0.0, %v983
          %v985 = vpop.f32.mrb[0].mxu0
          %v986 = vadd.f32 0.0, %v985
          %987 = vmatprep.mubr.f32.mxu0 %v684
          %988 = vmatmul.mubr.f32.gmra.mrb[0].mxu0 %v550
          %v989 = vpop.f32.mrb[0].mxu0
          %v990 = vadd.f32 0.0, %v989
          %v991 = vpop.f32.mrb[0].mxu0
          %v992 = vadd.f32 0.0, %v991
          %993 = vmatprep.mubr.f32.mxu0 %v686
          %994 = vmatmul.mubr.f32.gmra.mrb[0].mxu0 %v551
          %v995 = vpop.f32.mrb[0].mxu0
          %v996 = vadd.f32 0.0, %v995
          %v997 = vpop.f32.mrb[0].mxu0
          %v998 = vadd.f32 0.0, %v997
          %999 = vmatprep.mubr.f32.mxu0 %v688
          %1000 = vmatmul.mubr.f32.gmra.mrb[0].mxu0 %v552
          %v1001 = vpop.f32.mrb[0].mxu0
          %v1002 = vadd.f32 0.0, %v1001
          %v1003 = vpop.f32.mrb[0].mxu0
          %v1004 = vadd.f32 0.0, %v1003
          %1005 = vmatprep.mubr.f32.mxu0 %v690
          %1006 = vmatmul.mubr.f32.gmra.mrb[0].mxu0 %v553
          %v1007 = vpop.f32.mrb[0].mxu0
          %v1008 = vadd.f32 0.0, %v1007
          %v1009 = vpop.f32.mrb[0].mxu0
          %v1010 = vadd.f32 0.0, %v1009
          %1011 = vmatprep.mubr.f32.mxu0 %v692
          %1012 = vmatmul.mubr.f32.gmra.mrb[0].mxu0 %v554
          %v1013 = vpop.f32.mrb[0].mxu0
          %v1014 = vadd.f32 0.0, %v1013
          %v1015 = vpop.f32.mrb[0].mxu0
          %v1016 = vadd.f32 0.0, %v1015
          %1017 = vmatprep.mubr.f32.mxu0 %v694
          %1018 = vmatmul.mubr.f32.gmra.mrb[0].mxu0 %v555
          %v1019 = vpop.f32.mrb[0].mxu0
          %v1020 = vadd.f32 0.0, %v1019
          %v1021 = vpop.f32.mrb[0].mxu0
          %v1022 = vadd.f32 0.0, %v1021
          %1023 = vmatprep.mubr.f32.mxu0 %v696
          %1024 = vmatmul.mubr.f32.gmra.mrb[0].mxu0 %v556
          %v1025 = vpop.f32.mrb[0].mxu0
          %v1026 = vadd.f32 0.0, %v1025
          %v1027 = vpop.f32.mrb[0].mxu0
          %v1028 = vadd.f32 0.0, %v1027
          %1029 = vmatprep.mubr.f32.mxu0 %v698
          %1030 = vmatmul.mubr.f32.gmra.mrb[0].mxu0 %v557
          %v1031 = vpop.f32.mrb[0].mxu0
          %v1032 = vadd.f32 0.0, %v1031
          %v1033 = vpop.f32.mrb[0].mxu0
          %v1034 = vadd.f32 0.0, %v1033
          %1035 = vmatprep.mubr.f32.mxu0 %v700
          %1036 = vmatmul.mubr.f32.gmra.mrb[0].mxu0 %v558
          %v1037 = vpop.f32.mrb[0].mxu0
          %v1038 = vadd.f32 0.0, %v1037
          %v1039 = vpop.f32.mrb[0].mxu0
          %v1040 = vadd.f32 0.0, %v1039
          %1041 = vmatprep.mubr.f32.mxu0 %v702
          %1042 = vmatmul.mubr.f32.gmra.mrb[0].mxu0 %v559
          %v1043 = vpop.f32.mrb[0].mxu0
          %v1044 = vadd.f32 0.0, %v1043
          %v1045 = vpop.f32.mrb[0].mxu0
          %v1046 = vadd.f32 0.0, %v1045
          %1047 = vmatprep.mubr.f32.mxu0 %v705
          %1048 = vmatmul.mubr.f32.gmra.mrb[0].mxu0 %v560
          %v1049 = vpop.f32.mrb[0].mxu0
          %v1050 = vadd.f32 0.0, %v1049
          %v1051 = vpop.f32.mrb[0].mxu0
          %v1052 = vadd.f32 0.0, %v1051
          %1053 = vmatprep.mubr.f32.mxu0 %v708
          %1054 = vmatmul.mubr.f32.gmra.mrb[0].mxu0 %v561
          %v1055 = vpop.f32.mrb[0].mxu0
          %v1056 = vadd.f32 0.0, %v1055
          %v1057 = vpop.f32.mrb[0].mxu0
          %v1058 = vadd.f32 0.0, %v1057
          %1059 = vmatprep.mubr.f32.mxu0 %v711
          %1060 = vmatmul.mubr.f32.gmra.mrb[0].mxu0 %v562
          %v1061 = vpop.f32.mrb[0].mxu0
          %v1062 = vadd.f32 0.0, %v1061
          %v1063 = vpop.f32.mrb[0].mxu0
          %v1064 = vadd.f32 0.0, %v1063
          %1065 = vdwg.mxu0
          %v1066 = vrot.slane %v780, 7
          %v1067 = vrot.slane %v786, 7
          %v1068 = vrot.slane %v792, 7
          %v1069 = vrot.slane %v798, 7
          %v1070 = vrot.slane %v804, 7
          %v1071 = vrot.slane %v810, 7
          %v1072 = vrot.slane %v816, 7
          %v1073 = vrot.slane %v822, 7
          %v1074 = vrot.slane %v828, 7
          %v1075 = vrot.slane %v834, 7
          %v1076 = vrot.slane %v840, 7
          %v1077 = vrot.slane %v846, 7
          %v1078 = vrot.slane %v852, 7
          %v1079 = vrot.slane %v858, 7
          %v1080 = vrot.slane %v864, 7
          %v1081 = vrot.slane %v870, 7
          %v1082 = vrot.slane %v876, 7
          %v1083 = vrot.slane %v882, 7
          %v1084 = vrot.slane %v888, 7
          %v1085 = vrot.slane %v894, 7
          %v1086 = vrot.slane %v900, 7
          %v1087 = vrot.slane %v906, 7
          %v1088 = vrot.slane %v912, 7
          %v1089 = vrot.slane %v918, 7
          %v1090 = vrot.slane %v924, 7
          %v1091 = vrot.slane %v930, 7
          %v1092 = vrot.slane %v936, 7
          %v1093 = vrot.slane %v942, 7
          %v1094 = vrot.slane %v948, 7
          %v1095 = vrot.slane %v954, 7
          %v1096 = vrot.slane %v960, 7
          %v1097 = vrot.slane %v966, 7
          %v1098 = vrot.slane %v972, 7
          %v1099 = vrot.slane %v978, 7
          %v1100 = vrot.slane %v984, 7
          %v1101 = vrot.slane %v990, 7
          %v1102 = vrot.slane %v996, 7
          %v1103 = vrot.slane %v1002, 7
          %v1104 = vrot.slane %v1008, 7
          %v1105 = vrot.slane %v1014, 7
          %v1106 = vrot.slane %v1020, 7
          %v1107 = vrot.slane %v1026, 7
          %v1108 = vrot.slane %v1032, 7
          %v1109 = vrot.slane %v1038, 7
          %v1110 = vrot.slane %v1044, 7
          %v1111 = vrot.slane %v1050, 7
          %v1112 = vrot.slane %v1056, 7
          %v1113 = vrot.slane %v1062, 7
          %v1114 = vlaneseq
          %v1115 = vshrl.u32 %v1114, 7
          %vm1116 = vcmp.lt.s32.totalorder %v1115, 1
          %v1117 = vsel %vm1116, %v1112, %v1113
          %v1118 = vsel %vm1116, %v1111, %v1112
          %v1119 = vsel %vm1116, %v1110, %v1111
          %v1120 = vsel %vm1116, %v1109, %v1110
          %v1121 = vsel %vm1116, %v1108, %v1109
          %v1122 = vsel %vm1116, %v1107, %v1108
          %v1123 = vsel %vm1116, %v1106, %v1107
          %v1124 = vsel %vm1116, %v1105, %v1106
          %v1125 = vsel %vm1116, %v1104, %v1105
          %v1126 = vsel %vm1116, %v1103, %v1104
          %v1127 = vsel %vm1116, %v1102, %v1103
          %v1128 = vsel %vm1116, %v1101, %v1102
          %v1129 = vsel %vm1116, %v1100, %v1101
          %v1130 = vsel %vm1116, %v1099, %v1100
          %v1131 = vsel %vm1116, %v1098, %v1099
          %v1132 = vsel %vm1116, %v1097, %v1098
          %v1133 = vsel %vm1116, %v1096, %v1097
          %v1134 = vsel %vm1116, %v1095, %v1096
          %v1135 = vsel %vm1116, %v1094, %v1095
          %v1136 = vsel %vm1116, %v1093, %v1094
          %v1137 = vsel %vm1116, %v1092, %v1093
          %v1138 = vsel %vm1116, %v1091, %v1092
          %v1139 = vsel %vm1116, %v1090, %v1091
          %v1140 = vsel %vm1116, %v1089, %v1090
          %v1141 = vsel %vm1116, %v1088, %v1089
          %v1142 = vsel %vm1116, %v1087, %v1088
          %v1143 = vsel %vm1116, %v1086, %v1087
          %v1144 = vsel %vm1116, %v1085, %v1086
          %v1145 = vsel %vm1116, %v1084, %v1085
          %v1146 = vsel %vm1116, %v1083, %v1084
          %v1147 = vsel %vm1116, %v1082, %v1083
          %v1148 = vsel %vm1116, %v1081, %v1082
          %v1149 = vsel %vm1116, %v1080, %v1081
          %v1150 = vsel %vm1116, %v1079, %v1080
          %v1151 = vsel %vm1116, %v1078, %v1079
          %v1152 = vsel %vm1116, %v1077, %v1078
          %v1153 = vsel %vm1116, %v1076, %v1077
          %v1154 = vsel %vm1116, %v1075, %v1076
          %v1155 = vsel %vm1116, %v1074, %v1075
          %v1156 = vsel %vm1116, %v1073, %v1074
          %v1157 = vsel %vm1116, %v1072, %v1073
          %v1158 = vsel %vm1116, %v1071, %v1072
          %v1159 = vsel %vm1116, %v1070, %v1071
          %v1160 = vsel %vm1116, %v1069, %v1070
          %v1161 = vsel %vm1116, %v1068, %v1069
          %v1162 = vsel %vm1116, %v1067, %v1068
          %v1163 = vsel %vm1116, %v1066, %v1067
          %v1164 = vsel %vm1116, %v1113, %v1066
          %1213 = vrot.lane.b32.xlu0 %v780, 64
          %v1214 = vpop.permute.xlu0 %1213
          %1215 = vrot.lane.b32.xlu0 %v786, 64
          %v1216 = vpop.permute.xlu0 %1215
          %1217 = vrot.lane.b32.xlu0 %v792, 64
          %v1218 = vpop.permute.xlu0 %1217
          %1219 = vrot.lane.b32.xlu0 %v798, 64
          %v1220 = vpop.permute.xlu0 %1219
          %1221 = vrot.lane.b32.xlu0 %v804, 64
          %v1222 = vpop.permute.xlu0 %1221
          %1223 = vrot.lane.b32.xlu0 %v810, 64
          %v1224 = vpop.permute.xlu0 %1223
          %1225 = vrot.lane.b32.xlu0 %v816, 64
          %v1226 = vpop.permute.xlu0 %1225
          %1227 = vrot.lane.b32.xlu0 %v822, 64
          %v1228 = vpop.permute.xlu0 %1227
          %1229 = vrot.lane.b32.xlu0 %v828, 64
          %v1230 = vpop.permute.xlu0 %1229
          %1231 = vrot.lane.b32.xlu0 %v834, 64
          %v1232 = vpop.permute.xlu0 %1231
          %1233 = vrot.lane.b32.xlu0 %v840, 64
          %v1234 = vpop.permute.xlu0 %1233
          %1235 = vrot.lane.b32.xlu0 %v846, 64
          %v1236 = vpop.permute.xlu0 %1235
          %1237 = vrot.lane.b32.xlu0 %v852, 64
          %v1238 = vpop.permute.xlu0 %1237
          %1239 = vrot.lane.b32.xlu0 %v858, 64
          %v1240 = vpop.permute.xlu0 %1239
          %1241 = vrot.lane.b32.xlu0 %v864, 64
          %v1242 = vpop.permute.xlu0 %1241
          %1243 = vrot.lane.b32.xlu0 %v870, 64
          %v1244 = vpop.permute.xlu0 %1243
          %1245 = vrot.lane.b32.xlu0 %v876, 64
          %v1246 = vpop.permute.xlu0 %1245
          %1247 = vrot.lane.b32.xlu0 %v882, 64
          %v1248 = vpop.permute.xlu0 %1247
          %1249 = vrot.lane.b32.xlu0 %v888, 64
          %v1250 = vpop.permute.xlu0 %1249
          %1251 = vrot.lane.b32.xlu0 %v894, 64
          %v1252 = vpop.permute.xlu0 %1251
          %1253 = vrot.lane.b32.xlu0 %v900, 64
          %v1254 = vpop.permute.xlu0 %1253
          %1255 = vrot.lane.b32.xlu0 %v906, 64
          %v1256 = vpop.permute.xlu0 %1255
          %1257 = vrot.lane.b32.xlu0 %v912, 64
          %v1258 = vpop.permute.xlu0 %1257
          %1259 = vrot.lane.b32.xlu0 %v918, 64
          %v1260 = vpop.permute.xlu0 %1259
          %1261 = vrot.lane.b32.xlu0 %v924, 64
          %v1262 = vpop.permute.xlu0 %1261
          %1263 = vrot.lane.b32.xlu0 %v930, 64
          %v1264 = vpop.permute.xlu0 %1263
          %1265 = vrot.lane.b32.xlu0 %v936, 64
          %v1266 = vpop.permute.xlu0 %1265
          %1267 = vrot.lane.b32.xlu0 %v942, 64
          %v1268 = vpop.permute.xlu0 %1267
          %1269 = vrot.lane.b32.xlu0 %v948, 64
          %v1270 = vpop.permute.xlu0 %1269
          %1271 = vrot.lane.b32.xlu0 %v954, 64
          %v1272 = vpop.permute.xlu0 %1271
          %1273 = vrot.lane.b32.xlu0 %v960, 64
          %v1274 = vpop.permute.xlu0 %1273
          %1275 = vrot.lane.b32.xlu0 %v966, 64
          %v1276 = vpop.permute.xlu0 %1275
          %1277 = vrot.lane.b32.xlu0 %v972, 64
          %v1278 = vpop.permute.xlu0 %1277
          %1279 = vrot.lane.b32.xlu0 %v978, 64
          %v1280 = vpop.permute.xlu0 %1279
          %1281 = vrot.lane.b32.xlu0 %v984, 64
          %v1282 = vpop.permute.xlu0 %1281
          %1283 = vrot.lane.b32.xlu0 %v990, 64
          %v1284 = vpop.permute.xlu0 %1283
          %1285 = vrot.lane.b32.xlu0 %v996, 64
          %v1286 = vpop.permute.xlu0 %1285
          %1287 = vrot.lane.b32.xlu0 %v1002, 64
          %v1288 = vpop.permute.xlu0 %1287
          %1289 = vrot.lane.b32.xlu0 %v1008, 64
          %v1290 = vpop.permute.xlu0 %1289
          %1291 = vrot.lane.b32.xlu0 %v1014, 64
          %v1292 = vpop.permute.xlu0 %1291
          %1293 = vrot.lane.b32.xlu0 %v1020, 64
          %v1294 = vpop.permute.xlu0 %1293
          %1295 = vrot.lane.b32.xlu0 %v1026, 64
          %v1296 = vpop.permute.xlu0 %1295
          %1297 = vrot.lane.b32.xlu0 %v1032, 64
          %v1298 = vpop.permute.xlu0 %1297
          %1299 = vrot.lane.b32.xlu0 %v1038, 64
          %v1300 = vpop.permute.xlu0 %1299
          %1301 = vrot.lane.b32.xlu0 %v1044, 64
          %v1302 = vpop.permute.xlu0 %1301
          %1303 = vrot.lane.b32.xlu0 %v1050, 64
          %v1304 = vpop.permute.xlu0 %1303
          %1305 = vrot.lane.b32.xlu0 %v1056, 64
          %v1306 = vpop.permute.xlu0 %1305
          %1307 = vrot.lane.b32.xlu0 %v1062, 64
          %v1308 = vpop.permute.xlu0 %1307
          %v1357 = vadd.f32 %v1164, %v1214
          %v1358 = vadd.f32 %v1163, %v1216
          %v1359 = vadd.f32 %v1162, %v1218
          %v1360 = vadd.f32 %v1161, %v1220
          %v1361 = vadd.f32 %v1160, %v1222
          %v1362 = vadd.f32 %v1159, %v1224
          %v1363 = vadd.f32 %v1158, %v1226
          %v1364 = vadd.f32 %v1157, %v1228
          %v1365 = vadd.f32 %v1156, %v1230
          %v1366 = vadd.f32 %v1155, %v1232
          %v1367 = vadd.f32 %v1154, %v1234
          %v1368 = vadd.f32 %v1153, %v1236
          %v1369 = vadd.f32 %v1152, %v1238
          %v1370 = vadd.f32 %v1151, %v1240
          %v1371 = vadd.f32 %v1150, %v1242
          %v1372 = vadd.f32 %v1149, %v1244
          %v1373 = vadd.f32 %v1148, %v1246
          %v1374 = vadd.f32 %v1147, %v1248
          %v1375 = vadd.f32 %v1146, %v1250
          %v1376 = vadd.f32 %v1145, %v1252
          %v1377 = vadd.f32 %v1144, %v1254
          %v1378 = vadd.f32 %v1143, %v1256
          %v1379 = vadd.f32 %v1142, %v1258
          %v1380 = vadd.f32 %v1141, %v1260
          %v1381 = vadd.f32 %v1140, %v1262
          %v1382 = vadd.f32 %v1139, %v1264
          %v1383 = vadd.f32 %v1138, %v1266
          %v1384 = vadd.f32 %v1137, %v1268
          %v1385 = vadd.f32 %v1136, %v1270
          %v1386 = vadd.f32 %v1135, %v1272
          %v1387 = vadd.f32 %v1134, %v1274
          %v1388 = vadd.f32 %v1133, %v1276
          %v1389 = vadd.f32 %v1132, %v1278
          %v1390 = vadd.f32 %v1131, %v1280
          %v1391 = vadd.f32 %v1130, %v1282
          %v1392 = vadd.f32 %v1129, %v1284
          %v1393 = vadd.f32 %v1128, %v1286
          %v1394 = vadd.f32 %v1127, %v1288
          %v1395 = vadd.f32 %v1126, %v1290
          %v1396 = vadd.f32 %v1125, %v1292
          %v1397 = vadd.f32 %v1124, %v1294
          %v1398 = vadd.f32 %v1123, %v1296
          %v1399 = vadd.f32 %v1122, %v1298
          %v1400 = vadd.f32 %v1121, %v1300
          %v1401 = vadd.f32 %v1120, %v1302
          %v1402 = vadd.f32 %v1119, %v1304
          %v1403 = vadd.f32 %v1118, %v1306
          %v1404 = vadd.f32 %v1117, %v1308
          %v1405 = vrot.slane %v782, 1
          %v1406 = vrot.slane %v788, 1
          %v1407 = vrot.slane %v794, 1
          %v1408 = vrot.slane %v800, 1
          %v1409 = vrot.slane %v806, 1
          %v1410 = vrot.slane %v812, 1
          %v1411 = vrot.slane %v818, 1
          %v1412 = vrot.slane %v824, 1
          %v1413 = vrot.slane %v830, 1
          %v1414 = vrot.slane %v836, 1
          %v1415 = vrot.slane %v842, 1
          %v1416 = vrot.slane %v848, 1
          %v1417 = vrot.slane %v854, 1
          %v1418 = vrot.slane %v860, 1
          %v1419 = vrot.slane %v866, 1
          %v1420 = vrot.slane %v872, 1
          %v1421 = vrot.slane %v878, 1
          %v1422 = vrot.slane %v884, 1
          %v1423 = vrot.slane %v890, 1
          %v1424 = vrot.slane %v896, 1
          %v1425 = vrot.slane %v902, 1
          %v1426 = vrot.slane %v908, 1
          %v1427 = vrot.slane %v914, 1
          %v1428 = vrot.slane %v920, 1
          %v1429 = vrot.slane %v926, 1
          %v1430 = vrot.slane %v932, 1
          %v1431 = vrot.slane %v938, 1
          %v1432 = vrot.slane %v944, 1
          %v1433 = vrot.slane %v950, 1
          %v1434 = vrot.slane %v956, 1
          %v1435 = vrot.slane %v962, 1
          %v1436 = vrot.slane %v968, 1
          %v1437 = vrot.slane %v974, 1
          %v1438 = vrot.slane %v980, 1
          %v1439 = vrot.slane %v986, 1
          %v1440 = vrot.slane %v992, 1
          %v1441 = vrot.slane %v998, 1
          %v1442 = vrot.slane %v1004, 1
          %v1443 = vrot.slane %v1010, 1
          %v1444 = vrot.slane %v1016, 1
          %v1445 = vrot.slane %v1022, 1
          %v1446 = vrot.slane %v1028, 1
          %v1447 = vrot.slane %v1034, 1
          %v1448 = vrot.slane %v1040, 1
          %v1449 = vrot.slane %v1046, 1
          %v1450 = vrot.slane %v1052, 1
          %v1451 = vrot.slane %v1058, 1
          %v1452 = vrot.slane %v1064, 1
          %vm1453 = vcmp.lt.s32.totalorder %v1115, 7
          %v1454 = vsel %vm1453, %v1451, %v1452
          %v1455 = vsel %vm1453, %v1450, %v1451
          %v1456 = vsel %vm1453, %v1449, %v1450
          %v1457 = vsel %vm1453, %v1448, %v1449
          %v1458 = vsel %vm1453, %v1447, %v1448
          %v1459 = vsel %vm1453, %v1446, %v1447
          %v1460 = vsel %vm1453, %v1445, %v1446
          %v1461 = vsel %vm1453, %v1444, %v1445
          %v1462 = vsel %vm1453, %v1443, %v1444
          %v1463 = vsel %vm1453, %v1442, %v1443
          %v1464 = vsel %vm1453, %v1441, %v1442
          %v1465 = vsel %vm1453, %v1440, %v1441
          %v1466 = vsel %vm1453, %v1439, %v1440
          %v1467 = vsel %vm1453, %v1438, %v1439
          %v1468 = vsel %vm1453, %v1437, %v1438
          %v1469 = vsel %vm1453, %v1436, %v1437
          %v1470 = vsel %vm1453, %v1435, %v1436
          %v1471 = vsel %vm1453, %v1434, %v1435
          %v1472 = vsel %vm1453, %v1433, %v1434
          %v1473 = vsel %vm1453, %v1432, %v1433
          %v1474 = vsel %vm1453, %v1431, %v1432
          %v1475 = vsel %vm1453, %v1430, %v1431
          %v1476 = vsel %vm1453, %v1429, %v1430
          %v1477 = vsel %vm1453, %v1428, %v1429
          %v1478 = vsel %vm1453, %v1427, %v1428
          %v1479 = vsel %vm1453, %v1426, %v1427
          %v1480 = vsel %vm1453, %v1425, %v1426
          %v1481 = vsel %vm1453, %v1424, %v1425
          %v1482 = vsel %vm1453, %v1423, %v1424
          %v1483 = vsel %vm1453, %v1422, %v1423
          %v1484 = vsel %vm1453, %v1421, %v1422
          %v1485 = vsel %vm1453, %v1420, %v1421
          %v1486 = vsel %vm1453, %v1419, %v1420
          %v1487 = vsel %vm1453, %v1418, %v1419
          %v1488 = vsel %vm1453, %v1417, %v1418
          %v1489 = vsel %vm1453, %v1416, %v1417
          %v1490 = vsel %vm1453, %v1415, %v1416
          %v1491 = vsel %vm1453, %v1414, %v1415
          %v1492 = vsel %vm1453, %v1413, %v1414
          %v1493 = vsel %vm1453, %v1412, %v1413
          %v1494 = vsel %vm1453, %v1411, %v1412
          %v1495 = vsel %vm1453, %v1410, %v1411
          %v1496 = vsel %vm1453, %v1409, %v1410
          %v1497 = vsel %vm1453, %v1408, %v1409
          %v1498 = vsel %vm1453, %v1407, %v1408
          %v1499 = vsel %vm1453, %v1406, %v1407
          %v1500 = vsel %vm1453, %v1405, %v1406
          %v1501 = vsel %vm1453, %v1452, %v1405
          %v1502 = vadd.f32 %v1357, %v1500
          %v1503 = vadd.f32 %v1358, %v1499
          %v1504 = vadd.f32 %v1359, %v1498
          %v1505 = vadd.f32 %v1360, %v1497
          %v1506 = vadd.f32 %v1361, %v1496
          %v1507 = vadd.f32 %v1362, %v1495
          %v1508 = vadd.f32 %v1363, %v1494
          %v1509 = vadd.f32 %v1364, %v1493
          %v1510 = vadd.f32 %v1365, %v1492
          %v1511 = vadd.f32 %v1366, %v1491
          %v1512 = vadd.f32 %v1367, %v1490
          %v1513 = vadd.f32 %v1368, %v1489
          %v1514 = vadd.f32 %v1369, %v1488
          %v1515 = vadd.f32 %v1370, %v1487
          %v1516 = vadd.f32 %v1371, %v1486
          %v1517 = vadd.f32 %v1372, %v1485
          %v1518 = vadd.f32 %v1373, %v1484
          %v1519 = vadd.f32 %v1374, %v1483
          %v1520 = vadd.f32 %v1375, %v1482
          %v1521 = vadd.f32 %v1376, %v1481
          %v1522 = vadd.f32 %v1377, %v1480
          %v1523 = vadd.f32 %v1378, %v1479
          %v1524 = vadd.f32 %v1379, %v1478
          %v1525 = vadd.f32 %v1380, %v1477
          %v1526 = vadd.f32 %v1381, %v1476
          %v1527 = vadd.f32 %v1382, %v1475
          %v1528 = vadd.f32 %v1383, %v1474
          %v1529 = vadd.f32 %v1384, %v1473
          %v1530 = vadd.f32 %v1385, %v1472
          %v1531 = vadd.f32 %v1386, %v1471
          %v1532 = vadd.f32 %v1387, %v1470
          %v1533 = vadd.f32 %v1388, %v1469
          %v1534 = vadd.f32 %v1389, %v1468
          %v1535 = vadd.f32 %v1390, %v1467
          %v1536 = vadd.f32 %v1391, %v1466
          %v1537 = vadd.f32 %v1392, %v1465
          %v1538 = vadd.f32 %v1393, %v1464
          %v1539 = vadd.f32 %v1394, %v1463
          %v1540 = vadd.f32 %v1395, %v1462
          %v1541 = vadd.f32 %v1396, %v1461
          %v1542 = vadd.f32 %v1397, %v1460
          %v1543 = vadd.f32 %v1398, %v1459
          %v1544 = vadd.f32 %v1399, %v1458
          %v1545 = vadd.f32 %v1400, %v1457
          %v1546 = vadd.f32 %v1401, %v1456
          %v1547 = vadd.f32 %v1402, %v1455
          %v1548 = vadd.f32 %v1403, %v1454
          %v1549 = vadd.f32 %v1404, %v1501
          %s1550 = scalar_lea.vmem %s2, %s268
          %v1551 = vld [vmem:[%s1550] sm:$0x1]
          %v1553 = vlaneseq
          %v1554 = vshrl.u32 %v1553, 7
          %v1555 = vsub.s32 0, %v1554
          %v1556 = vrot.slane %v1551, %v1555
          %v1558 = vadd.f32 %v1502, %v1556
          %v1559 = vadd.f32 %v1503, %v1556
          %v1560 = vadd.f32 %v1504, %v1556
          %v1561 = vadd.f32 %v1505, %v1556
          %v1562 = vadd.f32 %v1506, %v1556
          %v1563 = vadd.f32 %v1507, %v1556
          %v1564 = vadd.f32 %v1508, %v1556
          %v1565 = vadd.f32 %v1509, %v1556
          %v1566 = vadd.f32 %v1510, %v1556
          %v1567 = vadd.f32 %v1511, %v1556
          %v1568 = vadd.f32 %v1512, %v1556
          %v1569 = vadd.f32 %v1513, %v1556
          %v1570 = vadd.f32 %v1514, %v1556
          %v1571 = vadd.f32 %v1515, %v1556
          %v1572 = vadd.f32 %v1516, %v1556
          %v1573 = vadd.f32 %v1517, %v1556
          %v1574 = vadd.f32 %v1518, %v1556
          %v1575 = vadd.f32 %v1519, %v1556
          %v1576 = vadd.f32 %v1520, %v1556
          %v1577 = vadd.f32 %v1521, %v1556
          %v1578 = vadd.f32 %v1522, %v1556
          %v1579 = vadd.f32 %v1523, %v1556
          %v1580 = vadd.f32 %v1524, %v1556
          %v1581 = vadd.f32 %v1525, %v1556
          %v1582 = vadd.f32 %v1526, %v1556
          %v1583 = vadd.f32 %v1527, %v1556
          %v1584 = vadd.f32 %v1528, %v1556
          %v1585 = vadd.f32 %v1529, %v1556
          %v1586 = vadd.f32 %v1530, %v1556
          %v1587 = vadd.f32 %v1531, %v1556
          %v1588 = vadd.f32 %v1532, %v1556
          %v1589 = vadd.f32 %v1533, %v1556
          %v1590 = vadd.f32 %v1534, %v1556
          %v1591 = vadd.f32 %v1535, %v1556
          %v1592 = vadd.f32 %v1536, %v1556
          %v1593 = vadd.f32 %v1537, %v1556
          %v1594 = vadd.f32 %v1538, %v1556
          %v1595 = vadd.f32 %v1539, %v1556
          %v1596 = vadd.f32 %v1540, %v1556
          %v1597 = vadd.f32 %v1541, %v1556
          %v1598 = vadd.f32 %v1542, %v1556
          %v1599 = vadd.f32 %v1543, %v1556
          %v1600 = vadd.f32 %v1544, %v1556
          %v1601 = vadd.f32 %v1545, %v1556
          %v1602 = vadd.f32 %v1546, %v1556
          %v1603 = vadd.f32 %v1547, %v1556
          %v1604 = vadd.f32 %v1548, %v1556
          %v1605 = vadd.f32 %v1549, %v1556
          %v1606 = vmax.f32 %v1558, 0.0
          %v1607 = vmax.f32 %v1559, 0.0
          %v1608 = vmax.f32 %v1560, 0.0
          %v1609 = vmax.f32 %v1561, 0.0
          %v1610 = vmax.f32 %v1562, 0.0
          %v1611 = vmax.f32 %v1563, 0.0
          %v1612 = vmax.f32 %v1564, 0.0
          %v1613 = vmax.f32 %v1565, 0.0
          %v1614 = vmax.f32 %v1566, 0.0
          %v1615 = vmax.f32 %v1567, 0.0
          %v1616 = vmax.f32 %v1568, 0.0
          %v1617 = vmax.f32 %v1569, 0.0
          %v1618 = vmax.f32 %v1570, 0.0
          %v1619 = vmax.f32 %v1571, 0.0
          %v1620 = vmax.f32 %v1572, 0.0
          %v1621 = vmax.f32 %v1573, 0.0
          %v1622 = vmax.f32 %v1574, 0.0
          %v1623 = vmax.f32 %v1575, 0.0
          %v1624 = vmax.f32 %v1576, 0.0
          %v1625 = vmax.f32 %v1577, 0.0
          %v1626 = vmax.f32 %v1578, 0.0
          %v1627 = vmax.f32 %v1579, 0.0
          %v1628 = vmax.f32 %v1580, 0.0
          %v1629 = vmax.f32 %v1581, 0.0
          %v1630 = vmax.f32 %v1582, 0.0
          %v1631 = vmax.f32 %v1583, 0.0
          %v1632 = vmax.f32 %v1584, 0.0
          %v1633 = vmax.f32 %v1585, 0.0
          %v1634 = vmax.f32 %v1586, 0.0
          %v1635 = vmax.f32 %v1587, 0.0
          %v1636 = vmax.f32 %v1588, 0.0
          %v1637 = vmax.f32 %v1589, 0.0
          %v1638 = vmax.f32 %v1590, 0.0
          %v1639 = vmax.f32 %v1591, 0.0
          %v1640 = vmax.f32 %v1592, 0.0
          %v1641 = vmax.f32 %v1593, 0.0
          %v1642 = vmax.f32 %v1594, 0.0
          %v1643 = vmax.f32 %v1595, 0.0
          %v1644 = vmax.f32 %v1596, 0.0
          %v1645 = vmax.f32 %v1597, 0.0
          %v1646 = vmax.f32 %v1598, 0.0
          %v1647 = vmax.f32 %v1599, 0.0
          %v1648 = vmax.f32 %v1600, 0.0
          %v1649 = vmax.f32 %v1601, 0.0
          %v1650 = vmax.f32 %v1602, 0.0
          %v1651 = vmax.f32 %v1603, 0.0
          %v1652 = vmax.f32 %v1604, 0.0
          %v1653 = vmax.f32 %v1605, 0.0
          %v1654 = vadd.s32 %v1115, 8
          %v1655 = vadd.s32 %v1115, 16
          %vm1656 = vcmp.lt.s32.totalorder %v1115, 16
          %vm1657 = vcmp.lt.s32.totalorder %v1654, 16
          %vm1658 = vcmp.lt.s32.totalorder %v1655, 16
          %v1659 = vsel %vm1656, %v1606, 0.0
          %v1660 = vsel %vm1657, %v1607, 0.0
          %v1661 = vsel %vm1658, %v1608, 0.0
          %v1662 = vsel %vm1656, %v1609, 0.0
          %v1663 = vsel %vm1657, %v1610, 0.0
          %v1664 = vsel %vm1658, %v1611, 0.0
          %v1665 = vsel %vm1656, %v1612, 0.0
          %v1666 = vsel %vm1657, %v1613, 0.0
          %v1667 = vsel %vm1658, %v1614, 0.0
          %v1668 = vsel %vm1656, %v1615, 0.0
          %v1669 = vsel %vm1657, %v1616, 0.0
          %v1670 = vsel %vm1658, %v1617, 0.0
          %v1671 = vsel %vm1656, %v1618, 0.0
          %v1672 = vsel %vm1657, %v1619, 0.0
          %v1673 = vsel %vm1658, %v1620, 0.0
          %v1674 = vsel %vm1656, %v1621, 0.0
          %v1675 = vsel %vm1657, %v1622, 0.0
          %v1676 = vsel %vm1658, %v1623, 0.0
          %v1677 = vsel %vm1656, %v1624, 0.0
          %v1678 = vsel %vm1657, %v1625, 0.0
          %v1679 = vsel %vm1658, %v1626, 0.0
          %v1680 = vsel %vm1656, %v1627, 0.0
          %v1681 = vsel %vm1657, %v1628, 0.0
          %v1682 = vsel %vm1658, %v1629, 0.0
          %v1683 = vsel %vm1656, %v1630, 0.0
          %v1684 = vsel %vm1657, %v1631, 0.0
          %v1685 = vsel %vm1658, %v1632, 0.0
          %v1686 = vsel %vm1656, %v1633, 0.0
          %v1687 = vsel %vm1657, %v1634, 0.0
          %v1688 = vsel %vm1658, %v1635, 0.0
          %v1689 = vsel %vm1656, %v1636, 0.0
          %v1690 = vsel %vm1657, %v1637, 0.0
          %v1691 = vsel %vm1658, %v1638, 0.0
          %v1692 = vsel %vm1656, %v1639, 0.0
          %v1693 = vsel %vm1657, %v1640, 0.0
          %v1694 = vsel %vm1658, %v1641, 0.0
          %v1695 = vsel %vm1656, %v1642, 0.0
          %v1696 = vsel %vm1657, %v1643, 0.0
          %v1697 = vsel %vm1658, %v1644, 0.0
          %v1698 = vsel %vm1656, %v1645, 0.0
          %v1699 = vsel %vm1657, %v1646, 0.0
          %v1700 = vsel %vm1658, %v1647, 0.0
          %v1701 = vsel %vm1656, %v1648, 0.0
          %v1702 = vsel %vm1657, %v1649, 0.0
          %v1703 = vsel %vm1658, %v1650, 0.0
          %v1704 = vsel %vm1656, %v1651, 0.0
          %v1705 = vsel %vm1657, %v1652, 0.0
          %v1706 = vsel %vm1658, %v1653, 0.0
          %1707 = vst.msk [vmem:[#allocation3 + $0x18] sm:$0xff] %vm169, %v1659
          %1708 = vst.msk [vmem:[#allocation3 + $0x20] sm:$0xff] %vm169, %v1660
          %1709 = vst.msk [vmem:[#allocation3 + $0x28] sm:$0xff] %vm169, %v1661
          %1710 = vst.msk [vmem:[#allocation3 + $0x30] sm:$0xff] %vm169, %v1662
          %1711 = vst.msk [vmem:[#allocation3 + $0x38] sm:$0xff] %vm169, %v1663
          %1712 = vst.msk [vmem:[#allocation3 + $0x40] sm:$0xff] %vm169, %v1664
          %1713 = vst.msk [vmem:[#allocation3 + $0x48] sm:$0xff] %vm169, %v1665
          %1714 = vst.msk [vmem:[#allocation3 + $0x50] sm:$0xff] %vm169, %v1666
          %1715 = vst.msk [vmem:[#allocation3 + $0x58] sm:$0xff] %vm169, %v1667
          %1716 = vst.msk [vmem:[#allocation3 + $0x60] sm:$0xff] %vm169, %v1668
          %1717 = vst.msk [vmem:[#allocation3 + $0x68] sm:$0xff] %vm169, %v1669
          %1718 = vst.msk [vmem:[#allocation3 + $0x70] sm:$0xff] %vm169, %v1670
          %1719 = vst.msk [vmem:[#allocation3 + $0x78] sm:$0xff] %vm169, %v1671
          %1720 = vst.msk [vmem:[#allocation3 + $0x80] sm:$0xff] %vm169, %v1672
          %1721 = vst.msk [vmem:[#allocation3 + $0x88] sm:$0xff] %vm169, %v1673
          %1722 = vst.msk [vmem:[#allocation3 + $0x90] sm:$0xff] %vm169, %v1674
          %1723 = vst.msk [vmem:[#allocation3 + $0x98] sm:$0xff] %vm169, %v1675
          %1724 = vst.msk [vmem:[#allocation3 + $0xa0] sm:$0xff] %vm169, %v1676
          %1725 = vst.msk [vmem:[#allocation3 + $0xa8] sm:$0xff] %vm169, %v1677
          %1726 = vst.msk [vmem:[#allocation3 + $0xb0] sm:$0xff] %vm169, %v1678
          %1727 = vst.msk [vmem:[#allocation3 + $0xb8] sm:$0xff] %vm169, %v1679
          %1728 = vst.msk [vmem:[#allocation3 + $0xc0] sm:$0xff] %vm169, %v1680
          %1729 = vst.msk [vmem:[#allocation3 + $0xc8] sm:$0xff] %vm169, %v1681
          %1730 = vst.msk [vmem:[#allocation3 + $0xd0] sm:$0xff] %vm169, %v1682
          %1731 = vst.msk [vmem:[#allocation3 + $0xd8] sm:$0xff] %vm169, %v1683
          %1732 = vst.msk [vmem:[#allocation3 + $0xe0] sm:$0xff] %vm169, %v1684
          %1733 = vst.msk [vmem:[#allocation3 + $0xe8] sm:$0xff] %vm169, %v1685
          %1734 = vst.msk [vmem:[#allocation3 + $0xf0] sm:$0xff] %vm169, %v1686
          %1735 = vst.msk [vmem:[#allocation3 + $0xf8] sm:$0xff] %vm169, %v1687
          %1736 = vst.msk [vmem:[#allocation3 + $0x100] sm:$0xff] %vm169, %v1688
          %1737 = vst.msk [vmem:[#allocation3 + $0x108] sm:$0xff] %vm169, %v1689
          %1738 = vst.msk [vmem:[#allocation3 + $0x110] sm:$0xff] %vm169, %v1690
          %1739 = vst.msk [vmem:[#allocation3 + $0x118] sm:$0xff] %vm169, %v1691
          %1740 = vst.msk [vmem:[#allocation3 + $0x120] sm:$0xff] %vm169, %v1692
          %1741 = vst.msk [vmem:[#allocation3 + $0x128] sm:$0xff] %vm169, %v1693
          %1742 = vst.msk [vmem:[#allocation3 + $0x130] sm:$0xff] %vm169, %v1694
          %1743 = vst.msk [vmem:[#allocation3 + $0x138] sm:$0xff] %vm169, %v1695
          %1744 = vst.msk [vmem:[#allocation3 + $0x140] sm:$0xff] %vm169, %v1696
          %1745 = vst.msk [vmem:[#allocation3 + $0x148] sm:$0xff] %vm169, %v1697
          %1746 = vst.msk [vmem:[#allocation3 + $0x150] sm:$0xff] %vm169, %v1698
          %1747 = vst.msk [vmem:[#allocation3 + $0x158] sm:$0xff] %vm169, %v1699
          %1748 = vst.msk [vmem:[#allocation3 + $0x160] sm:$0xff] %vm169, %v1700
          %1749 = vst.msk [vmem:[#allocation3 + $0x168] sm:$0xff] %vm169, %v1701
          %1750 = vst.msk [vmem:[#allocation3 + $0x170] sm:$0xff] %vm169, %v1702
          %1751 = vst.msk [vmem:[#allocation3 + $0x178] sm:$0xff] %vm169, %v1703
          %1752 = vst.msk [vmem:[#allocation3 + $0x180] sm:$0xff] %vm169, %v1704
          %1753 = vst.msk [vmem:[#allocation3 + $0x188] sm:$0xff] %vm169, %v1705
          %1754 = vst.msk [vmem:[#allocation3 + $0x190] sm:$0xff] %vm169, %v1706
          %s1755 = sadd.s32 %s268, 1
          %v1756 = vld [vmem:[#allocation3] sm:$0xff]
          %v1757 = vld [vmem:[#allocation3 + $0x8] sm:$0xff]
          %v1758 = vld [vmem:[#allocation3 + $0x10] sm:$0xff]
          %v1759 = vld [vmem:[#allocation3 + $0x18] sm:$0xff]
          %v1760 = vld [vmem:[#allocation3 + $0x20] sm:$0xff]
          %v1761 = vld [vmem:[#allocation3 + $0x28] sm:$0xff]
          %v1762 = vld [vmem:[#allocation3 + $0x30] sm:$0xff]
          %v1763 = vld [vmem:[#allocation3 + $0x38] sm:$0xff]
          %v1764 = vld [vmem:[#allocation3 + $0x40] sm:$0xff]
          %v1765 = vld [vmem:[#allocation3 + $0x48] sm:$0xff]
          %v1766 = vld [vmem:[#allocation3 + $0x50] sm:$0xff]
          %v1767 = vld [vmem:[#allocation3 + $0x58] sm:$0xff]
          %v1768 = vld [vmem:[#allocation3 + $0x60] sm:$0xff]
          %v1769 = vld [vmem:[#allocation3 + $0x68] sm:$0xff]
          %v1770 = vld [vmem:[#allocation3 + $0x70] sm:$0xff]
          %v1771 = vld [vmem:[#allocation3 + $0x78] sm:$0xff]
          %v1772 = vld [vmem:[#allocation3 + $0x80] sm:$0xff]
          %v1773 = vld [vmem:[#allocation3 + $0x88] sm:$0xff]
          %v1774 = vld [vmem:[#allocation3 + $0x90] sm:$0xff]
          %v1775 = vld [vmem:[#allocation3 + $0x98] sm:$0xff]
          %v1776 = vld [vmem:[#allocation3 + $0xa0] sm:$0xff]
          %v1777 = vld [vmem:[#allocation3 + $0xa8] sm:$0xff]
          %v1778 = vld [vmem:[#allocation3 + $0xb0] sm:$0xff]
          %v1779 = vld [vmem:[#allocation3 + $0xb8] sm:$0xff]
          %v1780 = vld [vmem:[#allocation3 + $0xc0] sm:$0xff]
          %v1781 = vld [vmem:[#allocation3 + $0xc8] sm:$0xff]
          %v1782 = vld [vmem:[#allocation3 + $0xd0] sm:$0xff]
          %v1783 = vld [vmem:[#allocation3 + $0xd8] sm:$0xff]
          %v1784 = vld [vmem:[#allocation3 + $0xe0] sm:$0xff]
          %v1785 = vld [vmem:[#allocation3 + $0xe8] sm:$0xff]
          %v1786 = vld [vmem:[#allocation3 + $0xf0] sm:$0xff]
          %v1787 = vld [vmem:[#allocation3 + $0xf8] sm:$0xff]
          %v1788 = vld [vmem:[#allocation3 + $0x100] sm:$0xff]
          %v1789 = vld [vmem:[#allocation3 + $0x108] sm:$0xff]
          %v1790 = vld [vmem:[#allocation3 + $0x110] sm:$0xff]
          %v1791 = vld [vmem:[#allocation3 + $0x118] sm:$0xff]
          %v1792 = vld [vmem:[#allocation3 + $0x120] sm:$0xff]
          %v1793 = vld [vmem:[#allocation3 + $0x128] sm:$0xff]
          %v1794 = vld [vmem:[#allocation3 + $0x130] sm:$0xff]
          %v1795 = vld [vmem:[#allocation3 + $0x138] sm:$0xff]
          %v1796 = vld [vmem:[#allocation3 + $0x140] sm:$0xff]
          %v1797 = vld [vmem:[#allocation3 + $0x148] sm:$0xff]
          %v1798 = vld [vmem:[#allocation3 + $0x150] sm:$0xff]
          %v1799 = vld [vmem:[#allocation3 + $0x158] sm:$0xff]
          %v1800 = vld [vmem:[#allocation3 + $0x160] sm:$0xff]
          %v1801 = vld [vmem:[#allocation3 + $0x168] sm:$0xff]
          %v1802 = vld [vmem:[#allocation3 + $0x170] sm:$0xff]
          %v1803 = vld [vmem:[#allocation3 + $0x178] sm:$0xff]
          %v1804 = vld [vmem:[#allocation3 + $0x180] sm:$0xff]
          %v1805 = vld [vmem:[#allocation3 + $0x188] sm:$0xff]
          %v1806 = vld [vmem:[#allocation3 + $0x190] sm:$0xff]
          %v1807 = vld [vmem:[#allocation3 + $0x198] sm:$0xff]
          %v1808 = vld [vmem:[#allocation3 + $0x1a0] sm:$0xff]
          %v1809 = vld [vmem:[#allocation3 + $0x1a8] sm:$0xff]
          %1858 = vrot.lane.b32.xlu0 %v1759, 64
          %v1859 = vpop.permute.xlu0 %1858
          %1860 = vrot.lane.b32.xlu0 %v1760, 64
          %v1861 = vpop.permute.xlu0 %1860
          %1862 = vrot.lane.b32.xlu0 %v1761, 64
          %v1863 = vpop.permute.xlu0 %1862
          %1864 = vrot.lane.b32.xlu0 %v1762, 64
          %v1865 = vpop.permute.xlu0 %1864
          %1866 = vrot.lane.b32.xlu0 %v1763, 64
          %v1867 = vpop.permute.xlu0 %1866
          %1868 = vrot.lane.b32.xlu0 %v1764, 64
          %v1869 = vpop.permute.xlu0 %1868
          %1870 = vrot.lane.b32.xlu0 %v1765, 64
          %v1871 = vpop.permute.xlu0 %1870
          %1872 = vrot.lane.b32.xlu0 %v1766, 64
          %v1873 = vpop.permute.xlu0 %1872
          %1874 = vrot.lane.b32.xlu0 %v1767, 64
          %v1875 = vpop.permute.xlu0 %1874
          %1876 = vrot.lane.b32.xlu0 %v1768, 64
          %v1877 = vpop.permute.xlu0 %1876
          %1878 = vrot.lane.b32.xlu0 %v1769, 64
          %v1879 = vpop.permute.xlu0 %1878
          %1880 = vrot.lane.b32.xlu0 %v1770, 64
          %v1881 = vpop.permute.xlu0 %1880
          %1882 = vrot.lane.b32.xlu0 %v1771, 64
          %v1883 = vpop.permute.xlu0 %1882
          %1884 = vrot.lane.b32.xlu0 %v1772, 64
          %v1885 = vpop.permute.xlu0 %1884
          %1886 = vrot.lane.b32.xlu0 %v1773, 64
          %v1887 = vpop.permute.xlu0 %1886
          %1888 = vrot.lane.b32.xlu0 %v1774, 64
          %v1889 = vpop.permute.xlu0 %1888
          %1890 = vrot.lane.b32.xlu0 %v1775, 64
          %v1891 = vpop.permute.xlu0 %1890
          %1892 = vrot.lane.b32.xlu0 %v1776, 64
          %v1893 = vpop.permute.xlu0 %1892
          %1894 = vrot.lane.b32.xlu0 %v1777, 64
          %v1895 = vpop.permute.xlu0 %1894
          %1896 = vrot.lane.b32.xlu0 %v1778, 64
          %v1897 = vpop.permute.xlu0 %1896
          %1898 = vrot.lane.b32.xlu0 %v1779, 64
          %v1899 = vpop.permute.xlu0 %1898
          %1900 = vrot.lane.b32.xlu0 %v1780, 64
          %v1901 = vpop.permute.xlu0 %1900
          %1902 = vrot.lane.b32.xlu0 %v1781, 64
          %v1903 = vpop.permute.xlu0 %1902
          %1904 = vrot.lane.b32.xlu0 %v1782, 64
          %v1905 = vpop.permute.xlu0 %1904
          %1906 = vrot.lane.b32.xlu0 %v1783, 64
          %v1907 = vpop.permute.xlu0 %1906
          %1908 = vrot.lane.b32.xlu0 %v1784, 64
          %v1909 = vpop.permute.xlu0 %1908
          %1910 = vrot.lane.b32.xlu0 %v1785, 64
          %v1911 = vpop.permute.xlu0 %1910
          %1912 = vrot.lane.b32.xlu0 %v1786, 64
          %v1913 = vpop.permute.xlu0 %1912
          %1914 = vrot.lane.b32.xlu0 %v1787, 64
          %v1915 = vpop.permute.xlu0 %1914
          %1916 = vrot.lane.b32.xlu0 %v1788, 64
          %v1917 = vpop.permute.xlu0 %1916
          %1918 = vrot.lane.b32.xlu0 %v1789, 64
          %v1919 = vpop.permute.xlu0 %1918
          %1920 = vrot.lane.b32.xlu0 %v1790, 64
          %v1921 = vpop.permute.xlu0 %1920
          %1922 = vrot.lane.b32.xlu0 %v1791, 64
          %v1923 = vpop.permute.xlu0 %1922
          %1924 = vrot.lane.b32.xlu0 %v1792, 64
          %v1925 = vpop.permute.xlu0 %1924
          %1926 = vrot.lane.b32.xlu0 %v1793, 64
          %v1927 = vpop.permute.xlu0 %1926
          %1928 = vrot.lane.b32.xlu0 %v1794, 64
          %v1929 = vpop.permute.xlu0 %1928
          %1930 = vrot.lane.b32.xlu0 %v1795, 64
          %v1931 = vpop.permute.xlu0 %1930
          %1932 = vrot.lane.b32.xlu0 %v1796, 64
          %v1933 = vpop.permute.xlu0 %1932
          %1934 = vrot.lane.b32.xlu0 %v1797, 64
          %v1935 = vpop.permute.xlu0 %1934
          %1936 = vrot.lane.b32.xlu0 %v1798, 64
          %v1937 = vpop.permute.xlu0 %1936
          %1938 = vrot.lane.b32.xlu0 %v1799, 64
          %v1939 = vpop.permute.xlu0 %1938
          %1940 = vrot.lane.b32.xlu0 %v1800, 64
          %v1941 = vpop.permute.xlu0 %1940
          %1942 = vrot.lane.b32.xlu0 %v1801, 64
          %v1943 = vpop.permute.xlu0 %1942
          %1944 = vrot.lane.b32.xlu0 %v1802, 64
          %v1945 = vpop.permute.xlu0 %1944
          %1946 = vrot.lane.b32.xlu0 %v1803, 64
          %v1947 = vpop.permute.xlu0 %1946
          %1948 = vrot.lane.b32.xlu0 %v1804, 64
          %v1949 = vpop.permute.xlu0 %1948
          %1950 = vrot.lane.b32.xlu0 %v1805, 64
          %v1951 = vpop.permute.xlu0 %1950
          %1952 = vrot.lane.b32.xlu0 %v1806, 64
          %v1953 = vpop.permute.xlu0 %1952
          %v2002 = vsel %vm169, %v1756, %v1859
          %v2003 = vsel %vm169, %v1757, %v1861
          %v2004 = vsel %vm169, %v1758, %v1863
          %v2005 = vsel %vm169, %v1759, %v1865
          %v2006 = vsel %vm169, %v1760, %v1867
          %v2007 = vsel %vm169, %v1761, %v1869
          %v2008 = vsel %vm169, %v1762, %v1871
          %v2009 = vsel %vm169, %v1763, %v1873
          %v2010 = vsel %vm169, %v1764, %v1875
          %v2011 = vsel %vm169, %v1765, %v1877
          %v2012 = vsel %vm169, %v1766, %v1879
          %v2013 = vsel %vm169, %v1767, %v1881
          %v2014 = vsel %vm169, %v1768, %v1883
          %v2015 = vsel %vm169, %v1769, %v1885
          %v2016 = vsel %vm169, %v1770, %v1887
          %v2017 = vsel %vm169, %v1771, %v1889
          %v2018 = vsel %vm169, %v1772, %v1891
          %v2019 = vsel %vm169, %v1773, %v1893
          %v2020 = vsel %vm169, %v1774, %v1895
          %v2021 = vsel %vm169, %v1775, %v1897
          %v2022 = vsel %vm169, %v1776, %v1899
          %v2023 = vsel %vm169, %v1777, %v1901
          %v2024 = vsel %vm169, %v1778, %v1903
          %v2025 = vsel %vm169, %v1779, %v1905
          %v2026 = vsel %vm169, %v1780, %v1907
          %v2027 = vsel %vm169, %v1781, %v1909
          %v2028 = vsel %vm169, %v1782, %v1911
          %v2029 = vsel %vm169, %v1783, %v1913
          %v2030 = vsel %vm169, %v1784, %v1915
          %v2031 = vsel %vm169, %v1785, %v1917
          %v2032 = vsel %vm169, %v1786, %v1919
          %v2033 = vsel %vm169, %v1787, %v1921
          %v2034 = vsel %vm169, %v1788, %v1923
          %v2035 = vsel %vm169, %v1789, %v1925
          %v2036 = vsel %vm169, %v1790, %v1927
          %v2037 = vsel %vm169, %v1791, %v1929
          %v2038 = vsel %vm169, %v1792, %v1931
          %v2039 = vsel %vm169, %v1793, %v1933
          %v2040 = vsel %vm169, %v1794, %v1935
          %v2041 = vsel %vm169, %v1795, %v1937
          %v2042 = vsel %vm169, %v1796, %v1939
          %v2043 = vsel %vm169, %v1797, %v1941
          %v2044 = vsel %vm169, %v1798, %v1943
          %v2045 = vsel %vm169, %v1799, %v1945
          %v2046 = vsel %vm169, %v1800, %v1947
          %v2047 = vsel %vm169, %v1801, %v1949
          %v2048 = vsel %vm169, %v1802, %v1951
          %v2049 = vsel %vm169, %v1803, %v1953
          %s2050 = smul.u32 %s1755, 48
          %s2051 = smul.addr %s2050, 8
          %s2052 = scalar_lea.vmem %s1, %s2051
          %v2053 = vld [vmem:[%s2052] sm:$0xff]
          %v2054 = vld [vmem:[%s2052 + $0x8] sm:$0xff]
          %v2055 = vld [vmem:[%s2052 + $0x10] sm:$0xff]
          %v2056 = vld [vmem:[%s2052 + $0x18] sm:$0xff]
          %v2057 = vld [vmem:[%s2052 + $0x20] sm:$0xff]
          %v2058 = vld [vmem:[%s2052 + $0x28] sm:$0xff]
          %v2059 = vld [vmem:[%s2052 + $0x30] sm:$0xff]
          %v2060 = vld [vmem:[%s2052 + $0x38] sm:$0xff]
          %v2061 = vld [vmem:[%s2052 + $0x40] sm:$0xff]
          %v2062 = vld [vmem:[%s2052 + $0x48] sm:$0xff]
          %v2063 = vld [vmem:[%s2052 + $0x50] sm:$0xff]
          %v2064 = vld [vmem:[%s2052 + $0x58] sm:$0xff]
          %v2065 = vld [vmem:[%s2052 + $0x60] sm:$0xff]
          %v2066 = vld [vmem:[%s2052 + $0x68] sm:$0xff]
          %v2067 = vld [vmem:[%s2052 + $0x70] sm:$0xff]
          %v2068 = vld [vmem:[%s2052 + $0x78] sm:$0xff]
          %v2069 = vld [vmem:[%s2052 + $0x80] sm:$0xff]
          %v2070 = vld [vmem:[%s2052 + $0x88] sm:$0xff]
          %v2071 = vld [vmem:[%s2052 + $0x90] sm:$0xff]
          %v2072 = vld [vmem:[%s2052 + $0x98] sm:$0xff]
          %v2073 = vld [vmem:[%s2052 + $0xa0] sm:$0xff]
          %v2074 = vld [vmem:[%s2052 + $0xa8] sm:$0xff]
          %v2075 = vld [vmem:[%s2052 + $0xb0] sm:$0xff]
          %v2076 = vld [vmem:[%s2052 + $0xb8] sm:$0xff]
          %v2077 = vld [vmem:[%s2052 + $0xc0] sm:$0xff]
          %v2078 = vld [vmem:[%s2052 + $0xc8] sm:$0xff]
          %v2079 = vld [vmem:[%s2052 + $0xd0] sm:$0xff]
          %v2080 = vld [vmem:[%s2052 + $0xd8] sm:$0xff]
          %v2081 = vld [vmem:[%s2052 + $0xe0] sm:$0xff]
          %v2082 = vld [vmem:[%s2052 + $0xe8] sm:$0xff]
          %v2083 = vld [vmem:[%s2052 + $0xf0] sm:$0xff]
          %v2084 = vld [vmem:[%s2052 + $0xf8] sm:$0xff]
          %v2085 = vld [vmem:[%s2052 + $0x100] sm:$0xff]
          %v2086 = vld [vmem:[%s2052 + $0x108] sm:$0xff]
          %v2087 = vld [vmem:[%s2052 + $0x110] sm:$0xff]
          %v2088 = vld [vmem:[%s2052 + $0x118] sm:$0xff]
          %v2089 = vld [vmem:[%s2052 + $0x120] sm:$0xff]
          %v2090 = vld [vmem:[%s2052 + $0x128] sm:$0xff]
          %v2091 = vld [vmem:[%s2052 + $0x130] sm:$0xff]
          %v2092 = vld [vmem:[%s2052 + $0x138] sm:$0xff]
          %v2093 = vld [vmem:[%s2052 + $0x140] sm:$0xff]
          %v2094 = vld [vmem:[%s2052 + $0x148] sm:$0xff]
          %v2095 = vld [vmem:[%s2052 + $0x150] sm:$0xff]
          %v2096 = vld [vmem:[%s2052 + $0x158] sm:$0xff]
          %v2097 = vld [vmem:[%s2052 + $0x160] sm:$0xff]
          %v2098 = vld [vmem:[%s2052 + $0x168] sm:$0xff]
          %v2099 = vld [vmem:[%s2052 + $0x170] sm:$0xff]
          %v2100 = vld [vmem:[%s2052 + $0x178] sm:$0xff]
          %v2101 = vsel %vm169, %v1762, 0
          %v2103 = vsel %vm169, %v1763, 0
          %v2105 = vsel %vm169, %v1764, 0
          %v2107 = vsel %vm169, %v1765, 0
          %v2109 = vsel %vm169, %v1766, 0
          %v2111 = vsel %vm169, %v1767, 0
          %v2113 = vsel %vm169, %v1768, 0
          %v2115 = vsel %vm169, %v1769, 0
          %v2117 = vsel %vm169, %v1770, 0
          %v2119 = vsel %vm169, %v1771, 0
          %v2121 = vsel %vm169, %v1772, 0
          %v2123 = vsel %vm169, %v1773, 0
          %v2125 = vsel %vm169, %v1774, 0
          %v2127 = vsel %vm169, %v1775, 0
          %v2129 = vsel %vm169, %v1776, 0
          %v2131 = vsel %vm169, %v1777, 0
          %v2133 = vsel %vm169, %v1778, 0
          %v2135 = vsel %vm169, %v1779, 0
          %v2137 = vsel %vm169, %v1780, 0
          %v2139 = vsel %vm169, %v1781, 0
          %v2141 = vsel %vm169, %v1782, 0
          %v2143 = vsel %vm169, %v1783, 0
          %v2145 = vsel %vm169, %v1784, 0
          %v2147 = vsel %vm169, %v1785, 0
          %v2149 = vsel %vm169, %v1786, 0
          %v2151 = vsel %vm169, %v1787, 0
          %v2153 = vsel %vm169, %v1788, 0
          %v2155 = vsel %vm169, %v1789, 0
          %v2157 = vsel %vm169, %v1790, 0
          %v2159 = vsel %vm169, %v1791, 0
          %v2161 = vsel %vm169, %v1792, 0
          %v2163 = vsel %vm169, %v1793, 0
          %v2165 = vsel %vm169, %v1794, 0
          %v2167 = vsel %vm169, %v1795, 0
          %v2169 = vsel %vm169, %v1796, 0
          %v2171 = vsel %vm169, %v1797, 0
          %v2173 = vsel %vm169, %v1798, 0
          %v2175 = vsel %vm169, %v1799, 0
          %v2177 = vsel %vm169, %v1800, 0
          %v2179 = vsel %vm169, %v1801, 0
          %v2181 = vsel %vm169, %v1802, 0
          %v2183 = vsel %vm169, %v1803, 0
          %v2185 = vsel %vm169, %v1804, 0
          %v2187 = vsel %vm169, %v1805, 0
          %v2189 = vsel %vm169, %v1806, 0
          %v2192 = vsel %vm169, %v1807, 0
          %v2195 = vsel %vm169, %v1808, 0
          %v2198 = vsel %vm169, %v1809, 0
          %2200 = vmatprep.subr.mxu0 %v2054
          %2201 = vmatpush1.msra.mxu0 %v2053
          %2202 = vmatprep.subr.mxu0 %v2056
          %2203 = vmatpush1.msra.mxu0 %v2055
          %2204 = vmatprep.subr.mxu0 %v2058
          %2205 = vmatpush1.msra.mxu0 %v2057
          %2206 = vmatprep.subr.mxu0 %v2060
          %2207 = vmatpush1.msra.mxu0 %v2059
          %2208 = vmatprep.subr.mxu0 %v2062
          %2209 = vmatpush1.msra.mxu0 %v2061
          %2210 = vmatprep.subr.mxu0 %v2064
          %2211 = vmatpush1.msra.mxu0 %v2063
          %2212 = vmatprep.subr.mxu0 %v2066
          %2213 = vmatpush1.msra.mxu0 %v2065
          %2214 = vmatprep.subr.mxu0 %v2068
          %2215 = vmatpush1.msra.mxu0 %v2067
          %2216 = vmatprep.subr.mxu0 %v2070
          %2217 = vmatpush1.msra.mxu0 %v2069
          %2218 = vmatprep.subr.mxu0 %v2072
          %2219 = vmatpush1.msra.mxu0 %v2071
          %2220 = vmatprep.subr.mxu0 %v2074
          %2221 = vmatpush1.msra.mxu0 %v2073
          %2222 = vmatprep.subr.mxu0 %v2076
          %2223 = vmatpush1.msra.mxu0 %v2075
          %2224 = vmatprep.subr.mxu0 %v2078
          %2225 = vmatpush1.msra.mxu0 %v2077
          %2226 = vmatprep.subr.mxu0 %v2080
          %2227 = vmatpush1.msra.mxu0 %v2079
          %2228 = vmatprep.subr.mxu0 %v2082
          %2229 = vmatpush1.msra.mxu0 %v2081
          %2230 = vmatprep.subr.mxu0 %v2084
          %2231 = vmatpush1.msra.mxu0 %v2083
          %2232 = vmatprep.subr.mxu0 %v2086
          %2233 = vmatpush1.msra.mxu0 %v2085
          %2234 = vmatprep.subr.mxu0 %v2088
          %2235 = vmatpush1.msra.mxu0 %v2087
          %2236 = vmatprep.subr.mxu0 %v2090
          %2237 = vmatpush1.msra.mxu0 %v2089
          %2238 = vmatprep.subr.mxu0 %v2092
          %2239 = vmatpush1.msra.mxu0 %v2091
          %2240 = vmatprep.subr.mxu0 %v2094
          %2241 = vmatpush1.msra.mxu0 %v2093
          %2242 = vmatprep.subr.mxu0 %v2096
          %2243 = vmatpush1.msra.mxu0 %v2095
          %2244 = vmatprep.subr.mxu0 %v2098
          %2245 = vmatpush1.msra.mxu0 %v2097
          %2246 = vmatprep.subr.mxu0 %v2100
          %2247 = vmatpush1.msra.mxu0 %v2099
          %2248 = vmatprep.subr.mxu0 0.0
          %2249 = vmatpush1.msra.mxu0 0.0
          %2250 = vmatprep.subr.mxu0 0.0
          %2251 = vmatpush1.msra.mxu0 0.0
          %2252 = vmatprep.subr.mxu0 0.0
          %2253 = vmatpush1.msra.mxu0 0.0
          %2254 = vmatprep.subr.mxu0 0.0
          %2255 = vmatpush1.msra.mxu0 0.0
          %2256 = vmatprep.subr.mxu0 0.0
          %2257 = vmatpush1.msra.mxu0 0.0
          %2258 = vmatprep.subr.mxu0 0.0
          %2259 = vmatpush1.msra.mxu0 0.0
          %2260 = vmatprep.subr.mxu0 0.0
          %2261 = vmatpush1.msra.mxu0 0.0
          %2262 = vmatprep.subr.mxu0 0.0
          %2263 = vmatpush1.msra.mxu0 0.0
          %2264 = vmatprep.mubr.f32.mxu0 %v2101
          %2265 = vmatmul.mubr.f32.gmra.mrb[0].mxu0 %v2002
          %v2266 = vpop.f32.mrb[0].mxu0
          %v2267 = vadd.f32 0.0, %v2266
          %v2268 = vpop.f32.mrb[0].mxu0
          %v2269 = vadd.f32 0.0, %v2268
          %2270 = vmatprep.mubr.f32.mxu0 %v2103
          %2271 = vmatmul.mubr.f32.gmra.mrb[0].mxu0 %v2003
          %v2272 = vpop.f32.mrb[0].mxu0
          %v2273 = vadd.f32 0.0, %v2272
          %v2274 = vpop.f32.mrb[0].mxu0
          %v2275 = vadd.f32 0.0, %v2274
          %2276 = vmatprep.mubr.f32.mxu0 %v2105
          %2277 = vmatmul.mubr.f32.gmra.mrb[0].mxu0 %v2004
          %v2278 = vpop.f32.mrb[0].mxu0
          %v2279 = vadd.f32 0.0, %v2278
          %v2280 = vpop.f32.mrb[0].mxu0
          %v2281 = vadd.f32 0.0, %v2280
          %2282 = vmatprep.mubr.f32.mxu0 %v2107
          %2283 = vmatmul.mubr.f32.gmra.mrb[0].mxu0 %v2005
          %v2284 = vpop.f32.mrb[0].mxu0
          %v2285 = vadd.f32 0.0, %v2284
          %v2286 = vpop.f32.mrb[0].mxu0
          %v2287 = vadd.f32 0.0, %v2286
          %2288 = vmatprep.mubr.f32.mxu0 %v2109
          %2289 = vmatmul.mubr.f32.gmra.mrb[0].mxu0 %v2006
          %v2290 = vpop.f32.mrb[0].mxu0
          %v2291 = vadd.f32 0.0, %v2290
          %v2292 = vpop.f32.mrb[0].mxu0
          %v2293 = vadd.f32 0.0, %v2292
          %2294 = vmatprep.mubr.f32.mxu0 %v2111
          %2295 = vmatmul.mubr.f32.gmra.mrb[0].mxu0 %v2007
          %v2296 = vpop.f32.mrb[0].mxu0
          %v2297 = vadd.f32 0.0, %v2296
          %v2298 = vpop.f32.mrb[0].mxu0
          %v2299 = vadd.f32 0.0, %v2298
          %2300 = vmatprep.mubr.f32.mxu0 %v2113
          %2301 = vmatmul.mubr.f32.gmra.mrb[0].mxu0 %v2008
          %v2302 = vpop.f32.mrb[0].mxu0
          %v2303 = vadd.f32 0.0, %v2302
          %v2304 = vpop.f32.mrb[0].mxu0
          %v2305 = vadd.f32 0.0, %v2304
          %2306 = vmatprep.mubr.f32.mxu0 %v2115
          %2307 = vmatmul.mubr.f32.gmra.mrb[0].mxu0 %v2009
          %v2308 = vpop.f32.mrb[0].mxu0
          %v2309 = vadd.f32 0.0, %v2308
          %v2310 = vpop.f32.mrb[0].mxu0
          %v2311 = vadd.f32 0.0, %v2310
          %2312 = vmatprep.mubr.f32.mxu0 %v2117
          %2313 = vmatmul.mubr.f32.gmra.mrb[0].mxu0 %v2010
          %v2314 = vpop.f32.mrb[0].mxu0
          %v2315 = vadd.f32 0.0, %v2314
          %v2316 = vpop.f32.mrb[0].mxu0
          %v2317 = vadd.f32 0.0, %v2316
          %2318 = vmatprep.mubr.f32.mxu0 %v2119
          %2319 = vmatmul.mubr.f32.gmra.mrb[0].mxu0 %v2011
          %v2320 = vpop.f32.mrb[0].mxu0
          %v2321 = vadd.f32 0.0, %v2320
          %v2322 = vpop.f32.mrb[0].mxu0
          %v2323 = vadd.f32 0.0, %v2322
          %2324 = vmatprep.mubr.f32.mxu0 %v2121
          %2325 = vmatmul.mubr.f32.gmra.mrb[0].mxu0 %v2012
          %v2326 = vpop.f32.mrb[0].mxu0
          %v2327 = vadd.f32 0.0, %v2326
          %v2328 = vpop.f32.mrb[0].mxu0
          %v2329 = vadd.f32 0.0, %v2328
          %2330 = vmatprep.mubr.f32.mxu0 %v2123
          %2331 = vmatmul.mubr.f32.gmra.mrb[0].mxu0 %v2013
          %v2332 = vpop.f32.mrb[0].mxu0
          %v2333 = vadd.f32 0.0, %v2332
          %v2334 = vpop.f32.mrb[0].mxu0
          %v2335 = vadd.f32 0.0, %v2334
          %2336 = vmatprep.mubr.f32.mxu0 %v2125
          %2337 = vmatmul.mubr.f32.gmra.mrb[0].mxu0 %v2014
          %v2338 = vpop.f32.mrb[0].mxu0
          %v2339 = vadd.f32 0.0, %v2338
          %v2340 = vpop.f32.mrb[0].mxu0
          %v2341 = vadd.f32 0.0, %v2340
          %2342 = vmatprep.mubr.f32.mxu0 %v2127
          %2343 = vmatmul.mubr.f32.gmra.mrb[0].mxu0 %v2015
          %v2344 = vpop.f32.mrb[0].mxu0
          %v2345 = vadd.f32 0.0, %v2344
          %v2346 = vpop.f32.mrb[0].mxu0
          %v2347 = vadd.f32 0.0, %v2346
          %2348 = vmatprep.mubr.f32.mxu0 %v2129
          %2349 = vmatmul.mubr.f32.gmra.mrb[0].mxu0 %v2016
          %v2350 = vpop.f32.mrb[0].mxu0
          %v2351 = vadd.f32 0.0, %v2350
          %v2352 = vpop.f32.mrb[0].mxu0
          %v2353 = vadd.f32 0.0, %v2352
          %2354 = vmatprep.mubr.f32.mxu0 %v2131
          %2355 = vmatmul.mubr.f32.gmra.mrb[0].mxu0 %v2017
          %v2356 = vpop.f32.mrb[0].mxu0
          %v2357 = vadd.f32 0.0, %v2356
          %v2358 = vpop.f32.mrb[0].mxu0
          %v2359 = vadd.f32 0.0, %v2358
          %2360 = vmatprep.mubr.f32.mxu0 %v2133
          %2361 = vmatmul.mubr.f32.gmra.mrb[0].mxu0 %v2018
          %v2362 = vpop.f32.mrb[0].mxu0
          %v2363 = vadd.f32 0.0, %v2362
          %v2364 = vpop.f32.mrb[0].mxu0
          %v2365 = vadd.f32 0.0, %v2364
          %2366 = vmatprep.mubr.f32.mxu0 %v2135
          %2367 = vmatmul.mubr.f32.gmra.mrb[0].mxu0 %v2019
          %v2368 = vpop.f32.mrb[0].mxu0
          %v2369 = vadd.f32 0.0, %v2368
          %v2370 = vpop.f32.mrb[0].mxu0
          %v2371 = vadd.f32 0.0, %v2370
          %2372 = vmatprep.mubr.f32.mxu0 %v2137
          %2373 = vmatmul.mubr.f32.gmra.mrb[0].mxu0 %v2020
          %v2374 = vpop.f32.mrb[0].mxu0
          %v2375 = vadd.f32 0.0, %v2374
          %v2376 = vpop.f32.mrb[0].mxu0
          %v2377 = vadd.f32 0.0, %v2376
          %2378 = vmatprep.mubr.f32.mxu0 %v2139
          %2379 = vmatmul.mubr.f32.gmra.mrb[0].mxu0 %v2021
          %v2380 = vpop.f32.mrb[0].mxu0
          %v2381 = vadd.f32 0.0, %v2380
          %v2382 = vpop.f32.mrb[0].mxu0
          %v2383 = vadd.f32 0.0, %v2382
          %2384 = vmatprep.mubr.f32.mxu0 %v2141
          %2385 = vmatmul.mubr.f32.gmra.mrb[0].mxu0 %v2022
          %v2386 = vpop.f32.mrb[0].mxu0
          %v2387 = vadd.f32 0.0, %v2386
          %v2388 = vpop.f32.mrb[0].mxu0
          %v2389 = vadd.f32 0.0, %v2388
          %2390 = vmatprep.mubr.f32.mxu0 %v2143
          %2391 = vmatmul.mubr.f32.gmra.mrb[0].mxu0 %v2023
          %v2392 = vpop.f32.mrb[0].mxu0
          %v2393 = vadd.f32 0.0, %v2392
          %v2394 = vpop.f32.mrb[0].mxu0
          %v2395 = vadd.f32 0.0, %v2394
          %2396 = vmatprep.mubr.f32.mxu0 %v2145
          %2397 = vmatmul.mubr.f32.gmra.mrb[0].mxu0 %v2024
          %v2398 = vpop.f32.mrb[0].mxu0
          %v2399 = vadd.f32 0.0, %v2398
          %v2400 = vpop.f32.mrb[0].mxu0
          %v2401 = vadd.f32 0.0, %v2400
          %2402 = vmatprep.mubr.f32.mxu0 %v2147
          %2403 = vmatmul.mubr.f32.gmra.mrb[0].mxu0 %v2025
          %v2404 = vpop.f32.mrb[0].mxu0
          %v2405 = vadd.f32 0.0, %v2404
          %v2406 = vpop.f32.mrb[0].mxu0
          %v2407 = vadd.f32 0.0, %v2406
          %2408 = vmatprep.mubr.f32.mxu0 %v2149
          %2409 = vmatmul.mubr.f32.gmra.mrb[0].mxu0 %v2026
          %v2410 = vpop.f32.mrb[0].mxu0
          %v2411 = vadd.f32 0.0, %v2410
          %v2412 = vpop.f32.mrb[0].mxu0
          %v2413 = vadd.f32 0.0, %v2412
          %2414 = vmatprep.mubr.f32.mxu0 %v2151
          %2415 = vmatmul.mubr.f32.gmra.mrb[0].mxu0 %v2027
          %v2416 = vpop.f32.mrb[0].mxu0
          %v2417 = vadd.f32 0.0, %v2416
          %v2418 = vpop.f32.mrb[0].mxu0
          %v2419 = vadd.f32 0.0, %v2418
          %2420 = vmatprep.mubr.f32.mxu0 %v2153
          %2421 = vmatmul.mubr.f32.gmra.mrb[0].mxu0 %v2028
          %v2422 = vpop.f32.mrb[0].mxu0
          %v2423 = vadd.f32 0.0, %v2422
          %v2424 = vpop.f32.mrb[0].mxu0
          %v2425 = vadd.f32 0.0, %v2424
          %2426 = vmatprep.mubr.f32.mxu0 %v2155
          %2427 = vmatmul.mubr.f32.gmra.mrb[0].mxu0 %v2029
          %v2428 = vpop.f32.mrb[0].mxu0
          %v2429 = vadd.f32 0.0, %v2428
          %v2430 = vpop.f32.mrb[0].mxu0
          %v2431 = vadd.f32 0.0, %v2430
          %2432 = vmatprep.mubr.f32.mxu0 %v2157
          %2433 = vmatmul.mubr.f32.gmra.mrb[0].mxu0 %v2030
          %v2434 = vpop.f32.mrb[0].mxu0
          %v2435 = vadd.f32 0.0, %v2434
          %v2436 = vpop.f32.mrb[0].mxu0
          %v2437 = vadd.f32 0.0, %v2436
          %2438 = vmatprep.mubr.f32.mxu0 %v2159
          %2439 = vmatmul.mubr.f32.gmra.mrb[0].mxu0 %v2031
          %v2440 = vpop.f32.mrb[0].mxu0
          %v2441 = vadd.f32 0.0, %v2440
          %v2442 = vpop.f32.mrb[0].mxu0
          %v2443 = vadd.f32 0.0, %v2442
          %2444 = vmatprep.mubr.f32.mxu0 %v2161
          %2445 = vmatmul.mubr.f32.gmra.mrb[0].mxu0 %v2032
          %v2446 = vpop.f32.mrb[0].mxu0
          %v2447 = vadd.f32 0.0, %v2446
          %v2448 = vpop.f32.mrb[0].mxu0
          %v2449 = vadd.f32 0.0, %v2448
          %2450 = vmatprep.mubr.f32.mxu0 %v2163
          %2451 = vmatmul.mubr.f32.gmra.mrb[0].mxu0 %v2033
          %v2452 = vpop.f32.mrb[0].mxu0
          %v2453 = vadd.f32 0.0, %v2452
          %v2454 = vpop.f32.mrb[0].mxu0
          %v2455 = vadd.f32 0.0, %v2454
          %2456 = vmatprep.mubr.f32.mxu0 %v2165
          %2457 = vmatmul.mubr.f32.gmra.mrb[0].mxu0 %v2034
          %v2458 = vpop.f32.mrb[0].mxu0
          %v2459 = vadd.f32 0.0, %v2458
          %v2460 = vpop.f32.mrb[0].mxu0
          %v2461 = vadd.f32 0.0, %v2460
          %2462 = vmatprep.mubr.f32.mxu0 %v2167
          %2463 = vmatmul.mubr.f32.gmra.mrb[0].mxu0 %v2035
          %v2464 = vpop.f32.mrb[0].mxu0
          %v2465 = vadd.f32 0.0, %v2464
          %v2466 = vpop.f32.mrb[0].mxu0
          %v2467 = vadd.f32 0.0, %v2466
          %2468 = vmatprep.mubr.f32.mxu0 %v2169
          %2469 = vmatmul.mubr.f32.gmra.mrb[0].mxu0 %v2036
          %v2470 = vpop.f32.mrb[0].mxu0
          %v2471 = vadd.f32 0.0, %v2470
          %v2472 = vpop.f32.mrb[0].mxu0
          %v2473 = vadd.f32 0.0, %v2472
          %2474 = vmatprep.mubr.f32.mxu0 %v2171
          %2475 = vmatmul.mubr.f32.gmra.mrb[0].mxu0 %v2037
          %v2476 = vpop.f32.mrb[0].mxu0
          %v2477 = vadd.f32 0.0, %v2476
          %v2478 = vpop.f32.mrb[0].mxu0
          %v2479 = vadd.f32 0.0, %v2478
          %2480 = vmatprep.mubr.f32.mxu0 %v2173
          %2481 = vmatmul.mubr.f32.gmra.mrb[0].mxu0 %v2038
          %v2482 = vpop.f32.mrb[0].mxu0
          %v2483 = vadd.f32 0.0, %v2482
          %v2484 = vpop.f32.mrb[0].mxu0
          %v2485 = vadd.f32 0.0, %v2484
          %2486 = vmatprep.mubr.f32.mxu0 %v2175
          %2487 = vmatmul.mubr.f32.gmra.mrb[0].mxu0 %v2039
          %v2488 = vpop.f32.mrb[0].mxu0
          %v2489 = vadd.f32 0.0, %v2488
          %v2490 = vpop.f32.mrb[0].mxu0
          %v2491 = vadd.f32 0.0, %v2490
          %2492 = vmatprep.mubr.f32.mxu0 %v2177
          %2493 = vmatmul.mubr.f32.gmra.mrb[0].mxu0 %v2040
          %v2494 = vpop.f32.mrb[0].mxu0
          %v2495 = vadd.f32 0.0, %v2494
          %v2496 = vpop.f32.mrb[0].mxu0
          %v2497 = vadd.f32 0.0, %v2496
          %2498 = vmatprep.mubr.f32.mxu0 %v2179
          %2499 = vmatmul.mubr.f32.gmra.mrb[0].mxu0 %v2041
          %v2500 = vpop.f32.mrb[0].mxu0
          %v2501 = vadd.f32 0.0, %v2500
          %v2502 = vpop.f32.mrb[0].mxu0
          %v2503 = vadd.f32 0.0, %v2502
          %2504 = vmatprep.mubr.f32.mxu0 %v2181
          %2505 = vmatmul.mubr.f32.gmra.mrb[0].mxu0 %v2042
          %v2506 = vpop.f32.mrb[0].mxu0
          %v2507 = vadd.f32 0.0, %v2506
          %v2508 = vpop.f32.mrb[0].mxu0
          %v2509 = vadd.f32 0.0, %v2508
          %2510 = vmatprep.mubr.f32.mxu0 %v2183
          %2511 = vmatmul.mubr.f32.gmra.mrb[0].mxu0 %v2043
          %v2512 = vpop.f32.mrb[0].mxu0
          %v2513 = vadd.f32 0.0, %v2512
          %v2514 = vpop.f32.mrb[0].mxu0
          %v2515 = vadd.f32 0.0, %v2514
          %2516 = vmatprep.mubr.f32.mxu0 %v2185
          %2517 = vmatmul.mubr.f32.gmra.mrb[0].mxu0 %v2044
          %v2518 = vpop.f32.mrb[0].mxu0
          %v2519 = vadd.f32 0.0, %v2518
          %v2520 = vpop.f32.mrb[0].mxu0
          %v2521 = vadd.f32 0.0, %v2520
          %2522 = vmatprep.mubr.f32.mxu0 %v2187
          %2523 = vmatmul.mubr.f32.gmra.mrb[0].mxu0 %v2045
          %v2524 = vpop.f32.mrb[0].mxu0
          %v2525 = vadd.f32 0.0, %v2524
          %v2526 = vpop.f32.mrb[0].mxu0
          %v2527 = vadd.f32 0.0, %v2526
          %2528 = vmatprep.mubr.f32.mxu0 %v2189
          %2529 = vmatmul.mubr.f32.gmra.mrb[0].mxu0 %v2046
          %v2530 = vpop.f32.mrb[0].mxu0
          %v2531 = vadd.f32 0.0, %v2530
          %v2532 = vpop.f32.mrb[0].mxu0
          %v2533 = vadd.f32 0.0, %v2532
          %2534 = vmatprep.mubr.f32.mxu0 %v2192
          %2535 = vmatmul.mubr.f32.gmra.mrb[0].mxu0 %v2047
          %v2536 = vpop.f32.mrb[0].mxu0
          %v2537 = vadd.f32 0.0, %v2536
          %v2538 = vpop.f32.mrb[0].mxu0
          %v2539 = vadd.f32 0.0, %v2538
          %2540 = vmatprep.mubr.f32.mxu0 %v2195
          %2541 = vmatmul.mubr.f32.gmra.mrb[0].mxu0 %v2048
          %v2542 = vpop.f32.mrb[0].mxu0
          %v2543 = vadd.f32 0.0, %v2542
          %v2544 = vpop.f32.mrb[0].mxu0
          %v2545 = vadd.f32 0.0, %v2544
          %2546 = vmatprep.mubr.f32.mxu0 %v2198
          %2547 = vmatmul.mubr.f32.gmra.mrb[0].mxu0 %v2049
          %v2548 = vpop.f32.mrb[0].mxu0
          %v2549 = vadd.f32 0.0, %v2548
          %v2550 = vpop.f32.mrb[0].mxu0
          %v2551 = vadd.f32 0.0, %v2550
          %2552 = vdwg.mxu0
          %v2553 = vrot.slane %v2267, 7
          %v2554 = vrot.slane %v2273, 7
          %v2555 = vrot.slane %v2279, 7
          %v2556 = vrot.slane %v2285, 7
          %v2557 = vrot.slane %v2291, 7
          %v2558 = vrot.slane %v2297, 7
          %v2559 = vrot.slane %v2303, 7
          %v2560 = vrot.slane %v2309, 7
          %v2561 = vrot.slane %v2315, 7
          %v2562 = vrot.slane %v2321, 7
          %v2563 = vrot.slane %v2327, 7
          %v2564 = vrot.slane %v2333, 7
          %v2565 = vrot.slane %v2339, 7
          %v2566 = vrot.slane %v2345, 7
          %v2567 = vrot.slane %v2351, 7
          %v2568 = vrot.slane %v2357, 7
          %v2569 = vrot.slane %v2363, 7
          %v2570 = vrot.slane %v2369, 7
          %v2571 = vrot.slane %v2375, 7
          %v2572 = vrot.slane %v2381, 7
          %v2573 = vrot.slane %v2387, 7
          %v2574 = vrot.slane %v2393, 7
          %v2575 = vrot.slane %v2399, 7
          %v2576 = vrot.slane %v2405, 7
          %v2577 = vrot.slane %v2411, 7
          %v2578 = vrot.slane %v2417, 7
          %v2579 = vrot.slane %v2423, 7
          %v2580 = vrot.slane %v2429, 7
          %v2581 = vrot.slane %v2435, 7
          %v2582 = vrot.slane %v2441, 7
          %v2583 = vrot.slane %v2447, 7
          %v2584 = vrot.slane %v2453, 7
          %v2585 = vrot.slane %v2459, 7
          %v2586 = vrot.slane %v2465, 7
          %v2587 = vrot.slane %v2471, 7
          %v2588 = vrot.slane %v2477, 7
          %v2589 = vrot.slane %v2483, 7
          %v2590 = vrot.slane %v2489, 7
          %v2591 = vrot.slane %v2495, 7
          %v2592 = vrot.slane %v2501, 7
          %v2593 = vrot.slane %v2507, 7
          %v2594 = vrot.slane %v2513, 7
          %v2595 = vrot.slane %v2519, 7
          %v2596 = vrot.slane %v2525, 7
          %v2597 = vrot.slane %v2531, 7
          %v2598 = vrot.slane %v2537, 7
          %v2599 = vrot.slane %v2543, 7
          %v2600 = vrot.slane %v2549, 7
          %v2601 = vsel %vm1116, %v2599, %v2600
          %v2602 = vsel %vm1116, %v2598, %v2599
          %v2603 = vsel %vm1116, %v2597, %v2598
          %v2604 = vsel %vm1116, %v2596, %v2597
          %v2605 = vsel %vm1116, %v2595, %v2596
          %v2606 = vsel %vm1116, %v2594, %v2595
          %v2607 = vsel %vm1116, %v2593, %v2594
          %v2608 = vsel %vm1116, %v2592, %v2593
          %v2609 = vsel %vm1116, %v2591, %v2592
          %v2610 = vsel %vm1116, %v2590, %v2591
          %v2611 = vsel %vm1116, %v2589, %v2590
          %v2612 = vsel %vm1116, %v2588, %v2589
          %v2613 = vsel %vm1116, %v2587, %v2588
          %v2614 = vsel %vm1116, %v2586, %v2587
          %v2615 = vsel %vm1116, %v2585, %v2586
          %v2616 = vsel %vm1116, %v2584, %v2585
          %v2617 = vsel %vm1116, %v2583, %v2584
          %v2618 = vsel %vm1116, %v2582, %v2583
          %v2619 = vsel %vm1116, %v2581, %v2582
          %v2620 = vsel %vm1116, %v2580, %v2581
          %v2621 = vsel %vm1116, %v2579, %v2580
          %v2622 = vsel %vm1116, %v2578, %v2579
          %v2623 = vsel %vm1116, %v2577, %v2578
          %v2624 = vsel %vm1116, %v2576, %v2577
          %v2625 = vsel %vm1116, %v2575, %v2576
          %v2626 = vsel %vm1116, %v2574, %v2575
          %v2627 = vsel %vm1116, %v2573, %v2574
          %v2628 = vsel %vm1116, %v2572, %v2573
          %v2629 = vsel %vm1116, %v2571, %v2572
          %v2630 = vsel %vm1116, %v2570, %v2571
          %v2631 = vsel %vm1116, %v2569, %v2570
          %v2632 = vsel %vm1116, %v2568, %v2569
          %v2633 = vsel %vm1116, %v2567, %v2568
          %v2634 = vsel %vm1116, %v2566, %v2567
          %v2635 = vsel %vm1116, %v2565, %v2566
          %v2636 = vsel %vm1116, %v2564, %v2565
          %v2637 = vsel %vm1116, %v2563, %v2564
          %v2638 = vsel %vm1116, %v2562, %v2563
          %v2639 = vsel %vm1116, %v2561, %v2562
          %v2640 = vsel %vm1116, %v2560, %v2561
          %v2641 = vsel %vm1116, %v2559, %v2560
          %v2642 = vsel %vm1116, %v2558, %v2559
          %v2643 = vsel %vm1116, %v2557, %v2558
          %v2644 = vsel %vm1116, %v2556, %v2557
          %v2645 = vsel %vm1116, %v2555, %v2556
          %v2646 = vsel %vm1116, %v2554, %v2555
          %v2647 = vsel %vm1116, %v2553, %v2554
          %v2648 = vsel %vm1116, %v2600, %v2553
          %2697 = vrot.lane.b32.xlu0 %v2267, 64
          %v2698 = vpop.permute.xlu0 %2697
          %2699 = vrot.lane.b32.xlu0 %v2273, 64
          %v2700 = vpop.permute.xlu0 %2699
          %2701 = vrot.lane.b32.xlu0 %v2279, 64
          %v2702 = vpop.permute.xlu0 %2701
          %2703 = vrot.lane.b32.xlu0 %v2285, 64
          %v2704 = vpop.permute.xlu0 %2703
          %2705 = vrot.lane.b32.xlu0 %v2291, 64
          %v2706 = vpop.permute.xlu0 %2705
          %2707 = vrot.lane.b32.xlu0 %v2297, 64
          %v2708 = vpop.permute.xlu0 %2707
          %2709 = vrot.lane.b32.xlu0 %v2303, 64
          %v2710 = vpop.permute.xlu0 %2709
          %2711 = vrot.lane.b32.xlu0 %v2309, 64
          %v2712 = vpop.permute.xlu0 %2711
          %2713 = vrot.lane.b32.xlu0 %v2315, 64
          %v2714 = vpop.permute.xlu0 %2713
          %2715 = vrot.lane.b32.xlu0 %v2321, 64
          %v2716 = vpop.permute.xlu0 %2715
          %2717 = vrot.lane.b32.xlu0 %v2327, 64
          %v2718 = vpop.permute.xlu0 %2717
          %2719 = vrot.lane.b32.xlu0 %v2333, 64
          %v2720 = vpop.permute.xlu0 %2719
          %2721 = vrot.lane.b32.xlu0 %v2339, 64
          %v2722 = vpop.permute.xlu0 %2721
          %2723 = vrot.lane.b32.xlu0 %v2345, 64
          %v2724 = vpop.permute.xlu0 %2723
          %2725 = vrot.lane.b32.xlu0 %v2351, 64
          %v2726 = vpop.permute.xlu0 %2725
          %2727 = vrot.lane.b32.xlu0 %v2357, 64
          %v2728 = vpop.permute.xlu0 %2727
          %2729 = vrot.lane.b32.xlu0 %v2363, 64
          %v2730 = vpop.permute.xlu0 %2729
          %2731 = vrot.lane.b32.xlu0 %v2369, 64
          %v2732 = vpop.permute.xlu0 %2731
          %2733 = vrot.lane.b32.xlu0 %v2375, 64
          %v2734 = vpop.permute.xlu0 %2733
          %2735 = vrot.lane.b32.xlu0 %v2381, 64
          %v2736 = vpop.permute.xlu0 %2735
          %2737 = vrot.lane.b32.xlu0 %v2387, 64
          %v2738 = vpop.permute.xlu0 %2737
          %2739 = vrot.lane.b32.xlu0 %v2393, 64
          %v2740 = vpop.permute.xlu0 %2739
          %2741 = vrot.lane.b32.xlu0 %v2399, 64
          %v2742 = vpop.permute.xlu0 %2741
          %2743 = vrot.lane.b32.xlu0 %v2405, 64
          %v2744 = vpop.permute.xlu0 %2743
          %2745 = vrot.lane.b32.xlu0 %v2411, 64
          %v2746 = vpop.permute.xlu0 %2745
          %2747 = vrot.lane.b32.xlu0 %v2417, 64
          %v2748 = vpop.permute.xlu0 %2747
          %2749 = vrot.lane.b32.xlu0 %v2423, 64
          %v2750 = vpop.permute.xlu0 %2749
          %2751 = vrot.lane.b32.xlu0 %v2429, 64
          %v2752 = vpop.permute.xlu0 %2751
          %2753 = vrot.lane.b32.xlu0 %v2435, 64
          %v2754 = vpop.permute.xlu0 %2753
          %2755 = vrot.lane.b32.xlu0 %v2441, 64
          %v2756 = vpop.permute.xlu0 %2755
          %2757 = vrot.lane.b32.xlu0 %v2447, 64
          %v2758 = vpop.permute.xlu0 %2757
          %2759 = vrot.lane.b32.xlu0 %v2453, 64
          %v2760 = vpop.permute.xlu0 %2759
          %2761 = vrot.lane.b32.xlu0 %v2459, 64
          %v2762 = vpop.permute.xlu0 %2761
          %2763 = vrot.lane.b32.xlu0 %v2465, 64
          %v2764 = vpop.permute.xlu0 %2763
          %2765 = vrot.lane.b32.xlu0 %v2471, 64
          %v2766 = vpop.permute.xlu0 %2765
          %2767 = vrot.lane.b32.xlu0 %v2477, 64
          %v2768 = vpop.permute.xlu0 %2767
          %2769 = vrot.lane.b32.xlu0 %v2483, 64
          %v2770 = vpop.permute.xlu0 %2769
          %2771 = vrot.lane.b32.xlu0 %v2489, 64
          %v2772 = vpop.permute.xlu0 %2771
          %2773 = vrot.lane.b32.xlu0 %v2495, 64
          %v2774 = vpop.permute.xlu0 %2773
          %2775 = vrot.lane.b32.xlu0 %v2501, 64
          %v2776 = vpop.permute.xlu0 %2775
          %2777 = vrot.lane.b32.xlu0 %v2507, 64
          %v2778 = vpop.permute.xlu0 %2777
          %2779 = vrot.lane.b32.xlu0 %v2513, 64
          %v2780 = vpop.permute.xlu0 %2779
          %2781 = vrot.lane.b32.xlu0 %v2519, 64
          %v2782 = vpop.permute.xlu0 %2781
          %2783 = vrot.lane.b32.xlu0 %v2525, 64
          %v2784 = vpop.permute.xlu0 %2783
          %2785 = vrot.lane.b32.xlu0 %v2531, 64
          %v2786 = vpop.permute.xlu0 %2785
          %2787 = vrot.lane.b32.xlu0 %v2537, 64
          %v2788 = vpop.permute.xlu0 %2787
          %2789 = vrot.lane.b32.xlu0 %v2543, 64
          %v2790 = vpop.permute.xlu0 %2789
          %2791 = vrot.lane.b32.xlu0 %v2549, 64
          %v2792 = vpop.permute.xlu0 %2791
          %v2841 = vadd.f32 %v2648, %v2698
          %v2842 = vadd.f32 %v2647, %v2700
          %v2843 = vadd.f32 %v2646, %v2702
          %v2844 = vadd.f32 %v2645, %v2704
          %v2845 = vadd.f32 %v2644, %v2706
          %v2846 = vadd.f32 %v2643, %v2708
          %v2847 = vadd.f32 %v2642, %v2710
          %v2848 = vadd.f32 %v2641, %v2712
          %v2849 = vadd.f32 %v2640, %v2714
          %v2850 = vadd.f32 %v2639, %v2716
          %v2851 = vadd.f32 %v2638, %v2718
          %v2852 = vadd.f32 %v2637, %v2720
          %v2853 = vadd.f32 %v2636, %v2722
          %v2854 = vadd.f32 %v2635, %v2724
          %v2855 = vadd.f32 %v2634, %v2726
          %v2856 = vadd.f32 %v2633, %v2728
          %v2857 = vadd.f32 %v2632, %v2730
          %v2858 = vadd.f32 %v2631, %v2732
          %v2859 = vadd.f32 %v2630, %v2734
          %v2860 = vadd.f32 %v2629, %v2736
          %v2861 = vadd.f32 %v2628, %v2738
          %v2862 = vadd.f32 %v2627, %v2740
          %v2863 = vadd.f32 %v2626, %v2742
          %v2864 = vadd.f32 %v2625, %v2744
          %v2865 = vadd.f32 %v2624, %v2746
          %v2866 = vadd.f32 %v2623, %v2748
          %v2867 = vadd.f32 %v2622, %v2750
          %v2868 = vadd.f32 %v2621, %v2752
          %v2869 = vadd.f32 %v2620, %v2754
          %v2870 = vadd.f32 %v2619, %v2756
          %v2871 = vadd.f32 %v2618, %v2758
          %v2872 = vadd.f32 %v2617, %v2760
          %v2873 = vadd.f32 %v2616, %v2762
          %v2874 = vadd.f32 %v2615, %v2764
          %v2875 = vadd.f32 %v2614, %v2766
          %v2876 = vadd.f32 %v2613, %v2768
          %v2877 = vadd.f32 %v2612, %v2770
          %v2878 = vadd.f32 %v2611, %v2772
          %v2879 = vadd.f32 %v2610, %v2774
          %v2880 = vadd.f32 %v2609, %v2776
          %v2881 = vadd.f32 %v2608, %v2778
          %v2882 = vadd.f32 %v2607, %v2780
          %v2883 = vadd.f32 %v2606, %v2782
          %v2884 = vadd.f32 %v2605, %v2784
          %v2885 = vadd.f32 %v2604, %v2786
          %v2886 = vadd.f32 %v2603, %v2788
          %v2887 = vadd.f32 %v2602, %v2790
          %v2888 = vadd.f32 %v2601, %v2792
          %v2889 = vrot.slane %v2269, 1
          %v2890 = vrot.slane %v2275, 1
          %v2891 = vrot.slane %v2281, 1
          %v2892 = vrot.slane %v2287, 1
          %v2893 = vrot.slane %v2293, 1
          %v2894 = vrot.slane %v2299, 1
          %v2895 = vrot.slane %v2305, 1
          %v2896 = vrot.slane %v2311, 1
          %v2897 = vrot.slane %v2317, 1
          %v2898 = vrot.slane %v2323, 1
          %v2899 = vrot.slane %v2329, 1
          %v2900 = vrot.slane %v2335, 1
          %v2901 = vrot.slane %v2341, 1
          %v2902 = vrot.slane %v2347, 1
          %v2903 = vrot.slane %v2353, 1
          %v2904 = vrot.slane %v2359, 1
          %v2905 = vrot.slane %v2365, 1
          %v2906 = vrot.slane %v2371, 1
          %v2907 = vrot.slane %v2377, 1
          %v2908 = vrot.slane %v2383, 1
          %v2909 = vrot.slane %v2389, 1
          %v2910 = vrot.slane %v2395, 1
          %v2911 = vrot.slane %v2401, 1
          %v2912 = vrot.slane %v2407, 1
          %v2913 = vrot.slane %v2413, 1
          %v2914 = vrot.slane %v2419, 1
          %v2915 = vrot.slane %v2425, 1
          %v2916 = vrot.slane %v2431, 1
          %v2917 = vrot.slane %v2437, 1
          %v2918 = vrot.slane %v2443, 1
          %v2919 = vrot.slane %v2449, 1
          %v2920 = vrot.slane %v2455, 1
          %v2921 = vrot.slane %v2461, 1
          %v2922 = vrot.slane %v2467, 1
          %v2923 = vrot.slane %v2473, 1
          %v2924 = vrot.slane %v2479, 1
          %v2925 = vrot.slane %v2485, 1
          %v2926 = vrot.slane %v2491, 1
          %v2927 = vrot.slane %v2497, 1
          %v2928 = vrot.slane %v2503, 1
          %v2929 = vrot.slane %v2509, 1
          %v2930 = vrot.slane %v2515, 1
          %v2931 = vrot.slane %v2521, 1
          %v2932 = vrot.slane %v2527, 1
          %v2933 = vrot.slane %v2533, 1
          %v2934 = vrot.slane %v2539, 1
          %v2935 = vrot.slane %v2545, 1
          %v2936 = vrot.slane %v2551, 1
          %v2937 = vsel %vm1453, %v2935, %v2936
          %v2938 = vsel %vm1453, %v2934, %v2935
          %v2939 = vsel %vm1453, %v2933, %v2934
          %v2940 = vsel %vm1453, %v2932, %v2933
          %v2941 = vsel %vm1453, %v2931, %v2932
          %v2942 = vsel %vm1453, %v2930, %v2931
          %v2943 = vsel %vm1453, %v2929, %v2930
          %v2944 = vsel %vm1453, %v2928, %v2929
          %v2945 = vsel %vm1453, %v2927, %v2928
          %v2946 = vsel %vm1453, %v2926, %v2927
          %v2947 = vsel %vm1453, %v2925, %v2926
          %v2948 = vsel %vm1453, %v2924, %v2925
          %v2949 = vsel %vm1453, %v2923, %v2924
          %v2950 = vsel %vm1453, %v2922, %v2923
          %v2951 = vsel %vm1453, %v2921, %v2922
          %v2952 = vsel %vm1453, %v2920, %v2921
          %v2953 = vsel %vm1453, %v2919, %v2920
          %v2954 = vsel %vm1453, %v2918, %v2919
          %v2955 = vsel %vm1453, %v2917, %v2918
          %v2956 = vsel %vm1453, %v2916, %v2917
          %v2957 = vsel %vm1453, %v2915, %v2916
          %v2958 = vsel %vm1453, %v2914, %v2915
          %v2959 = vsel %vm1453, %v2913, %v2914
          %v2960 = vsel %vm1453, %v2912, %v2913
          %v2961 = vsel %vm1453, %v2911, %v2912
          %v2962 = vsel %vm1453, %v2910, %v2911
          %v2963 = vsel %vm1453, %v2909, %v2910
          %v2964 = vsel %vm1453, %v2908, %v2909
          %v2965 = vsel %vm1453, %v2907, %v2908
          %v2966 = vsel %vm1453, %v2906, %v2907
          %v2967 = vsel %vm1453, %v2905, %v2906
          %v2968 = vsel %vm1453, %v2904, %v2905
          %v2969 = vsel %vm1453, %v2903, %v2904
          %v2970 = vsel %vm1453, %v2902, %v2903
          %v2971 = vsel %vm1453, %v2901, %v2902
          %v2972 = vsel %vm1453, %v2900, %v2901
          %v2973 = vsel %vm1453, %v2899, %v2900
          %v2974 = vsel %vm1453, %v2898, %v2899
          %v2975 = vsel %vm1453, %v2897, %v2898
          %v2976 = vsel %vm1453, %v2896, %v2897
          %v2977 = vsel %vm1453, %v2895, %v2896
          %v2978 = vsel %vm1453, %v2894, %v2895
          %v2979 = vsel %vm1453, %v2893, %v2894
          %v2980 = vsel %vm1453, %v2892, %v2893
          %v2981 = vsel %vm1453, %v2891, %v2892
          %v2982 = vsel %vm1453, %v2890, %v2891
          %v2983 = vsel %vm1453, %v2889, %v2890
          %v2984 = vsel %vm1453, %v2936, %v2889
          %v2985 = vadd.f32 %v2841, %v2983
          %v2986 = vadd.f32 %v2842, %v2982
          %v2987 = vadd.f32 %v2843, %v2981
          %v2988 = vadd.f32 %v2844, %v2980
          %v2989 = vadd.f32 %v2845, %v2979
          %v2990 = vadd.f32 %v2846, %v2978
          %v2991 = vadd.f32 %v2847, %v2977
          %v2992 = vadd.f32 %v2848, %v2976
          %v2993 = vadd.f32 %v2849, %v2975
          %v2994 = vadd.f32 %v2850, %v2974
          %v2995 = vadd.f32 %v2851, %v2973
          %v2996 = vadd.f32 %v2852, %v2972
          %v2997 = vadd.f32 %v2853, %v2971
          %v2998 = vadd.f32 %v2854, %v2970
          %v2999 = vadd.f32 %v2855, %v2969
          %v3000 = vadd.f32 %v2856, %v2968
          %v3001 = vadd.f32 %v2857, %v2967
          %v3002 = vadd.f32 %v2858, %v2966
          %v3003 = vadd.f32 %v2859, %v2965
          %v3004 = vadd.f32 %v2860, %v2964
          %v3005 = vadd.f32 %v2861, %v2963
          %v3006 = vadd.f32 %v2862, %v2962
          %v3007 = vadd.f32 %v2863, %v2961
          %v3008 = vadd.f32 %v2864, %v2960
          %v3009 = vadd.f32 %v2865, %v2959
          %v3010 = vadd.f32 %v2866, %v2958
          %v3011 = vadd.f32 %v2867, %v2957
          %v3012 = vadd.f32 %v2868, %v2956
          %v3013 = vadd.f32 %v2869, %v2955
          %v3014 = vadd.f32 %v2870, %v2954
          %v3015 = vadd.f32 %v2871, %v2953
          %v3016 = vadd.f32 %v2872, %v2952
          %v3017 = vadd.f32 %v2873, %v2951
          %v3018 = vadd.f32 %v2874, %v2950
          %v3019 = vadd.f32 %v2875, %v2949
          %v3020 = vadd.f32 %v2876, %v2948
          %v3021 = vadd.f32 %v2877, %v2947
          %v3022 = vadd.f32 %v2878, %v2946
          %v3023 = vadd.f32 %v2879, %v2945
          %v3024 = vadd.f32 %v2880, %v2944
          %v3025 = vadd.f32 %v2881, %v2943
          %v3026 = vadd.f32 %v2882, %v2942
          %v3027 = vadd.f32 %v2883, %v2941
          %v3028 = vadd.f32 %v2884, %v2940
          %v3029 = vadd.f32 %v2885, %v2939
          %v3030 = vadd.f32 %v2886, %v2938
          %v3031 = vadd.f32 %v2887, %v2937
          %v3032 = vadd.f32 %v2888, %v2984
          %s3033 = scalar_lea.vmem %s2, %s1755
          %v3034 = vld [vmem:[%s3033] sm:$0x1]
          %v3036 = vlaneseq
          %v3037 = vshrl.u32 %v3036, 7
          %v3038 = vsub.s32 0, %v3037
          %v3039 = vrot.slane %v3034, %v3038
          %v3041 = vadd.f32 %v2985, %v3039
          %v3042 = vadd.f32 %v2986, %v3039
          %v3043 = vadd.f32 %v2987, %v3039
          %v3044 = vadd.f32 %v2988, %v3039
          %v3045 = vadd.f32 %v2989, %v3039
          %v3046 = vadd.f32 %v2990, %v3039
          %v3047 = vadd.f32 %v2991, %v3039
          %v3048 = vadd.f32 %v2992, %v3039
          %v3049 = vadd.f32 %v2993, %v3039
          %v3050 = vadd.f32 %v2994, %v3039
          %v3051 = vadd.f32 %v2995, %v3039
          %v3052 = vadd.f32 %v2996, %v3039
          %v3053 = vadd.f32 %v2997, %v3039
          %v3054 = vadd.f32 %v2998, %v3039
          %v3055 = vadd.f32 %v2999, %v3039
          %v3056 = vadd.f32 %v3000, %v3039
          %v3057 = vadd.f32 %v3001, %v3039
          %v3058 = vadd.f32 %v3002, %v3039
          %v3059 = vadd.f32 %v3003, %v3039
          %v3060 = vadd.f32 %v3004, %v3039
          %v3061 = vadd.f32 %v3005, %v3039
          %v3062 = vadd.f32 %v3006, %v3039
          %v3063 = vadd.f32 %v3007, %v3039
          %v3064 = vadd.f32 %v3008, %v3039
          %v3065 = vadd.f32 %v3009, %v3039
          %v3066 = vadd.f32 %v3010, %v3039
          %v3067 = vadd.f32 %v3011, %v3039
          %v3068 = vadd.f32 %v3012, %v3039
          %v3069 = vadd.f32 %v3013, %v3039
          %v3070 = vadd.f32 %v3014, %v3039
          %v3071 = vadd.f32 %v3015, %v3039
          %v3072 = vadd.f32 %v3016, %v3039
          %v3073 = vadd.f32 %v3017, %v3039
          %v3074 = vadd.f32 %v3018, %v3039
          %v3075 = vadd.f32 %v3019, %v3039
          %v3076 = vadd.f32 %v3020, %v3039
          %v3077 = vadd.f32 %v3021, %v3039
          %v3078 = vadd.f32 %v3022, %v3039
          %v3079 = vadd.f32 %v3023, %v3039
          %v3080 = vadd.f32 %v3024, %v3039
          %v3081 = vadd.f32 %v3025, %v3039
          %v3082 = vadd.f32 %v3026, %v3039
          %v3083 = vadd.f32 %v3027, %v3039
          %v3084 = vadd.f32 %v3028, %v3039
          %v3085 = vadd.f32 %v3029, %v3039
          %v3086 = vadd.f32 %v3030, %v3039
          %v3087 = vadd.f32 %v3031, %v3039
          %v3088 = vadd.f32 %v3032, %v3039
          %v3089 = vsel %vm1656, %v3041, 0.0
          %v3090 = vsel %vm1657, %v3042, 0.0
          %v3091 = vsel %vm1658, %v3043, 0.0
          %v3092 = vsel %vm1656, %v3044, 0.0
          %v3093 = vsel %vm1657, %v3045, 0.0
          %v3094 = vsel %vm1658, %v3046, 0.0
          %v3095 = vsel %vm1656, %v3047, 0.0
          %v3096 = vsel %vm1657, %v3048, 0.0
          %v3097 = vsel %vm1658, %v3049, 0.0
          %v3098 = vsel %vm1656, %v3050, 0.0
          %v3099 = vsel %vm1657, %v3051, 0.0
          %v3100 = vsel %vm1658, %v3052, 0.0
          %v3101 = vsel %vm1656, %v3053, 0.0
          %v3102 = vsel %vm1657, %v3054, 0.0
          %v3103 = vsel %vm1658, %v3055, 0.0
          %v3104 = vsel %vm1656, %v3056, 0.0
          %v3105 = vsel %vm1657, %v3057, 0.0
          %v3106 = vsel %vm1658, %v3058, 0.0
          %v3107 = vsel %vm1656, %v3059, 0.0
          %v3108 = vsel %vm1657, %v3060, 0.0
          %v3109 = vsel %vm1658, %v3061, 0.0
          %v3110 = vsel %vm1656, %v3062, 0.0
          %v3111 = vsel %vm1657, %v3063, 0.0
          %v3112 = vsel %vm1658, %v3064, 0.0
          %v3113 = vsel %vm1656, %v3065, 0.0
          %v3114 = vsel %vm1657, %v3066, 0.0
          %v3115 = vsel %vm1658, %v3067, 0.0
          %v3116 = vsel %vm1656, %v3068, 0.0
          %v3117 = vsel %vm1657, %v3069, 0.0
          %v3118 = vsel %vm1658, %v3070, 0.0
          %v3119 = vsel %vm1656, %v3071, 0.0
          %v3120 = vsel %vm1657, %v3072, 0.0
          %v3121 = vsel %vm1658, %v3073, 0.0
          %v3122 = vsel %vm1656, %v3074, 0.0
          %v3123 = vsel %vm1657, %v3075, 0.0
          %v3124 = vsel %vm1658, %v3076, 0.0
          %v3125 = vsel %vm1656, %v3077, 0.0
          %v3126 = vsel %vm1657, %v3078, 0.0
          %v3127 = vsel %vm1658, %v3079, 0.0
          %v3128 = vsel %vm1656, %v3080, 0.0
          %v3129 = vsel %vm1657, %v3081, 0.0
          %v3130 = vsel %vm1658, %v3082, 0.0
          %v3131 = vsel %vm1656, %v3083, 0.0
          %v3132 = vsel %vm1657, %v3084, 0.0
          %v3133 = vsel %vm1658, %v3085, 0.0
          %v3134 = vsel %vm1656, %v3086, 0.0
          %v3135 = vsel %vm1657, %v3087, 0.0
          %v3136 = vsel %vm1658, %v3088, 0.0
          %v3137 = vld [vmem:[#allocation2 + $0x18] sm:$0xff]
          %v3138 = vld [vmem:[#allocation2 + $0x20] sm:$0xff]
          %v3139 = vld [vmem:[#allocation2 + $0x28] sm:$0xff]
          %v3140 = vld [vmem:[#allocation2 + $0x30] sm:$0xff]
          %v3141 = vld [vmem:[#allocation2 + $0x38] sm:$0xff]
          %v3142 = vld [vmem:[#allocation2 + $0x40] sm:$0xff]
          %v3143 = vld [vmem:[#allocation2 + $0x48] sm:$0xff]
          %v3144 = vld [vmem:[#allocation2 + $0x50] sm:$0xff]
          %v3145 = vld [vmem:[#allocation2 + $0x58] sm:$0xff]
          %v3146 = vld [vmem:[#allocation2 + $0x60] sm:$0xff]
          %v3147 = vld [vmem:[#allocation2 + $0x68] sm:$0xff]
          %v3148 = vld [vmem:[#allocation2 + $0x70] sm:$0xff]
          %v3149 = vld [vmem:[#allocation2 + $0x78] sm:$0xff]
          %v3150 = vld [vmem:[#allocation2 + $0x80] sm:$0xff]
          %v3151 = vld [vmem:[#allocation2 + $0x88] sm:$0xff]
          %v3152 = vld [vmem:[#allocation2 + $0x90] sm:$0xff]
          %v3153 = vld [vmem:[#allocation2 + $0x98] sm:$0xff]
          %v3154 = vld [vmem:[#allocation2 + $0xa0] sm:$0xff]
          %v3155 = vld [vmem:[#allocation2 + $0xa8] sm:$0xff]
          %v3156 = vld [vmem:[#allocation2 + $0xb0] sm:$0xff]
          %v3157 = vld [vmem:[#allocation2 + $0xb8] sm:$0xff]
          %v3158 = vld [vmem:[#allocation2 + $0xc0] sm:$0xff]
          %v3159 = vld [vmem:[#allocation2 + $0xc8] sm:$0xff]
          %v3160 = vld [vmem:[#allocation2 + $0xd0] sm:$0xff]
          %v3161 = vld [vmem:[#allocation2 + $0xd8] sm:$0xff]
          %v3162 = vld [vmem:[#allocation2 + $0xe0] sm:$0xff]
          %v3163 = vld [vmem:[#allocation2 + $0xe8] sm:$0xff]
          %v3164 = vld [vmem:[#allocation2 + $0xf0] sm:$0xff]
          %v3165 = vld [vmem:[#allocation2 + $0xf8] sm:$0xff]
          %v3166 = vld [vmem:[#allocation2 + $0x100] sm:$0xff]
          %v3167 = vld [vmem:[#allocation2 + $0x108] sm:$0xff]
          %v3168 = vld [vmem:[#allocation2 + $0x110] sm:$0xff]
          %v3169 = vld [vmem:[#allocation2 + $0x118] sm:$0xff]
          %v3170 = vld [vmem:[#allocation2 + $0x120] sm:$0xff]
          %v3171 = vld [vmem:[#allocation2 + $0x128] sm:$0xff]
          %v3172 = vld [vmem:[#allocation2 + $0x130] sm:$0xff]
          %v3173 = vld [vmem:[#allocation2 + $0x138] sm:$0xff]
          %v3174 = vld [vmem:[#allocation2 + $0x140] sm:$0xff]
          %v3175 = vld [vmem:[#allocation2 + $0x148] sm:$0xff]
          %v3176 = vld [vmem:[#allocation2 + $0x150] sm:$0xff]
          %v3177 = vld [vmem:[#allocation2 + $0x158] sm:$0xff]
          %v3178 = vld [vmem:[#allocation2 + $0x160] sm:$0xff]
          %v3179 = vld [vmem:[#allocation2 + $0x168] sm:$0xff]
          %v3180 = vld [vmem:[#allocation2 + $0x170] sm:$0xff]
          %v3181 = vld [vmem:[#allocation2 + $0x178] sm:$0xff]
          %v3182 = vld [vmem:[#allocation2 + $0x180] sm:$0xff]
          %v3183 = vld [vmem:[#allocation2 + $0x188] sm:$0xff]
          %v3184 = vld [vmem:[#allocation2 + $0x190] sm:$0xff]
          %v3185 = vadd.f32 %v3089, %v3137
          %v3186 = vadd.f32 %v3090, %v3138
          %v3187 = vadd.f32 %v3091, %v3139
          %v3188 = vadd.f32 %v3092, %v3140
          %v3189 = vadd.f32 %v3093, %v3141
          %v3190 = vadd.f32 %v3094, %v3142
          %v3191 = vadd.f32 %v3095, %v3143
          %v3192 = vadd.f32 %v3096, %v3144
          %v3193 = vadd.f32 %v3097, %v3145
          %v3194 = vadd.f32 %v3098, %v3146
          %v3195 = vadd.f32 %v3099, %v3147
          %v3196 = vadd.f32 %v3100, %v3148
          %v3197 = vadd.f32 %v3101, %v3149
          %v3198 = vadd.f32 %v3102, %v3150
          %v3199 = vadd.f32 %v3103, %v3151
          %v3200 = vadd.f32 %v3104, %v3152
          %v3201 = vadd.f32 %v3105, %v3153
          %v3202 = vadd.f32 %v3106, %v3154
          %v3203 = vadd.f32 %v3107, %v3155
          %v3204 = vadd.f32 %v3108, %v3156
          %v3205 = vadd.f32 %v3109, %v3157
          %v3206 = vadd.f32 %v3110, %v3158
          %v3207 = vadd.f32 %v3111, %v3159
          %v3208 = vadd.f32 %v3112, %v3160
          %v3209 = vadd.f32 %v3113, %v3161
          %v3210 = vadd.f32 %v3114, %v3162
          %v3211 = vadd.f32 %v3115, %v3163
          %v3212 = vadd.f32 %v3116, %v3164
          %v3213 = vadd.f32 %v3117, %v3165
          %v3214 = vadd.f32 %v3118, %v3166
          %v3215 = vadd.f32 %v3119, %v3167
          %v3216 = vadd.f32 %v3120, %v3168
          %v3217 = vadd.f32 %v3121, %v3169
          %v3218 = vadd.f32 %v3122, %v3170
          %v3219 = vadd.f32 %v3123, %v3171
          %v3220 = vadd.f32 %v3124, %v3172
          %v3221 = vadd.f32 %v3125, %v3173
          %v3222 = vadd.f32 %v3126, %v3174
          %v3223 = vadd.f32 %v3127, %v3175
          %v3224 = vadd.f32 %v3128, %v3176
          %v3225 = vadd.f32 %v3129, %v3177
          %v3226 = vadd.f32 %v3130, %v3178
          %v3227 = vadd.f32 %v3131, %v3179
          %v3228 = vadd.f32 %v3132, %v3180
          %v3229 = vadd.f32 %v3133, %v3181
          %v3230 = vadd.f32 %v3134, %v3182
          %v3231 = vadd.f32 %v3135, %v3183
          %v3232 = vadd.f32 %v3136, %v3184
          %3233 = vst.msk [vmem:[#allocation2 + $0x18] sm:$0xff] %vm169, %v3185
          %3234 = vst.msk [vmem:[#allocation2 + $0x20] sm:$0xff] %vm169, %v3186
          %3235 = vst.msk [vmem:[#allocation2 + $0x28] sm:$0xff] %vm169, %v3187
          %3236 = vst.msk [vmem:[#allocation2 + $0x30] sm:$0xff] %vm169, %v3188
          %3237 = vst.msk [vmem:[#allocation2 + $0x38] sm:$0xff] %vm169, %v3189
          %3238 = vst.msk [vmem:[#allocation2 + $0x40] sm:$0xff] %vm169, %v3190
          %3239 = vst.msk [vmem:[#allocation2 + $0x48] sm:$0xff] %vm169, %v3191
          %3240 = vst.msk [vmem:[#allocation2 + $0x50] sm:$0xff] %vm169, %v3192
          %3241 = vst.msk [vmem:[#allocation2 + $0x58] sm:$0xff] %vm169, %v3193
          %3242 = vst.msk [vmem:[#allocation2 + $0x60] sm:$0xff] %vm169, %v3194
          %3243 = vst.msk [vmem:[#allocation2 + $0x68] sm:$0xff] %vm169, %v3195
          %3244 = vst.msk [vmem:[#allocation2 + $0x70] sm:$0xff] %vm169, %v3196
          %3245 = vst.msk [vmem:[#allocation2 + $0x78] sm:$0xff] %vm169, %v3197
          %3246 = vst.msk [vmem:[#allocation2 + $0x80] sm:$0xff] %vm169, %v3198
          %3247 = vst.msk [vmem:[#allocation2 + $0x88] sm:$0xff] %vm169, %v3199
          %3248 = vst.msk [vmem:[#allocation2 + $0x90] sm:$0xff] %vm169, %v3200
          %3249 = vst.msk [vmem:[#allocation2 + $0x98] sm:$0xff] %vm169, %v3201
          %3250 = vst.msk [vmem:[#allocation2 + $0xa0] sm:$0xff] %vm169, %v3202
          %3251 = vst.msk [vmem:[#allocation2 + $0xa8] sm:$0xff] %vm169, %v3203
          %3252 = vst.msk [vmem:[#allocation2 + $0xb0] sm:$0xff] %vm169, %v3204
          %3253 = vst.msk [vmem:[#allocation2 + $0xb8] sm:$0xff] %vm169, %v3205
          %3254 = vst.msk [vmem:[#allocation2 + $0xc0] sm:$0xff] %vm169, %v3206
          %3255 = vst.msk [vmem:[#allocation2 + $0xc8] sm:$0xff] %vm169, %v3207
          %3256 = vst.msk [vmem:[#allocation2 + $0xd0] sm:$0xff] %vm169, %v3208
          %3257 = vst.msk [vmem:[#allocation2 + $0xd8] sm:$0xff] %vm169, %v3209
          %3258 = vst.msk [vmem:[#allocation2 + $0xe0] sm:$0xff] %vm169, %v3210
          %3259 = vst.msk [vmem:[#allocation2 + $0xe8] sm:$0xff] %vm169, %v3211
          %3260 = vst.msk [vmem:[#allocation2 + $0xf0] sm:$0xff] %vm169, %v3212
          %3261 = vst.msk [vmem:[#allocation2 + $0xf8] sm:$0xff] %vm169, %v3213
          %3262 = vst.msk [vmem:[#allocation2 + $0x100] sm:$0xff] %vm169, %v3214
          %3263 = vst.msk [vmem:[#allocation2 + $0x108] sm:$0xff] %vm169, %v3215
          %3264 = vst.msk [vmem:[#allocation2 + $0x110] sm:$0xff] %vm169, %v3216
          %3265 = vst.msk [vmem:[#allocation2 + $0x118] sm:$0xff] %vm169, %v3217
          %3266 = vst.msk [vmem:[#allocation2 + $0x120] sm:$0xff] %vm169, %v3218
          %3267 = vst.msk [vmem:[#allocation2 + $0x128] sm:$0xff] %vm169, %v3219
          %3268 = vst.msk [vmem:[#allocation2 + $0x130] sm:$0xff] %vm169, %v3220
          %3269 = vst.msk [vmem:[#allocation2 + $0x138] sm:$0xff] %vm169, %v3221
          %3270 = vst.msk [vmem:[#allocation2 + $0x140] sm:$0xff] %vm169, %v3222
          %3271 = vst.msk [vmem:[#allocation2 + $0x148] sm:$0xff] %vm169, %v3223
          %3272 = vst.msk [vmem:[#allocation2 + $0x150] sm:$0xff] %vm169, %v3224
          %3273 = vst.msk [vmem:[#allocation2 + $0x158] sm:$0xff] %vm169, %v3225
          %3274 = vst.msk [vmem:[#allocation2 + $0x160] sm:$0xff] %vm169, %v3226
          %3275 = vst.msk [vmem:[#allocation2 + $0x168] sm:$0xff] %vm169, %v3227
          %3276 = vst.msk [vmem:[#allocation2 + $0x170] sm:$0xff] %vm169, %v3228
          %3277 = vst.msk [vmem:[#allocation2 + $0x178] sm:$0xff] %vm169, %v3229
          %3278 = vst.msk [vmem:[#allocation2 + $0x180] sm:$0xff] %vm169, %v3230
          %3279 = vst.msk [vmem:[#allocation2 + $0x188] sm:$0xff] %vm169, %v3231
          %3280 = vst.msk [vmem:[#allocation2 + $0x190] sm:$0xff] %vm169, %v3232
        $region37: #{residual_group_no_ca.1} parent=31 // loop_footer
          %s267 = sadd.s32 1, %s263
        $region38: #{residual_group_no_ca.1} parent=31 // loop_footer_branch
          %262 = sbr.rel target = $region34
        $region39: #{residual_group_no_ca.1} parent=31 // loop_exit
          _
        %v3281 = vld [vmem:[#allocation2] sm:$0xff]
        %v3282 = vld [vmem:[#allocation2 + $0x8] sm:$0xff]
        %v3283 = vld [vmem:[#allocation2 + $0x10] sm:$0xff]
        %v3284 = vld [vmem:[#allocation2 + $0x18] sm:$0xff]
        %v3285 = vld [vmem:[#allocation2 + $0x20] sm:$0xff]
        %v3286 = vld [vmem:[#allocation2 + $0x28] sm:$0xff]
        %v3287 = vld [vmem:[#allocation2 + $0x30] sm:$0xff]
        %v3288 = vld [vmem:[#allocation2 + $0x38] sm:$0xff]
        %v3289 = vld [vmem:[#allocation2 + $0x40] sm:$0xff]
        %v3290 = vld [vmem:[#allocation2 + $0x48] sm:$0xff]
        %v3291 = vld [vmem:[#allocation2 + $0x50] sm:$0xff]
        %v3292 = vld [vmem:[#allocation2 + $0x58] sm:$0xff]
        %v3293 = vld [vmem:[#allocation2 + $0x60] sm:$0xff]
        %v3294 = vld [vmem:[#allocation2 + $0x68] sm:$0xff]
        %v3295 = vld [vmem:[#allocation2 + $0x70] sm:$0xff]
        %v3296 = vld [vmem:[#allocation2 + $0x78] sm:$0xff]
        %v3297 = vld [vmem:[#allocation2 + $0x80] sm:$0xff]
        %v3298 = vld [vmem:[#allocation2 + $0x88] sm:$0xff]
        %v3299 = vld [vmem:[#allocation2 + $0x90] sm:$0xff]
        %v3300 = vld [vmem:[#allocation2 + $0x98] sm:$0xff]
        %v3301 = vld [vmem:[#allocation2 + $0xa0] sm:$0xff]
        %v3302 = vld [vmem:[#allocation2 + $0xa8] sm:$0xff]
        %v3303 = vld [vmem:[#allocation2 + $0xb0] sm:$0xff]
        %v3304 = vld [vmem:[#allocation2 + $0xb8] sm:$0xff]
        %v3305 = vld [vmem:[#allocation2 + $0xc0] sm:$0xff]
        %v3306 = vld [vmem:[#allocation2 + $0xc8] sm:$0xff]
        %v3307 = vld [vmem:[#allocation2 + $0xd0] sm:$0xff]
        %v3308 = vld [vmem:[#allocation2 + $0xd8] sm:$0xff]
        %v3309 = vld [vmem:[#allocation2 + $0xe0] sm:$0xff]
        %v3310 = vld [vmem:[#allocation2 + $0xe8] sm:$0xff]
        %v3311 = vld [vmem:[#allocation2 + $0xf0] sm:$0xff]
        %v3312 = vld [vmem:[#allocation2 + $0xf8] sm:$0xff]
        %v3313 = vld [vmem:[#allocation2 + $0x100] sm:$0xff]
        %v3314 = vld [vmem:[#allocation2 + $0x108] sm:$0xff]
        %v3315 = vld [vmem:[#allocation2 + $0x110] sm:$0xff]
        %v3316 = vld [vmem:[#allocation2 + $0x118] sm:$0xff]
        %v3317 = vld [vmem:[#allocation2 + $0x120] sm:$0xff]
        %v3318 = vld [vmem:[#allocation2 + $0x128] sm:$0xff]
        %v3319 = vld [vmem:[#allocation2 + $0x130] sm:$0xff]
        %v3320 = vld [vmem:[#allocation2 + $0x138] sm:$0xff]
        %v3321 = vld [vmem:[#allocation2 + $0x140] sm:$0xff]
        %v3322 = vld [vmem:[#allocation2 + $0x148] sm:$0xff]
        %v3323 = vld [vmem:[#allocation2 + $0x150] sm:$0xff]
        %v3324 = vld [vmem:[#allocation2 + $0x158] sm:$0xff]
        %v3325 = vld [vmem:[#allocation2 + $0x160] sm:$0xff]
        %v3326 = vld [vmem:[#allocation2 + $0x168] sm:$0xff]
        %v3327 = vld [vmem:[#allocation2 + $0x170] sm:$0xff]
        %v3328 = vld [vmem:[#allocation2 + $0x178] sm:$0xff]
        %v3329 = vld [vmem:[#allocation2 + $0x180] sm:$0xff]
        %v3330 = vld [vmem:[#allocation2 + $0x188] sm:$0xff]
        %v3331 = vld [vmem:[#allocation2 + $0x190] sm:$0xff]
        %v3332 = vld [vmem:[#allocation2 + $0x198] sm:$0xff]
        %v3333 = vld [vmem:[#allocation2 + $0x1a0] sm:$0xff]
        %v3334 = vld [vmem:[#allocation2 + $0x1a8] sm:$0xff]
        %3383 = vrot.lane.b32.xlu0 %v3284, 64
        %v3384 = vpop.permute.xlu0 %3383
        %3385 = vrot.lane.b32.xlu0 %v3285, 64
        %v3386 = vpop.permute.xlu0 %3385
        %3387 = vrot.lane.b32.xlu0 %v3286, 64
        %v3388 = vpop.permute.xlu0 %3387
        %3389 = vrot.lane.b32.xlu0 %v3287, 64
        %v3390 = vpop.permute.xlu0 %3389
        %3391 = vrot.lane.b32.xlu0 %v3288, 64
        %v3392 = vpop.permute.xlu0 %3391
        %3393 = vrot.lane.b32.xlu0 %v3289, 64
        %v3394 = vpop.permute.xlu0 %3393
        %3395 = vrot.lane.b32.xlu0 %v3290, 64
        %v3396 = vpop.permute.xlu0 %3395
        %3397 = vrot.lane.b32.xlu0 %v3291, 64
        %v3398 = vpop.permute.xlu0 %3397
        %3399 = vrot.lane.b32.xlu0 %v3292, 64
        %v3400 = vpop.permute.xlu0 %3399
        %3401 = vrot.lane.b32.xlu0 %v3293, 64
        %v3402 = vpop.permute.xlu0 %3401
        %3403 = vrot.lane.b32.xlu0 %v3294, 64
        %v3404 = vpop.permute.xlu0 %3403
        %3405 = vrot.lane.b32.xlu0 %v3295, 64
        %v3406 = vpop.permute.xlu0 %3405
        %3407 = vrot.lane.b32.xlu0 %v3296, 64
        %v3408 = vpop.permute.xlu0 %3407
        %3409 = vrot.lane.b32.xlu0 %v3297, 64
        %v3410 = vpop.permute.xlu0 %3409
        %3411 = vrot.lane.b32.xlu0 %v3298, 64
        %v3412 = vpop.permute.xlu0 %3411
        %3413 = vrot.lane.b32.xlu0 %v3299, 64
        %v3414 = vpop.permute.xlu0 %3413
        %3415 = vrot.lane.b32.xlu0 %v3300, 64
        %v3416 = vpop.permute.xlu0 %3415
        %3417 = vrot.lane.b32.xlu0 %v3301, 64
        %v3418 = vpop.permute.xlu0 %3417
        %3419 = vrot.lane.b32.xlu0 %v3302, 64
        %v3420 = vpop.permute.xlu0 %3419
        %3421 = vrot.lane.b32.xlu0 %v3303, 64
        %v3422 = vpop.permute.xlu0 %3421
        %3423 = vrot.lane.b32.xlu0 %v3304, 64
        %v3424 = vpop.permute.xlu0 %3423
        %3425 = vrot.lane.b32.xlu0 %v3305, 64
        %v3426 = vpop.permute.xlu0 %3425
        %3427 = vrot.lane.b32.xlu0 %v3306, 64
        %v3428 = vpop.permute.xlu0 %3427
        %3429 = vrot.lane.b32.xlu0 %v3307, 64
        %v3430 = vpop.permute.xlu0 %3429
        %3431 = vrot.lane.b32.xlu0 %v3308, 64
        %v3432 = vpop.permute.xlu0 %3431
        %3433 = vrot.lane.b32.xlu0 %v3309, 64
        %v3434 = vpop.permute.xlu0 %3433
        %3435 = vrot.lane.b32.xlu0 %v3310, 64
        %v3436 = vpop.permute.xlu0 %3435
        %3437 = vrot.lane.b32.xlu0 %v3311, 64
        %v3438 = vpop.permute.xlu0 %3437
        %3439 = vrot.lane.b32.xlu0 %v3312, 64
        %v3440 = vpop.permute.xlu0 %3439
        %3441 = vrot.lane.b32.xlu0 %v3313, 64
        %v3442 = vpop.permute.xlu0 %3441
        %3443 = vrot.lane.b32.xlu0 %v3314, 64
        %v3444 = vpop.permute.xlu0 %3443
        %3445 = vrot.lane.b32.xlu0 %v3315, 64
        %v3446 = vpop.permute.xlu0 %3445
        %3447 = vrot.lane.b32.xlu0 %v3316, 64
        %v3448 = vpop.permute.xlu0 %3447
        %3449 = vrot.lane.b32.xlu0 %v3317, 64
        %v3450 = vpop.permute.xlu0 %3449
        %3451 = vrot.lane.b32.xlu0 %v3318, 64
        %v3452 = vpop.permute.xlu0 %3451
        %3453 = vrot.lane.b32.xlu0 %v3319, 64
        %v3454 = vpop.permute.xlu0 %3453
        %3455 = vrot.lane.b32.xlu0 %v3320, 64
        %v3456 = vpop.permute.xlu0 %3455
        %3457 = vrot.lane.b32.xlu0 %v3321, 64
        %v3458 = vpop.permute.xlu0 %3457
        %3459 = vrot.lane.b32.xlu0 %v3322, 64
        %v3460 = vpop.permute.xlu0 %3459
        %3461 = vrot.lane.b32.xlu0 %v3323, 64
        %v3462 = vpop.permute.xlu0 %3461
        %3463 = vrot.lane.b32.xlu0 %v3324, 64
        %v3464 = vpop.permute.xlu0 %3463
        %3465 = vrot.lane.b32.xlu0 %v3325, 64
        %v3466 = vpop.permute.xlu0 %3465
        %3467 = vrot.lane.b32.xlu0 %v3326, 64
        %v3468 = vpop.permute.xlu0 %3467
        %3469 = vrot.lane.b32.xlu0 %v3327, 64
        %v3470 = vpop.permute.xlu0 %3469
        %3471 = vrot.lane.b32.xlu0 %v3328, 64
        %v3472 = vpop.permute.xlu0 %3471
        %3473 = vrot.lane.b32.xlu0 %v3329, 64
        %v3474 = vpop.permute.xlu0 %3473
        %3475 = vrot.lane.b32.xlu0 %v3330, 64
        %v3476 = vpop.permute.xlu0 %3475
        %3477 = vrot.lane.b32.xlu0 %v3331, 64
        %v3478 = vpop.permute.xlu0 %3477
        %v3527 = vsel %vm169, %v3281, %v3384
        %v3528 = vsel %vm169, %v3282, %v3386
        %v3529 = vsel %vm169, %v3283, %v3388
        %v3530 = vsel %vm169, %v3284, %v3390
        %v3531 = vsel %vm169, %v3285, %v3392
        %v3532 = vsel %vm169, %v3286, %v3394
        %v3533 = vsel %vm169, %v3287, %v3396
        %v3534 = vsel %vm169, %v3288, %v3398
        %v3535 = vsel %vm169, %v3289, %v3400
        %v3536 = vsel %vm169, %v3290, %v3402
        %v3537 = vsel %vm169, %v3291, %v3404
        %v3538 = vsel %vm169, %v3292, %v3406
        %v3539 = vsel %vm169, %v3293, %v3408
        %v3540 = vsel %vm169, %v3294, %v3410
        %v3541 = vsel %vm169, %v3295, %v3412
        %v3542 = vsel %vm169, %v3296, %v3414
        %v3543 = vsel %vm169, %v3297, %v3416
        %v3544 = vsel %vm169, %v3298, %v3418
        %v3545 = vsel %vm169, %v3299, %v3420
        %v3546 = vsel %vm169, %v3300, %v3422
        %v3547 = vsel %vm169, %v3301, %v3424
        %v3548 = vsel %vm169, %v3302, %v3426
        %v3549 = vsel %vm169, %v3303, %v3428
        %v3550 = vsel %vm169, %v3304, %v3430
        %v3551 = vsel %vm169, %v3305, %v3432
        %v3552 = vsel %vm169, %v3306, %v3434
        %v3553 = vsel %vm169, %v3307, %v3436
        %v3554 = vsel %vm169, %v3308, %v3438
        %v3555 = vsel %vm169, %v3309, %v3440
        %v3556 = vsel %vm169, %v3310, %v3442
        %v3557 = vsel %vm169, %v3311, %v3444
        %v3558 = vsel %vm169, %v3312, %v3446
        %v3559 = vsel %vm169, %v3313, %v3448
        %v3560 = vsel %vm169, %v3314, %v3450
        %v3561 = vsel %vm169, %v3315, %v3452
        %v3562 = vsel %vm169, %v3316, %v3454
        %v3563 = vsel %vm169, %v3317, %v3456
        %v3564 = vsel %vm169, %v3318, %v3458
        %v3565 = vsel %vm169, %v3319, %v3460
        %v3566 = vsel %vm169, %v3320, %v3462
        %v3567 = vsel %vm169, %v3321, %v3464
        %v3568 = vsel %vm169, %v3322, %v3466
        %v3569 = vsel %vm169, %v3323, %v3468
        %v3570 = vsel %vm169, %v3324, %v3470
        %v3571 = vsel %vm169, %v3325, %v3472
        %v3572 = vsel %vm169, %v3326, %v3474
        %v3573 = vsel %vm169, %v3327, %v3476
        %v3574 = vsel %vm169, %v3328, %v3478
        %s3575 = scalar_lea.vmem %s1, 1536
        %v3576 = vld [vmem:[%s3575] sm:$0xff]
        %v3577 = vld [vmem:[%s3575 + $0x8] sm:$0xff]
        %v3578 = vld [vmem:[%s3575 + $0x10] sm:$0xff]
        %v3579 = vld [vmem:[%s3575 + $0x18] sm:$0xff]
        %v3580 = vld [vmem:[%s3575 + $0x20] sm:$0xff]
        %v3581 = vld [vmem:[%s3575 + $0x28] sm:$0xff]
        %v3582 = vld [vmem:[%s3575 + $0x30] sm:$0xff]
        %v3583 = vld [vmem:[%s3575 + $0x38] sm:$0xff]
        %v3584 = vld [vmem:[%s3575 + $0x40] sm:$0xff]
        %v3585 = vld [vmem:[%s3575 + $0x48] sm:$0xff]
        %v3586 = vld [vmem:[%s3575 + $0x50] sm:$0xff]
        %v3587 = vld [vmem:[%s3575 + $0x58] sm:$0xff]
        %v3588 = vld [vmem:[%s3575 + $0x60] sm:$0xff]
        %v3589 = vld [vmem:[%s3575 + $0x68] sm:$0xff]
        %v3590 = vld [vmem:[%s3575 + $0x70] sm:$0xff]
        %v3591 = vld [vmem:[%s3575 + $0x78] sm:$0xff]
        %v3592 = vld [vmem:[%s3575 + $0x80] sm:$0xff]
        %v3593 = vld [vmem:[%s3575 + $0x88] sm:$0xff]
        %v3594 = vld [vmem:[%s3575 + $0x90] sm:$0xff]
        %v3595 = vld [vmem:[%s3575 + $0x98] sm:$0xff]
        %v3596 = vld [vmem:[%s3575 + $0xa0] sm:$0xff]
        %v3597 = vld [vmem:[%s3575 + $0xa8] sm:$0xff]
        %v3598 = vld [vmem:[%s3575 + $0xb0] sm:$0xff]
        %v3599 = vld [vmem:[%s3575 + $0xb8] sm:$0xff]
        %v3600 = vld [vmem:[%s3575 + $0xc0] sm:$0xff]
        %v3601 = vld [vmem:[%s3575 + $0xc8] sm:$0xff]
        %v3602 = vld [vmem:[%s3575 + $0xd0] sm:$0xff]
        %v3603 = vld [vmem:[%s3575 + $0xd8] sm:$0xff]
        %v3604 = vld [vmem:[%s3575 + $0xe0] sm:$0xff]
        %v3605 = vld [vmem:[%s3575 + $0xe8] sm:$0xff]
        %v3606 = vld [vmem:[%s3575 + $0xf0] sm:$0xff]
        %v3607 = vld [vmem:[%s3575 + $0xf8] sm:$0xff]
        %v3608 = vld [vmem:[%s3575 + $0x100] sm:$0xff]
        %v3609 = vld [vmem:[%s3575 + $0x108] sm:$0xff]
        %v3610 = vld [vmem:[%s3575 + $0x110] sm:$0xff]
        %v3611 = vld [vmem:[%s3575 + $0x118] sm:$0xff]
        %v3612 = vld [vmem:[%s3575 + $0x120] sm:$0xff]
        %v3613 = vld [vmem:[%s3575 + $0x128] sm:$0xff]
        %v3614 = vld [vmem:[%s3575 + $0x130] sm:$0xff]
        %v3615 = vld [vmem:[%s3575 + $0x138] sm:$0xff]
        %v3616 = vld [vmem:[%s3575 + $0x140] sm:$0xff]
        %v3617 = vld [vmem:[%s3575 + $0x148] sm:$0xff]
        %v3618 = vld [vmem:[%s3575 + $0x150] sm:$0xff]
        %v3619 = vld [vmem:[%s3575 + $0x158] sm:$0xff]
        %v3620 = vld [vmem:[%s3575 + $0x160] sm:$0xff]
        %v3621 = vld [vmem:[%s3575 + $0x168] sm:$0xff]
        %v3622 = vld [vmem:[%s3575 + $0x170] sm:$0xff]
        %v3623 = vld [vmem:[%s3575 + $0x178] sm:$0xff]
        %v3624 = vsel %vm169, %v3287, 0
        %v3626 = vsel %vm169, %v3288, 0
        %v3628 = vsel %vm169, %v3289, 0
        %v3630 = vsel %vm169, %v3290, 0
        %v3632 = vsel %vm169, %v3291, 0
        %v3634 = vsel %vm169, %v3292, 0
        %v3636 = vsel %vm169, %v3293, 0
        %v3638 = vsel %vm169, %v3294, 0
        %v3640 = vsel %vm169, %v3295, 0
        %v3642 = vsel %vm169, %v3296, 0
        %v3644 = vsel %vm169, %v3297, 0
        %v3646 = vsel %vm169, %v3298, 0
        %v3648 = vsel %vm169, %v3299, 0
        %v3650 = vsel %vm169, %v3300, 0
        %v3652 = vsel %vm169, %v3301, 0
        %v3654 = vsel %vm169, %v3302, 0
        %v3656 = vsel %vm169, %v3303, 0
        %v3658 = vsel %vm169, %v3304, 0
        %v3660 = vsel %vm169, %v3305, 0
        %v3662 = vsel %vm169, %v3306, 0
        %v3664 = vsel %vm169, %v3307, 0
        %v3666 = vsel %vm169, %v3308, 0
        %v3668 = vsel %vm169, %v3309, 0
        %v3670 = vsel %vm169, %v3310, 0
        %v3672 = vsel %vm169, %v3311, 0
        %v3674 = vsel %vm169, %v3312, 0
        %v3676 = vsel %vm169, %v3313, 0
        %v3678 = vsel %vm169, %v3314, 0
        %v3680 = vsel %vm169, %v3315, 0
        %v3682 = vsel %vm169, %v3316, 0
        %v3684 = vsel %vm169, %v3317, 0
        %v3686 = vsel %vm169, %v3318, 0
        %v3688 = vsel %vm169, %v3319, 0
        %v3690 = vsel %vm169, %v3320, 0
        %v3692 = vsel %vm169, %v3321, 0
        %v3694 = vsel %vm169, %v3322, 0
        %v3696 = vsel %vm169, %v3323, 0
        %v3698 = vsel %vm169, %v3324, 0
        %v3700 = vsel %vm169, %v3325, 0
        %v3702 = vsel %vm169, %v3326, 0
        %v3704 = vsel %vm169, %v3327, 0
        %v3706 = vsel %vm169, %v3328, 0
        %v3708 = vsel %vm169, %v3329, 0
        %v3710 = vsel %vm169, %v3330, 0
        %v3712 = vsel %vm169, %v3331, 0
        %v3715 = vsel %vm169, %v3332, 0
        %v3718 = vsel %vm169, %v3333, 0
        %v3721 = vsel %vm169, %v3334, 0
        %3723 = vmatprep.subr.mxu0 %v3577
        %3724 = vmatpush1.msra.mxu0 %v3576
        %3725 = vmatprep.subr.mxu0 %v3579
        %3726 = vmatpush1.msra.mxu0 %v3578
        %3727 = vmatprep.subr.mxu0 %v3581
        %3728 = vmatpush1.msra.mxu0 %v3580
        %3729 = vmatprep.subr.mxu0 %v3583
        %3730 = vmatpush1.msra.mxu0 %v3582
        %3731 = vmatprep.subr.mxu0 %v3585
        %3732 = vmatpush1.msra.mxu0 %v3584
        %3733 = vmatprep.subr.mxu0 %v3587
        %3734 = vmatpush1.msra.mxu0 %v3586
        %3735 = vmatprep.subr.mxu0 %v3589
        %3736 = vmatpush1.msra.mxu0 %v3588
        %3737 = vmatprep.subr.mxu0 %v3591
        %3738 = vmatpush1.msra.mxu0 %v3590
        %3739 = vmatprep.subr.mxu0 %v3593
        %3740 = vmatpush1.msra.mxu0 %v3592
        %3741 = vmatprep.subr.mxu0 %v3595
        %3742 = vmatpush1.msra.mxu0 %v3594
        %3743 = vmatprep.subr.mxu0 %v3597
        %3744 = vmatpush1.msra.mxu0 %v3596
        %3745 = vmatprep.subr.mxu0 %v3599
        %3746 = vmatpush1.msra.mxu0 %v3598
        %3747 = vmatprep.subr.mxu0 %v3601
        %3748 = vmatpush1.msra.mxu0 %v3600
        %3749 = vmatprep.subr.mxu0 %v3603
        %3750 = vmatpush1.msra.mxu0 %v3602
        %3751 = vmatprep.subr.mxu0 %v3605
        %3752 = vmatpush1.msra.mxu0 %v3604
        %3753 = vmatprep.subr.mxu0 %v3607
        %3754 = vmatpush1.msra.mxu0 %v3606
        %3755 = vmatprep.subr.mxu0 %v3609
        %3756 = vmatpush1.msra.mxu0 %v3608
        %3757 = vmatprep.subr.mxu0 %v3611
        %3758 = vmatpush1.msra.mxu0 %v3610
        %3759 = vmatprep.subr.mxu0 %v3613
        %3760 = vmatpush1.msra.mxu0 %v3612
        %3761 = vmatprep.subr.mxu0 %v3615
        %3762 = vmatpush1.msra.mxu0 %v3614
        %3763 = vmatprep.subr.mxu0 %v3617
        %3764 = vmatpush1.msra.mxu0 %v3616
        %3765 = vmatprep.subr.mxu0 %v3619
        %3766 = vmatpush1.msra.mxu0 %v3618
        %3767 = vmatprep.subr.mxu0 %v3621
        %3768 = vmatpush1.msra.mxu0 %v3620
        %3769 = vmatprep.subr.mxu0 %v3623
        %3770 = vmatpush1.msra.mxu0 %v3622
        %3771 = vmatprep.subr.mxu0 0.0
        %3772 = vmatpush1.msra.mxu0 0.0
        %3773 = vmatprep.subr.mxu0 0.0
        %3774 = vmatpush1.msra.mxu0 0.0
        %3775 = vmatprep.subr.mxu0 0.0
        %3776 = vmatpush1.msra.mxu0 0.0
        %3777 = vmatprep.subr.mxu0 0.0
        %3778 = vmatpush1.msra.mxu0 0.0
        %3779 = vmatprep.subr.mxu0 0.0
        %3780 = vmatpush1.msra.mxu0 0.0
        %3781 = vmatprep.subr.mxu0 0.0
        %3782 = vmatpush1.msra.mxu0 0.0
        %3783 = vmatprep.subr.mxu0 0.0
        %3784 = vmatpush1.msra.mxu0 0.0
        %3785 = vmatprep.subr.mxu0 0.0
        %3786 = vmatpush1.msra.mxu0 0.0
        %3787 = vmatprep.mubr.f32.mxu0 %v3624
        %3788 = vmatmul.mubr.f32.gmra.mrb[0].mxu0 %v3527
        %v3789 = vpop.f32.mrb[0].mxu0
        %v3790 = vadd.f32 0.0, %v3789
        %v3791 = vpop.f32.mrb[0].mxu0
        %v3792 = vadd.f32 0.0, %v3791
        %3793 = vmatprep.mubr.f32.mxu0 %v3626
        %3794 = vmatmul.mubr.f32.gmra.mrb[0].mxu0 %v3528
        %v3795 = vpop.f32.mrb[0].mxu0
        %v3796 = vadd.f32 0.0, %v3795
        %v3797 = vpop.f32.mrb[0].mxu0
        %v3798 = vadd.f32 0.0, %v3797
        %3799 = vmatprep.mubr.f32.mxu0 %v3628
        %3800 = vmatmul.mubr.f32.gmra.mrb[0].mxu0 %v3529
        %v3801 = vpop.f32.mrb[0].mxu0
        %v3802 = vadd.f32 0.0, %v3801
        %v3803 = vpop.f32.mrb[0].mxu0
        %v3804 = vadd.f32 0.0, %v3803
        %3805 = vmatprep.mubr.f32.mxu0 %v3630
        %3806 = vmatmul.mubr.f32.gmra.mrb[0].mxu0 %v3530
        %v3807 = vpop.f32.mrb[0].mxu0
        %v3808 = vadd.f32 0.0, %v3807
        %v3809 = vpop.f32.mrb[0].mxu0
        %v3810 = vadd.f32 0.0, %v3809
        %3811 = vmatprep.mubr.f32.mxu0 %v3632
        %3812 = vmatmul.mubr.f32.gmra.mrb[0].mxu0 %v3531
        %v3813 = vpop.f32.mrb[0].mxu0
        %v3814 = vadd.f32 0.0, %v3813
        %v3815 = vpop.f32.mrb[0].mxu0
        %v3816 = vadd.f32 0.0, %v3815
        %3817 = vmatprep.mubr.f32.mxu0 %v3634
        %3818 = vmatmul.mubr.f32.gmra.mrb[0].mxu0 %v3532
        %v3819 = vpop.f32.mrb[0].mxu0
        %v3820 = vadd.f32 0.0, %v3819
        %v3821 = vpop.f32.mrb[0].mxu0
        %v3822 = vadd.f32 0.0, %v3821
        %3823 = vmatprep.mubr.f32.mxu0 %v3636
        %3824 = vmatmul.mubr.f32.gmra.mrb[0].mxu0 %v3533
        %v3825 = vpop.f32.mrb[0].mxu0
        %v3826 = vadd.f32 0.0, %v3825
        %v3827 = vpop.f32.mrb[0].mxu0
        %v3828 = vadd.f32 0.0, %v3827
        %3829 = vmatprep.mubr.f32.mxu0 %v3638
        %3830 = vmatmul.mubr.f32.gmra.mrb[0].mxu0 %v3534
        %v3831 = vpop.f32.mrb[0].mxu0
        %v3832 = vadd.f32 0.0, %v3831
        %v3833 = vpop.f32.mrb[0].mxu0
        %v3834 = vadd.f32 0.0, %v3833
        %3835 = vmatprep.mubr.f32.mxu0 %v3640
        %3836 = vmatmul.mubr.f32.gmra.mrb[0].mxu0 %v3535
        %v3837 = vpop.f32.mrb[0].mxu0
        %v3838 = vadd.f32 0.0, %v3837
        %v3839 = vpop.f32.mrb[0].mxu0
        %v3840 = vadd.f32 0.0, %v3839
        %3841 = vmatprep.mubr.f32.mxu0 %v3642
        %3842 = vmatmul.mubr.f32.gmra.mrb[0].mxu0 %v3536
        %v3843 = vpop.f32.mrb[0].mxu0
        %v3844 = vadd.f32 0.0, %v3843
        %v3845 = vpop.f32.mrb[0].mxu0
        %v3846 = vadd.f32 0.0, %v3845
        %3847 = vmatprep.mubr.f32.mxu0 %v3644
        %3848 = vmatmul.mubr.f32.gmra.mrb[0].mxu0 %v3537
        %v3849 = vpop.f32.mrb[0].mxu0
        %v3850 = vadd.f32 0.0, %v3849
        %v3851 = vpop.f32.mrb[0].mxu0
        %v3852 = vadd.f32 0.0, %v3851
        %3853 = vmatprep.mubr.f32.mxu0 %v3646
        %3854 = vmatmul.mubr.f32.gmra.mrb[0].mxu0 %v3538
        %v3855 = vpop.f32.mrb[0].mxu0
        %v3856 = vadd.f32 0.0, %v3855
        %v3857 = vpop.f32.mrb[0].mxu0
        %v3858 = vadd.f32 0.0, %v3857
        %3859 = vmatprep.mubr.f32.mxu0 %v3648
        %3860 = vmatmul.mubr.f32.gmra.mrb[0].mxu0 %v3539
        %v3861 = vpop.f32.mrb[0].mxu0
        %v3862 = vadd.f32 0.0, %v3861
        %v3863 = vpop.f32.mrb[0].mxu0
        %v3864 = vadd.f32 0.0, %v3863
        %3865 = vmatprep.mubr.f32.mxu0 %v3650
        %3866 = vmatmul.mubr.f32.gmra.mrb[0].mxu0 %v3540
        %v3867 = vpop.f32.mrb[0].mxu0
        %v3868 = vadd.f32 0.0, %v3867
        %v3869 = vpop.f32.mrb[0].mxu0
        %v3870 = vadd.f32 0.0, %v3869
        %3871 = vmatprep.mubr.f32.mxu0 %v3652
        %3872 = vmatmul.mubr.f32.gmra.mrb[0].mxu0 %v3541
        %v3873 = vpop.f32.mrb[0].mxu0
        %v3874 = vadd.f32 0.0, %v3873
        %v3875 = vpop.f32.mrb[0].mxu0
        %v3876 = vadd.f32 0.0, %v3875
        %3877 = vmatprep.mubr.f32.mxu0 %v3654
        %3878 = vmatmul.mubr.f32.gmra.mrb[0].mxu0 %v3542
        %v3879 = vpop.f32.mrb[0].mxu0
        %v3880 = vadd.f32 0.0, %v3879
        %v3881 = vpop.f32.mrb[0].mxu0
        %v3882 = vadd.f32 0.0, %v3881
        %3883 = vmatprep.mubr.f32.mxu0 %v3656
        %3884 = vmatmul.mubr.f32.gmra.mrb[0].mxu0 %v3543
        %v3885 = vpop.f32.mrb[0].mxu0
        %v3886 = vadd.f32 0.0, %v3885
        %v3887 = vpop.f32.mrb[0].mxu0
        %v3888 = vadd.f32 0.0, %v3887
        %3889 = vmatprep.mubr.f32.mxu0 %v3658
        %3890 = vmatmul.mubr.f32.gmra.mrb[0].mxu0 %v3544
        %v3891 = vpop.f32.mrb[0].mxu0
        %v3892 = vadd.f32 0.0, %v3891
        %v3893 = vpop.f32.mrb[0].mxu0
        %v3894 = vadd.f32 0.0, %v3893
        %3895 = vmatprep.mubr.f32.mxu0 %v3660
        %3896 = vmatmul.mubr.f32.gmra.mrb[0].mxu0 %v3545
        %v3897 = vpop.f32.mrb[0].mxu0
        %v3898 = vadd.f32 0.0, %v3897
        %v3899 = vpop.f32.mrb[0].mxu0
        %v3900 = vadd.f32 0.0, %v3899
        %3901 = vmatprep.mubr.f32.mxu0 %v3662
        %3902 = vmatmul.mubr.f32.gmra.mrb[0].mxu0 %v3546
        %v3903 = vpop.f32.mrb[0].mxu0
        %v3904 = vadd.f32 0.0, %v3903
        %v3905 = vpop.f32.mrb[0].mxu0
        %v3906 = vadd.f32 0.0, %v3905
        %3907 = vmatprep.mubr.f32.mxu0 %v3664
        %3908 = vmatmul.mubr.f32.gmra.mrb[0].mxu0 %v3547
        %v3909 = vpop.f32.mrb[0].mxu0
        %v3910 = vadd.f32 0.0, %v3909
        %v3911 = vpop.f32.mrb[0].mxu0
        %v3912 = vadd.f32 0.0, %v3911
        %3913 = vmatprep.mubr.f32.mxu0 %v3666
        %3914 = vmatmul.mubr.f32.gmra.mrb[0].mxu0 %v3548
        %v3915 = vpop.f32.mrb[0].mxu0
        %v3916 = vadd.f32 0.0, %v3915
        %v3917 = vpop.f32.mrb[0].mxu0
        %v3918 = vadd.f32 0.0, %v3917
        %3919 = vmatprep.mubr.f32.mxu0 %v3668
        %3920 = vmatmul.mubr.f32.gmra.mrb[0].mxu0 %v3549
        %v3921 = vpop.f32.mrb[0].mxu0
        %v3922 = vadd.f32 0.0, %v3921
        %v3923 = vpop.f32.mrb[0].mxu0
        %v3924 = vadd.f32 0.0, %v3923
        %3925 = vmatprep.mubr.f32.mxu0 %v3670
        %3926 = vmatmul.mubr.f32.gmra.mrb[0].mxu0 %v3550
        %v3927 = vpop.f32.mrb[0].mxu0
        %v3928 = vadd.f32 0.0, %v3927
        %v3929 = vpop.f32.mrb[0].mxu0
        %v3930 = vadd.f32 0.0, %v3929
        %3931 = vmatprep.mubr.f32.mxu0 %v3672
        %3932 = vmatmul.mubr.f32.gmra.mrb[0].mxu0 %v3551
        %v3933 = vpop.f32.mrb[0].mxu0
        %v3934 = vadd.f32 0.0, %v3933
        %v3935 = vpop.f32.mrb[0].mxu0
        %v3936 = vadd.f32 0.0, %v3935
        %3937 = vmatprep.mubr.f32.mxu0 %v3674
        %3938 = vmatmul.mubr.f32.gmra.mrb[0].mxu0 %v3552
        %v3939 = vpop.f32.mrb[0].mxu0
        %v3940 = vadd.f32 0.0, %v3939
        %v3941 = vpop.f32.mrb[0].mxu0
        %v3942 = vadd.f32 0.0, %v3941
        %3943 = vmatprep.mubr.f32.mxu0 %v3676
        %3944 = vmatmul.mubr.f32.gmra.mrb[0].mxu0 %v3553
        %v3945 = vpop.f32.mrb[0].mxu0
        %v3946 = vadd.f32 0.0, %v3945
        %v3947 = vpop.f32.mrb[0].mxu0
        %v3948 = vadd.f32 0.0, %v3947
        %3949 = vmatprep.mubr.f32.mxu0 %v3678
        %3950 = vmatmul.mubr.f32.gmra.mrb[0].mxu0 %v3554
        %v3951 = vpop.f32.mrb[0].mxu0
        %v3952 = vadd.f32 0.0, %v3951
        %v3953 = vpop.f32.mrb[0].mxu0
        %v3954 = vadd.f32 0.0, %v3953
        %3955 = vmatprep.mubr.f32.mxu0 %v3680
        %3956 = vmatmul.mubr.f32.gmra.mrb[0].mxu0 %v3555
        %v3957 = vpop.f32.mrb[0].mxu0
        %v3958 = vadd.f32 0.0, %v3957
        %v3959 = vpop.f32.mrb[0].mxu0
        %v3960 = vadd.f32 0.0, %v3959
        %3961 = vmatprep.mubr.f32.mxu0 %v3682
        %3962 = vmatmul.mubr.f32.gmra.mrb[0].mxu0 %v3556
        %v3963 = vpop.f32.mrb[0].mxu0
        %v3964 = vadd.f32 0.0, %v3963
        %v3965 = vpop.f32.mrb[0].mxu0
        %v3966 = vadd.f32 0.0, %v3965
        %3967 = vmatprep.mubr.f32.mxu0 %v3684
        %3968 = vmatmul.mubr.f32.gmra.mrb[0].mxu0 %v3557
        %v3969 = vpop.f32.mrb[0].mxu0
        %v3970 = vadd.f32 0.0, %v3969
        %v3971 = vpop.f32.mrb[0].mxu0
        %v3972 = vadd.f32 0.0, %v3971
        %3973 = vmatprep.mubr.f32.mxu0 %v3686
        %3974 = vmatmul.mubr.f32.gmra.mrb[0].mxu0 %v3558
        %v3975 = vpop.f32.mrb[0].mxu0
        %v3976 = vadd.f32 0.0, %v3975
        %v3977 = vpop.f32.mrb[0].mxu0
        %v3978 = vadd.f32 0.0, %v3977
        %3979 = vmatprep.mubr.f32.mxu0 %v3688
        %3980 = vmatmul.mubr.f32.gmra.mrb[0].mxu0 %v3559
        %v3981 = vpop.f32.mrb[0].mxu0
        %v3982 = vadd.f32 0.0, %v3981
        %v3983 = vpop.f32.mrb[0].mxu0
        %v3984 = vadd.f32 0.0, %v3983
        %3985 = vmatprep.mubr.f32.mxu0 %v3690
        %3986 = vmatmul.mubr.f32.gmra.mrb[0].mxu0 %v3560
        %v3987 = vpop.f32.mrb[0].mxu0
        %v3988 = vadd.f32 0.0, %v3987
        %v3989 = vpop.f32.mrb[0].mxu0
        %v3990 = vadd.f32 0.0, %v3989
        %3991 = vmatprep.mubr.f32.mxu0 %v3692
        %3992 = vmatmul.mubr.f32.gmra.mrb[0].mxu0 %v3561
        %v3993 = vpop.f32.mrb[0].mxu0
        %v3994 = vadd.f32 0.0, %v3993
        %v3995 = vpop.f32.mrb[0].mxu0
        %v3996 = vadd.f32 0.0, %v3995
        %3997 = vmatprep.mubr.f32.mxu0 %v3694
        %3998 = vmatmul.mubr.f32.gmra.mrb[0].mxu0 %v3562
        %v3999 = vpop.f32.mrb[0].mxu0
        %v4000 = vadd.f32 0.0, %v3999
        %v4001 = vpop.f32.mrb[0].mxu0
        %v4002 = vadd.f32 0.0, %v4001
        %4003 = vmatprep.mubr.f32.mxu0 %v3696
        %4004 = vmatmul.mubr.f32.gmra.mrb[0].mxu0 %v3563
        %v4005 = vpop.f32.mrb[0].mxu0
        %v4006 = vadd.f32 0.0, %v4005
        %v4007 = vpop.f32.mrb[0].mxu0
        %v4008 = vadd.f32 0.0, %v4007
        %4009 = vmatprep.mubr.f32.mxu0 %v3698
        %4010 = vmatmul.mubr.f32.gmra.mrb[0].mxu0 %v3564
        %v4011 = vpop.f32.mrb[0].mxu0
        %v4012 = vadd.f32 0.0, %v4011
        %v4013 = vpop.f32.mrb[0].mxu0
        %v4014 = vadd.f32 0.0, %v4013
        %4015 = vmatprep.mubr.f32.mxu0 %v3700
        %4016 = vmatmul.mubr.f32.gmra.mrb[0].mxu0 %v3565
        %v4017 = vpop.f32.mrb[0].mxu0
        %v4018 = vadd.f32 0.0, %v4017
        %v4019 = vpop.f32.mrb[0].mxu0
        %v4020 = vadd.f32 0.0, %v4019
        %4021 = vmatprep.mubr.f32.mxu0 %v3702
        %4022 = vmatmul.mubr.f32.gmra.mrb[0].mxu0 %v3566
        %v4023 = vpop.f32.mrb[0].mxu0
        %v4024 = vadd.f32 0.0, %v4023
        %v4025 = vpop.f32.mrb[0].mxu0
        %v4026 = vadd.f32 0.0, %v4025
        %4027 = vmatprep.mubr.f32.mxu0 %v3704
        %4028 = vmatmul.mubr.f32.gmra.mrb[0].mxu0 %v3567
        %v4029 = vpop.f32.mrb[0].mxu0
        %v4030 = vadd.f32 0.0, %v4029
        %v4031 = vpop.f32.mrb[0].mxu0
        %v4032 = vadd.f32 0.0, %v4031
        %4033 = vmatprep.mubr.f32.mxu0 %v3706
        %4034 = vmatmul.mubr.f32.gmra.mrb[0].mxu0 %v3568
        %v4035 = vpop.f32.mrb[0].mxu0
        %v4036 = vadd.f32 0.0, %v4035
        %v4037 = vpop.f32.mrb[0].mxu0
        %v4038 = vadd.f32 0.0, %v4037
        %4039 = vmatprep.mubr.f32.mxu0 %v3708
        %4040 = vmatmul.mubr.f32.gmra.mrb[0].mxu0 %v3569
        %v4041 = vpop.f32.mrb[0].mxu0
        %v4042 = vadd.f32 0.0, %v4041
        %v4043 = vpop.f32.mrb[0].mxu0
        %v4044 = vadd.f32 0.0, %v4043
        %4045 = vmatprep.mubr.f32.mxu0 %v3710
        %4046 = vmatmul.mubr.f32.gmra.mrb[0].mxu0 %v3570
        %v4047 = vpop.f32.mrb[0].mxu0
        %v4048 = vadd.f32 0.0, %v4047
        %v4049 = vpop.f32.mrb[0].mxu0
        %v4050 = vadd.f32 0.0, %v4049
        %4051 = vmatprep.mubr.f32.mxu0 %v3712
        %4052 = vmatmul.mubr.f32.gmra.mrb[0].mxu0 %v3571
        %v4053 = vpop.f32.mrb[0].mxu0
        %v4054 = vadd.f32 0.0, %v4053
        %v4055 = vpop.f32.mrb[0].mxu0
        %v4056 = vadd.f32 0.0, %v4055
        %4057 = vmatprep.mubr.f32.mxu0 %v3715
        %4058 = vmatmul.mubr.f32.gmra.mrb[0].mxu0 %v3572
        %v4059 = vpop.f32.mrb[0].mxu0
        %v4060 = vadd.f32 0.0, %v4059
        %v4061 = vpop.f32.mrb[0].mxu0
        %v4062 = vadd.f32 0.0, %v4061
        %4063 = vmatprep.mubr.f32.mxu0 %v3718
        %4064 = vmatmul.mubr.f32.gmra.mrb[0].mxu0 %v3573
        %v4065 = vpop.f32.mrb[0].mxu0
        %v4066 = vadd.f32 0.0, %v4065
        %v4067 = vpop.f32.mrb[0].mxu0
        %v4068 = vadd.f32 0.0, %v4067
        %4069 = vmatprep.mubr.f32.mxu0 %v3721
        %4070 = vmatmul.mubr.f32.gmra.mrb[0].mxu0 %v3574
        %v4071 = vpop.f32.mrb[0].mxu0
        %v4072 = vadd.f32 0.0, %v4071
        %v4073 = vpop.f32.mrb[0].mxu0
        %v4074 = vadd.f32 0.0, %v4073
        %4075 = vdwg.mxu0
        %v4076 = vrot.slane %v3790, 7
        %v4077 = vrot.slane %v3796, 7
        %v4078 = vrot.slane %v3802, 7
        %v4079 = vrot.slane %v3808, 7
        %v4080 = vrot.slane %v3814, 7
        %v4081 = vrot.slane %v3820, 7
        %v4082 = vrot.slane %v3826, 7
        %v4083 = vrot.slane %v3832, 7
        %v4084 = vrot.slane %v3838, 7
        %v4085 = vrot.slane %v3844, 7
        %v4086 = vrot.slane %v3850, 7
        %v4087 = vrot.slane %v3856, 7
        %v4088 = vrot.slane %v3862, 7
        %v4089 = vrot.slane %v3868, 7
        %v4090 = vrot.slane %v3874, 7
        %v4091 = vrot.slane %v3880, 7
        %v4092 = vrot.slane %v3886, 7
        %v4093 = vrot.slane %v3892, 7
        %v4094 = vrot.slane %v3898, 7
        %v4095 = vrot.slane %v3904, 7
        %v4096 = vrot.slane %v3910, 7
        %v4097 = vrot.slane %v3916, 7
        %v4098 = vrot.slane %v3922, 7
        %v4099 = vrot.slane %v3928, 7
        %v4100 = vrot.slane %v3934, 7
        %v4101 = vrot.slane %v3940, 7
        %v4102 = vrot.slane %v3946, 7
        %v4103 = vrot.slane %v3952, 7
        %v4104 = vrot.slane %v3958, 7
        %v4105 = vrot.slane %v3964, 7
        %v4106 = vrot.slane %v3970, 7
        %v4107 = vrot.slane %v3976, 7
        %v4108 = vrot.slane %v3982, 7
        %v4109 = vrot.slane %v3988, 7
        %v4110 = vrot.slane %v3994, 7
        %v4111 = vrot.slane %v4000, 7
        %v4112 = vrot.slane %v4006, 7
        %v4113 = vrot.slane %v4012, 7
        %v4114 = vrot.slane %v4018, 7
        %v4115 = vrot.slane %v4024, 7
        %v4116 = vrot.slane %v4030, 7
        %v4117 = vrot.slane %v4036, 7
        %v4118 = vrot.slane %v4042, 7
        %v4119 = vrot.slane %v4048, 7
        %v4120 = vrot.slane %v4054, 7
        %v4121 = vrot.slane %v4060, 7
        %v4122 = vrot.slane %v4066, 7
        %v4123 = vrot.slane %v4072, 7
        %v4124 = vlaneseq
        %v4125 = vshrl.u32 %v4124, 7
        %vm4126 = vcmp.lt.s32.totalorder %v4125, 1
        %v4127 = vsel %vm4126, %v4121, %v4122
        %v4128 = vsel %vm4126, %v4120, %v4121
        %v4129 = vsel %vm4126, %v4118, %v4119
        %v4130 = vsel %vm4126, %v4117, %v4118
        %v4131 = vsel %vm4126, %v4115, %v4116
        %v4132 = vsel %vm4126, %v4114, %v4115
        %v4133 = vsel %vm4126, %v4112, %v4113
        %v4134 = vsel %vm4126, %v4111, %v4112
        %v4135 = vsel %vm4126, %v4109, %v4110
        %v4136 = vsel %vm4126, %v4108, %v4109
        %v4137 = vsel %vm4126, %v4106, %v4107
        %v4138 = vsel %vm4126, %v4105, %v4106
        %v4139 = vsel %vm4126, %v4103, %v4104
        %v4140 = vsel %vm4126, %v4102, %v4103
        %v4141 = vsel %vm4126, %v4100, %v4101
        %v4142 = vsel %vm4126, %v4099, %v4100
        %v4143 = vsel %vm4126, %v4097, %v4098
        %v4144 = vsel %vm4126, %v4096, %v4097
        %v4145 = vsel %vm4126, %v4094, %v4095
        %v4146 = vsel %vm4126, %v4093, %v4094
        %v4147 = vsel %vm4126, %v4091, %v4092
        %v4148 = vsel %vm4126, %v4090, %v4091
        %v4149 = vsel %vm4126, %v4088, %v4089
        %v4150 = vsel %vm4126, %v4087, %v4088
        %v4151 = vsel %vm4126, %v4085, %v4086
        %v4152 = vsel %vm4126, %v4084, %v4085
        %v4153 = vsel %vm4126, %v4082, %v4083
        %v4154 = vsel %vm4126, %v4081, %v4082
        %v4155 = vsel %vm4126, %v4079, %v4080
        %v4156 = vsel %vm4126, %v4078, %v4079
        %v4157 = vsel %vm4126, %v4076, %v4077
        %v4158 = vsel %vm4126, %v4123, %v4076
        %4191 = vrot.lane.b32.xlu0 %v3790, 64
        %v4192 = vpop.permute.xlu0 %4191
        %4193 = vrot.lane.b32.xlu0 %v3796, 64
        %v4194 = vpop.permute.xlu0 %4193
        %4195 = vrot.lane.b32.xlu0 %v3808, 64
        %v4196 = vpop.permute.xlu0 %4195
        %4197 = vrot.lane.b32.xlu0 %v3814, 64
        %v4198 = vpop.permute.xlu0 %4197
        %4199 = vrot.lane.b32.xlu0 %v3826, 64
        %v4200 = vpop.permute.xlu0 %4199
        %4201 = vrot.lane.b32.xlu0 %v3832, 64
        %v4202 = vpop.permute.xlu0 %4201
        %4203 = vrot.lane.b32.xlu0 %v3844, 64
        %v4204 = vpop.permute.xlu0 %4203
        %4205 = vrot.lane.b32.xlu0 %v3850, 64
        %v4206 = vpop.permute.xlu0 %4205
        %4207 = vrot.lane.b32.xlu0 %v3862, 64
        %v4208 = vpop.permute.xlu0 %4207
        %4209 = vrot.lane.b32.xlu0 %v3868, 64
        %v4210 = vpop.permute.xlu0 %4209
        %4211 = vrot.lane.b32.xlu0 %v3880, 64
        %v4212 = vpop.permute.xlu0 %4211
        %4213 = vrot.lane.b32.xlu0 %v3886, 64
        %v4214 = vpop.permute.xlu0 %4213
        %4215 = vrot.lane.b32.xlu0 %v3898, 64
        %v4216 = vpop.permute.xlu0 %4215
        %4217 = vrot.lane.b32.xlu0 %v3904, 64
        %v4218 = vpop.permute.xlu0 %4217
        %4219 = vrot.lane.b32.xlu0 %v3916, 64
        %v4220 = vpop.permute.xlu0 %4219
        %4221 = vrot.lane.b32.xlu0 %v3922, 64
        %v4222 = vpop.permute.xlu0 %4221
        %4223 = vrot.lane.b32.xlu0 %v3934, 64
        %v4224 = vpop.permute.xlu0 %4223
        %4225 = vrot.lane.b32.xlu0 %v3940, 64
        %v4226 = vpop.permute.xlu0 %4225
        %4227 = vrot.lane.b32.xlu0 %v3952, 64
        %v4228 = vpop.permute.xlu0 %4227
        %4229 = vrot.lane.b32.xlu0 %v3958, 64
        %v4230 = vpop.permute.xlu0 %4229
        %4231 = vrot.lane.b32.xlu0 %v3970, 64
        %v4232 = vpop.permute.xlu0 %4231
        %4233 = vrot.lane.b32.xlu0 %v3976, 64
        %v4234 = vpop.permute.xlu0 %4233
        %4235 = vrot.lane.b32.xlu0 %v3988, 64
        %v4236 = vpop.permute.xlu0 %4235
        %4237 = vrot.lane.b32.xlu0 %v3994, 64
        %v4238 = vpop.permute.xlu0 %4237
        %4239 = vrot.lane.b32.xlu0 %v4006, 64
        %v4240 = vpop.permute.xlu0 %4239
        %4241 = vrot.lane.b32.xlu0 %v4012, 64
        %v4242 = vpop.permute.xlu0 %4241
        %4243 = vrot.lane.b32.xlu0 %v4024, 64
        %v4244 = vpop.permute.xlu0 %4243
        %4245 = vrot.lane.b32.xlu0 %v4030, 64
        %v4246 = vpop.permute.xlu0 %4245
        %4247 = vrot.lane.b32.xlu0 %v4042, 64
        %v4248 = vpop.permute.xlu0 %4247
        %4249 = vrot.lane.b32.xlu0 %v4048, 64
        %v4250 = vpop.permute.xlu0 %4249
        %4251 = vrot.lane.b32.xlu0 %v4060, 64
        %v4252 = vpop.permute.xlu0 %4251
        %4253 = vrot.lane.b32.xlu0 %v4066, 64
        %v4254 = vpop.permute.xlu0 %4253
        %v4287 = vadd.f32 %v4158, %v4192
        %v4288 = vadd.f32 %v4157, %v4194
        %v4289 = vadd.f32 %v4156, %v4196
        %v4290 = vadd.f32 %v4155, %v4198
        %v4291 = vadd.f32 %v4154, %v4200
        %v4292 = vadd.f32 %v4153, %v4202
        %v4293 = vadd.f32 %v4152, %v4204
        %v4294 = vadd.f32 %v4151, %v4206
        %v4295 = vadd.f32 %v4150, %v4208
        %v4296 = vadd.f32 %v4149, %v4210
        %v4297 = vadd.f32 %v4148, %v4212
        %v4298 = vadd.f32 %v4147, %v4214
        %v4299 = vadd.f32 %v4146, %v4216
        %v4300 = vadd.f32 %v4145, %v4218
        %v4301 = vadd.f32 %v4144, %v4220
        %v4302 = vadd.f32 %v4143, %v4222
        %v4303 = vadd.f32 %v4142, %v4224
        %v4304 = vadd.f32 %v4141, %v4226
        %v4305 = vadd.f32 %v4140, %v4228
        %v4306 = vadd.f32 %v4139, %v4230
        %v4307 = vadd.f32 %v4138, %v4232
        %v4308 = vadd.f32 %v4137, %v4234
        %v4309 = vadd.f32 %v4136, %v4236
        %v4310 = vadd.f32 %v4135, %v4238
        %v4311 = vadd.f32 %v4134, %v4240
        %v4312 = vadd.f32 %v4133, %v4242
        %v4313 = vadd.f32 %v4132, %v4244
        %v4314 = vadd.f32 %v4131, %v4246
        %v4315 = vadd.f32 %v4130, %v4248
        %v4316 = vadd.f32 %v4129, %v4250
        %v4317 = vadd.f32 %v4128, %v4252
        %v4318 = vadd.f32 %v4127, %v4254
        %v4319 = vrot.slane %v3792, 1
        %v4320 = vrot.slane %v3798, 1
        %v4321 = vrot.slane %v3804, 1
        %v4322 = vrot.slane %v3810, 1
        %v4323 = vrot.slane %v3816, 1
        %v4324 = vrot.slane %v3822, 1
        %v4325 = vrot.slane %v3828, 1
        %v4326 = vrot.slane %v3834, 1
        %v4327 = vrot.slane %v3840, 1
        %v4328 = vrot.slane %v3846, 1
        %v4329 = vrot.slane %v3852, 1
        %v4330 = vrot.slane %v3858, 1
        %v4331 = vrot.slane %v3864, 1
        %v4332 = vrot.slane %v3870, 1
        %v4333 = vrot.slane %v3876, 1
        %v4334 = vrot.slane %v3882, 1
        %v4335 = vrot.slane %v3888, 1
        %v4336 = vrot.slane %v3894, 1
        %v4337 = vrot.slane %v3900, 1
        %v4338 = vrot.slane %v3906, 1
        %v4339 = vrot.slane %v3912, 1
        %v4340 = vrot.slane %v3918, 1
        %v4341 = vrot.slane %v3924, 1
        %v4342 = vrot.slane %v3930, 1
        %v4343 = vrot.slane %v3936, 1
        %v4344 = vrot.slane %v3942, 1
        %v4345 = vrot.slane %v3948, 1
        %v4346 = vrot.slane %v3954, 1
        %v4347 = vrot.slane %v3960, 1
        %v4348 = vrot.slane %v3966, 1
        %v4349 = vrot.slane %v3972, 1
        %v4350 = vrot.slane %v3978, 1
        %v4351 = vrot.slane %v3984, 1
        %v4352 = vrot.slane %v3990, 1
        %v4353 = vrot.slane %v3996, 1
        %v4354 = vrot.slane %v4002, 1
        %v4355 = vrot.slane %v4008, 1
        %v4356 = vrot.slane %v4014, 1
        %v4357 = vrot.slane %v4020, 1
        %v4358 = vrot.slane %v4026, 1
        %v4359 = vrot.slane %v4032, 1
        %v4360 = vrot.slane %v4038, 1
        %v4361 = vrot.slane %v4044, 1
        %v4362 = vrot.slane %v4050, 1
        %v4363 = vrot.slane %v4056, 1
        %v4364 = vrot.slane %v4062, 1
        %v4365 = vrot.slane %v4068, 1
        %v4366 = vrot.slane %v4074, 1
        %vm4367 = vcmp.lt.s32.totalorder %v4125, 7
        %v4368 = vsel %vm4367, %v4365, %v4366
        %v4369 = vsel %vm4367, %v4364, %v4365
        %v4370 = vsel %vm4367, %v4362, %v4363
        %v4371 = vsel %vm4367, %v4361, %v4362
        %v4372 = vsel %vm4367, %v4359, %v4360
        %v4373 = vsel %vm4367, %v4358, %v4359
        %v4374 = vsel %vm4367, %v4356, %v4357
        %v4375 = vsel %vm4367, %v4355, %v4356
        %v4376 = vsel %vm4367, %v4353, %v4354
        %v4377 = vsel %vm4367, %v4352, %v4353
        %v4378 = vsel %vm4367, %v4350, %v4351
        %v4379 = vsel %vm4367, %v4349, %v4350
        %v4380 = vsel %vm4367, %v4347, %v4348
        %v4381 = vsel %vm4367, %v4346, %v4347
        %v4382 = vsel %vm4367, %v4344, %v4345
        %v4383 = vsel %vm4367, %v4343, %v4344
        %v4384 = vsel %vm4367, %v4341, %v4342
        %v4385 = vsel %vm4367, %v4340, %v4341
        %v4386 = vsel %vm4367, %v4338, %v4339
        %v4387 = vsel %vm4367, %v4337, %v4338
        %v4388 = vsel %vm4367, %v4335, %v4336
        %v4389 = vsel %vm4367, %v4334, %v4335
        %v4390 = vsel %vm4367, %v4332, %v4333
        %v4391 = vsel %vm4367, %v4331, %v4332
        %v4392 = vsel %vm4367, %v4329, %v4330
        %v4393 = vsel %vm4367, %v4328, %v4329
        %v4394 = vsel %vm4367, %v4326, %v4327
        %v4395 = vsel %vm4367, %v4325, %v4326
        %v4396 = vsel %vm4367, %v4323, %v4324
        %v4397 = vsel %vm4367, %v4322, %v4323
        %v4398 = vsel %vm4367, %v4320, %v4321
        %v4399 = vsel %vm4367, %v4319, %v4320
        %v4400 = vadd.f32 %v4287, %v4399
        %v4401 = vadd.f32 %v4288, %v4398
        %v4402 = vadd.f32 %v4289, %v4397
        %v4403 = vadd.f32 %v4290, %v4396
        %v4404 = vadd.f32 %v4291, %v4395
        %v4405 = vadd.f32 %v4292, %v4394
        %v4406 = vadd.f32 %v4293, %v4393
        %v4407 = vadd.f32 %v4294, %v4392
        %v4408 = vadd.f32 %v4295, %v4391
        %v4409 = vadd.f32 %v4296, %v4390
        %v4410 = vadd.f32 %v4297, %v4389
        %v4411 = vadd.f32 %v4298, %v4388
        %v4412 = vadd.f32 %v4299, %v4387
        %v4413 = vadd.f32 %v4300, %v4386
        %v4414 = vadd.f32 %v4301, %v4385
        %v4415 = vadd.f32 %v4302, %v4384
        %v4416 = vadd.f32 %v4303, %v4383
        %v4417 = vadd.f32 %v4304, %v4382
        %v4418 = vadd.f32 %v4305, %v4381
        %v4419 = vadd.f32 %v4306, %v4380
        %v4420 = vadd.f32 %v4307, %v4379
        %v4421 = vadd.f32 %v4308, %v4378
        %v4422 = vadd.f32 %v4309, %v4377
        %v4423 = vadd.f32 %v4310, %v4376
        %v4424 = vadd.f32 %v4311, %v4375
        %v4425 = vadd.f32 %v4312, %v4374
        %v4426 = vadd.f32 %v4313, %v4373
        %v4427 = vadd.f32 %v4314, %v4372
        %v4428 = vadd.f32 %v4315, %v4371
        %v4429 = vadd.f32 %v4316, %v4370
        %v4430 = vadd.f32 %v4317, %v4369
        %v4431 = vadd.f32 %v4318, %v4368
        %s4432 = scalar_lea.vmem %s2, 4
        %v4433 = vld [vmem:[%s4432] sm:$0x1]
        %v4435 = vlaneseq
        %v4436 = vshrl.u32 %v4435, 7
        %v4437 = vsub.s32 0, %v4436
        %v4438 = vrot.slane %v4433, %v4437
        %v4440 = vadd.f32 %v4400, %v4438
        %v4441 = vadd.f32 %v4401, %v4438
        %v4442 = vadd.f32 %v4402, %v4438
        %v4443 = vadd.f32 %v4403, %v4438
        %v4444 = vadd.f32 %v4404, %v4438
        %v4445 = vadd.f32 %v4405, %v4438
        %v4446 = vadd.f32 %v4406, %v4438
        %v4447 = vadd.f32 %v4407, %v4438
        %v4448 = vadd.f32 %v4408, %v4438
        %v4449 = vadd.f32 %v4409, %v4438
        %v4450 = vadd.f32 %v4410, %v4438
        %v4451 = vadd.f32 %v4411, %v4438
        %v4452 = vadd.f32 %v4412, %v4438
        %v4453 = vadd.f32 %v4413, %v4438
        %v4454 = vadd.f32 %v4414, %v4438
        %v4455 = vadd.f32 %v4415, %v4438
        %v4456 = vadd.f32 %v4416, %v4438
        %v4457 = vadd.f32 %v4417, %v4438
        %v4458 = vadd.f32 %v4418, %v4438
        %v4459 = vadd.f32 %v4419, %v4438
        %v4460 = vadd.f32 %v4420, %v4438
        %v4461 = vadd.f32 %v4421, %v4438
        %v4462 = vadd.f32 %v4422, %v4438
        %v4463 = vadd.f32 %v4423, %v4438
        %v4464 = vadd.f32 %v4424, %v4438
        %v4465 = vadd.f32 %v4425, %v4438
        %v4466 = vadd.f32 %v4426, %v4438
        %v4467 = vadd.f32 %v4427, %v4438
        %v4468 = vadd.f32 %v4428, %v4438
        %v4469 = vadd.f32 %v4429, %v4438
        %v4470 = vadd.f32 %v4430, %v4438
        %v4471 = vadd.f32 %v4431, %v4438
        %v4472 = vld [vmem:[%s168] sm:$0xff]
        %v4473 = vld [vmem:[%s168 + $0x8] sm:$0xff]
        %v4474 = vld [vmem:[%s168 + $0x10] sm:$0xff]
        %v4475 = vld [vmem:[%s168 + $0x18] sm:$0xff]
        %v4476 = vld [vmem:[%s168 + $0x20] sm:$0xff]
        %v4477 = vld [vmem:[%s168 + $0x28] sm:$0xff]
        %v4478 = vld [vmem:[%s168 + $0x30] sm:$0xff]
        %v4479 = vld [vmem:[%s168 + $0x38] sm:$0xff]
        %v4480 = vld [vmem:[%s168 + $0x40] sm:$0xff]
        %v4481 = vld [vmem:[%s168 + $0x48] sm:$0xff]
        %v4482 = vld [vmem:[%s168 + $0x50] sm:$0xff]
        %v4483 = vld [vmem:[%s168 + $0x58] sm:$0xff]
        %v4484 = vld [vmem:[%s168 + $0x60] sm:$0xff]
        %v4485 = vld [vmem:[%s168 + $0x68] sm:$0xff]
        %v4486 = vld [vmem:[%s168 + $0x70] sm:$0xff]
        %v4487 = vld [vmem:[%s168 + $0x78] sm:$0xff]
        %v4488 = vld [vmem:[%s168 + $0x80] sm:$0xff]
        %v4489 = vld [vmem:[%s168 + $0x88] sm:$0xff]
        %v4490 = vld [vmem:[%s168 + $0x90] sm:$0xff]
        %v4491 = vld [vmem:[%s168 + $0x98] sm:$0xff]
        %v4492 = vld [vmem:[%s168 + $0xa0] sm:$0xff]
        %v4493 = vld [vmem:[%s168 + $0xa8] sm:$0xff]
        %v4494 = vld [vmem:[%s168 + $0xb0] sm:$0xff]
        %v4495 = vld [vmem:[%s168 + $0xb8] sm:$0xff]
        %v4496 = vld [vmem:[%s168 + $0xc0] sm:$0xff]
        %v4497 = vld [vmem:[%s168 + $0xc8] sm:$0xff]
        %v4498 = vld [vmem:[%s168 + $0xd0] sm:$0xff]
        %v4499 = vld [vmem:[%s168 + $0xd8] sm:$0xff]
        %v4500 = vld [vmem:[%s168 + $0xe0] sm:$0xff]
        %v4501 = vld [vmem:[%s168 + $0xe8] sm:$0xff]
        %v4502 = vld [vmem:[%s168 + $0xf0] sm:$0xff]
        %v4503 = vld [vmem:[%s168 + $0xf8] sm:$0xff]
        %v4504 = vadd.f32 %v4440, %v4472
        %v4505 = vadd.f32 %v4441, %v4473
        %v4506 = vadd.f32 %v4442, %v4474
        %v4507 = vadd.f32 %v4443, %v4475
        %v4508 = vadd.f32 %v4444, %v4476
        %v4509 = vadd.f32 %v4445, %v4477
        %v4510 = vadd.f32 %v4446, %v4478
        %v4511 = vadd.f32 %v4447, %v4479
        %v4512 = vadd.f32 %v4448, %v4480
        %v4513 = vadd.f32 %v4449, %v4481
        %v4514 = vadd.f32 %v4450, %v4482
        %v4515 = vadd.f32 %v4451, %v4483
        %v4516 = vadd.f32 %v4452, %v4484
        %v4517 = vadd.f32 %v4453, %v4485
        %v4518 = vadd.f32 %v4454, %v4486
        %v4519 = vadd.f32 %v4455, %v4487
        %v4520 = vadd.f32 %v4456, %v4488
        %v4521 = vadd.f32 %v4457, %v4489
        %v4522 = vadd.f32 %v4458, %v4490
        %v4523 = vadd.f32 %v4459, %v4491
        %v4524 = vadd.f32 %v4460, %v4492
        %v4525 = vadd.f32 %v4461, %v4493
        %v4526 = vadd.f32 %v4462, %v4494
        %v4527 = vadd.f32 %v4463, %v4495
        %v4528 = vadd.f32 %v4464, %v4496
        %v4529 = vadd.f32 %v4465, %v4497
        %v4530 = vadd.f32 %v4466, %v4498
        %v4531 = vadd.f32 %v4467, %v4499
        %v4532 = vadd.f32 %v4468, %v4500
        %v4533 = vadd.f32 %v4469, %v4501
        %v4534 = vadd.f32 %v4470, %v4502
        %v4535 = vadd.f32 %v4471, %v4503
        %4536 = vst.msk [vmem:[%s163] sm:$0xff] %vm169, %v4504
        %4537 = vst.msk [vmem:[%s163 + $0x8] sm:$0xff] %vm169, %v4505
        %4538 = vst.msk [vmem:[%s163 + $0x10] sm:$0xff] %vm169, %v4506
        %4539 = vst.msk [vmem:[%s163 + $0x18] sm:$0xff] %vm169, %v4507
        %4540 = vst.msk [vmem:[%s163 + $0x20] sm:$0xff] %vm169, %v4508
        %4541 = vst.msk [vmem:[%s163 + $0x28] sm:$0xff] %vm169, %v4509
        %4542 = vst.msk [vmem:[%s163 + $0x30] sm:$0xff] %vm169, %v4510
        %4543 = vst.msk [vmem:[%s163 + $0x38] sm:$0xff] %vm169, %v4511
        %4544 = vst.msk [vmem:[%s163 + $0x40] sm:$0xff] %vm169, %v4512
        %4545 = vst.msk [vmem:[%s163 + $0x48] sm:$0xff] %vm169, %v4513
        %4546 = vst.msk [vmem:[%s163 + $0x50] sm:$0xff] %vm169, %v4514
        %4547 = vst.msk [vmem:[%s163 + $0x58] sm:$0xff] %vm169, %v4515
        %4548 = vst.msk [vmem:[%s163 + $0x60] sm:$0xff] %vm169, %v4516
        %4549 = vst.msk [vmem:[%s163 + $0x68] sm:$0xff] %vm169, %v4517
        %4550 = vst.msk [vmem:[%s163 + $0x70] sm:$0xff] %vm169, %v4518
        %4551 = vst.msk [vmem:[%s163 + $0x78] sm:$0xff] %vm169, %v4519
        %4552 = vst.msk [vmem:[%s163 + $0x80] sm:$0xff] %vm169, %v4520
        %4553 = vst.msk [vmem:[%s163 + $0x88] sm:$0xff] %vm169, %v4521
        %4554 = vst.msk [vmem:[%s163 + $0x90] sm:$0xff] %vm169, %v4522
        %4555 = vst.msk [vmem:[%s163 + $0x98] sm:$0xff] %vm169, %v4523
        %4556 = vst.msk [vmem:[%s163 + $0xa0] sm:$0xff] %vm169, %v4524
        %4557 = vst.msk [vmem:[%s163 + $0xa8] sm:$0xff] %vm169, %v4525
        %4558 = vst.msk [vmem:[%s163 + $0xb0] sm:$0xff] %vm169, %v4526
        %4559 = vst.msk [vmem:[%s163 + $0xb8] sm:$0xff] %vm169, %v4527
        %4560 = vst.msk [vmem:[%s163 + $0xc0] sm:$0xff] %vm169, %v4528
        %4561 = vst.msk [vmem:[%s163 + $0xc8] sm:$0xff] %vm169, %v4529
        %4562 = vst.msk [vmem:[%s163 + $0xd0] sm:$0xff] %vm169, %v4530
        %4563 = vst.msk [vmem:[%s163 + $0xd8] sm:$0xff] %vm169, %v4531
        %4564 = vst.msk [vmem:[%s163 + $0xe0] sm:$0xff] %vm169, %v4532
        %4565 = vst.msk [vmem:[%s163 + $0xe8] sm:$0xff] %vm169, %v4533
        %4566 = vst.msk [vmem:[%s163 + $0xf0] sm:$0xff] %vm169, %v4534
        %4567 = vst.msk [vmem:[%s163 + $0xf8] sm:$0xff] %vm169, %v4535
        %s4568 = sand.u32 %s93, 1
        %s4569 = scalar_lea.sflag [#allocation5], %s4568
        %s4570 = sand.u32 %s93, 1
        %s4571 = smul.addr %s4570, 256
        %s4572 = scalar_lea.vmem [#allocation4], %s4571
        // Predicated region
        $region40: #{residual_group_no_ca.1} parent=31 // pred_check
          %p4573 = pneg %p103
        $region41: #{residual_group_no_ca.1} parent=31 // pred_check_branch
          %4575 = sbr.rel (%p4573) target = $region43
        $region42: #{residual_group_no_ca.1} parent=31 // pred_region
          %s4577 = ssub.s32 4096, 4096
          %4578 = vsyncadd %s4569, %s4577
          %s4579 = smul.addr %s17, 32
          %s4580 = smul.addr %s4579, 128
          %s4581 = scalar_lea.hbm %s3, %s4580
          %s4582 = sshll.u32 %s4572, 4
          %s4583 = int_to_ptr.vmem [resolvable:$true] %s4582
          %4588 = dma.vmem_to_hbm [thread:$0]  %s4583, 4096, %s4581, %s4569, 128, 128, 8
        $region43: #{residual_group_no_ca.1} parent=31 // pred_fallthru
          _
      $region32: #{residual_group_no_ca.1} parent=5 // pred_fallthru
        _
      %p4589 = scmp.le.s32.totalorder 2, %s12
      // Predicated region
      $region44: #{residual_group_no_ca.1} parent=5 // pred_check
        %p4590 = pneg %p4589
      $region45: #{residual_group_no_ca.1} parent=5 // pred_check_branch
        %4592 = sbr.rel (%p4590) target = $region47
      $region46: #{residual_group_no_ca.1} parent=5 // pred_region
        %s4593 = ssub.s32 %s12, 2
        // Predicated region
        $region48: #{residual_group_no_ca.1} parent=46 // pred_check
          %p4594 = pneg %p109
        $region49: #{residual_group_no_ca.1} parent=46 // pred_check_branch
          %4596 = sbr.rel (%p4594) target = $region51
        $region50: #{residual_group_no_ca.1} parent=46 // pred_region
          %s4597 = sand.u32 %s94, 1
          %s4598 = scalar_lea.sflag [#allocation5], %s4597
          %s4599 = sand.u32 %s94, 1
          %s4600 = smul.addr %s4599, 256
          %s4601 = scalar_lea.vmem [#allocation4], %s4600
          %4602 = dma.done %s4598, 4096
        $region51: #{residual_group_no_ca.1} parent=46 // pred_fallthru
          _
      $region47: #{residual_group_no_ca.1} parent=5 // pred_fallthru
        _
    $region6: #{residual_group_no_ca.1} parent=1 // loop_footer
      %s16 = sadd.s32 1, %s12
    $region7: #{residual_group_no_ca.1} parent=1 // loop_footer_branch
      %11 = sbr.rel target = $region3
    $region8: #{residual_group_no_ca.1} parent=1 // loop_exit
      _
    %4603 = vsyncpa [#allocation5], 1
    %s4604 = scalar_lea.sflag [#allocation5], 1
    %4605 = vsyncpa %s4604, 1

</llo_original>
